<compile_context>
chip_gen: v5e
topology: v5e:2x2
jax: 0.10.0
libtpu: 0.0.40
codegen_flags: <defaults>
</compile_context>

<pallas_src>
import functools
import math

import jax
import jax.numpy as jnp
from jax import lax
from jax.experimental import pallas as pl
from jax.experimental.pallas import tpu as pltpu

_LN_EPS = 1e-5
_VMEM_LIMIT = 32 * 1024 * 1024


# ------------------------------------------------------------ tile helpers
def _pick_tile(n, cap, mult):
    """Largest multiple of `mult` dividing n and <= cap; falls back to n (full dim)."""
    best = None
    t = mult
    while t <= min(n, cap):
        if n % t == 0:
            best = t
        t += mult
    return best if best is not None else n


def _pick_lane_tile(n, cap):
    assert n % 128 == 0, n
    return _pick_tile(n, cap, 128)


def _layer_norm(y, g, b, eps):
    mean = jnp.mean(y, axis=-1, keepdims=True)
    var = jnp.mean(jnp.square(y - mean), axis=-1, keepdims=True)   # biased, like torch
    return (y - mean) * lax.rsqrt(var + eps) * g + b


# ------------------------------------------------------------ fused transformer layer
def _layer_kernel(x_ref, wqkv_ref, wo_ref, w1_ref, w2_ref, hmask_ref, vec_ref,
                  o_ref, *, n_head, eps):
    # x_ref: (B, tt, E) bf16.  Attention runs over the B axis for each (t, head),
    # reproducing the PyTorch batch_first=False behaviour.
    B, tt, E = x_ref.shape
    H = n_head
    Dh = E // H
    scale = 1.0 / math.sqrt(Dh)
    M = B * tt
    F = w1_ref.shape[1]

    x_bf = x_ref[...].reshape(M, E)            # bf16, fed straight to the MXU
    x_f32 = x_bf.astype(jnp.float32)           # single f32 copy for the residual

    wqkv = wqkv_ref[...]                       # (E, 3E) bf16
    wo = wo_ref[...]                           # (E, E)  bf16
    w1 = w1_ref[...]                           # (E, F)  bf16
    w2 = w2_ref[...]                           # (F, E)  bf16
    hmask = hmask_ref[...]                     # (E, E)  bf16 block-diag head mask

    # packed small vectors (one DMA instead of 8)
    b_qkv = vec_ref[0:1, 0:3 * E]              # (1, 3E) f32
    b_ff1 = vec_ref[1:2, 0:F]                  # (1, F)
    b_o = vec_ref[2:3, 0:E]                    # (1, E)
    b_ff2 = vec_ref[3:4, 0:E]
    g1 = vec_ref[4:5, 0:E]
    be1 = vec_ref[5:6, 0:E]
    g2 = vec_ref[6:7, 0:E]
    be2 = vec_ref[7:8, 0:E]

    # ---- QKV projection: B folded into the MXU M dimension ----
    qkv = jnp.dot(x_bf, wqkv, preferred_element_type=jnp.float32) + b_qkv   # (M, 3E) f32

    # ---- attention over the B axis (seq axis under batch_first=False) ----
    attn = []
    for b in range(B):
        q_b = qkv[b * tt:(b + 1) * tt, 0:E] * scale                         # (tt, E)
        # scores broadcast to every lane of their head via one MXU matmul
        s = []
        for c in range(B):
            k_c = qkv[c * tt:(c + 1) * tt, E:2 * E]
            prod = (q_b * k_c).astype(jnp.bfloat16)
            s.append(jnp.dot(prod, hmask, preferred_element_type=jnp.float32))  # (tt, E)
        m = s[0]
        for c in range(1, B):
            m = jnp.maximum(m, s[c])
        e = [jnp.exp(s[c] - m) for c in range(B)]
        denom = e[0]
        for c in range(1, B):
            denom = denom + e[c]
        inv = 1.0 / denom                                                   # exact softmax
        acc = jnp.zeros((tt, E), jnp.float32)
        for c in range(B):
            v_c = qkv[c * tt:(c + 1) * tt, 2 * E:3 * E]
            acc = acc + (e[c] * inv) * v_c
        attn.append(acc)
    attn = jnp.concatenate(attn, axis=0) if B > 1 else attn[0]              # (M, E) f32

    # ---- out-projection + residual + LayerNorm1 (post-norm) ----
    proj = jnp.dot(attn.astype(jnp.bfloat16), wo,
                   preferred_element_type=jnp.float32) + b_o
    y1n = _layer_norm(x_f32 + proj, g1, be1, eps)

    # ---- FFN (the (M, F) intermediate stays in VMEM) + residual + LayerNorm2 ----
    h = jnp.dot(y1n.astype(jnp.bfloat16), w1,
                preferred_element_type=jnp.float32) + b_ff1
    h = jnp.maximum(h, 0.0)                                                 # ReLU
    ff = jnp.dot(h.astype(jnp.bfloat16), w2,
                 preferred_element_type=jnp.float32) + b_ff2
    out = _layer_norm(y1n + ff, g2, be2, eps)

    out = out.astype(o_ref.dtype)
    for b in range(B):
        o_ref[b] = out[b * tt:(b + 1) * tt, :]


def _pack_layer_vec(layer, E, F):
    """Pack all per-layer bias / LN vectors into one (8, max(F, 3E)) f32 operand."""
    W = max(F, 3 * E)

    def row(v):
        v = v.astype(jnp.float32).reshape(-1)
        return jnp.pad(v, (0, W - v.shape[0]))

    return jnp.stack([
        row(layer["b_qkv"]),    # row 0: (3E,)
        row(layer["b_ff1"]),    # row 1: (F,)
        row(layer["b_o"]),      # row 2: (E,)
        row(layer["b_ff2"]),    # row 3
        row(layer["ln1_g"]),    # row 4
        row(layer["ln1_b"]),    # row 5
        row(layer["ln2_g"]),    # row 6
        row(layer["ln2_b"]),    # row 7
    ], axis=0)


def transformer_layer(x, layer, hmask, *, n_head, tt):
    B, T, E = x.shape
    F = layer["w_ff1"].shape[1]
    W = max(F, 3 * E)
    vec = _pack_layer_vec(layer, E, F)
    kernel = functools.partial(_layer_kernel, n_head=n_head, eps=_LN_EPS)
    return pl.pallas_call(
        kernel,
        out_shape=jax.ShapeDtypeStruct((B, T, E), jnp.bfloat16),
        grid_spec=pltpu.PrefetchScalarGridSpec(
            num_scalar_prefetch=0,
            grid=(T // tt,),
            in_specs=[
                pl.BlockSpec((B, tt, E), lambda j: (0, j, 0)),   # activations (tiled over T)
                pl.BlockSpec((E, 3 * E), lambda j: (0, 0)),      # W_qkv  resident
                pl.BlockSpec((E, E), lambda j: (0, 0)),          # W_o    resident
                pl.BlockSpec((E, F), lambda j: (0, 0)),          # W_ff1  resident
                pl.BlockSpec((F, E), lambda j: (0, 0)),          # W_ff2  resident
                pl.BlockSpec((E, E), lambda j: (0, 0)),          # head mask resident
                pl.BlockSpec((8, W), lambda j: (0, 0)),          # packed biases/LN vectors
            ],
            out_specs=pl.BlockSpec((B, tt, E), lambda j: (0, j, 0)),
        ),
        compiler_params=pltpu.CompilerParams(
            dimension_semantics=("parallel",),
            vmem_limit_bytes=_VMEM_LIMIT),
    )(x, layer["w_qkv"], layer["w_o"], layer["w_ff1"], layer["w_ff2"], hmask, vec)


# ------------------------------------------------------------ final LayerNorm + lm head
def _ln_head_kernel(x_ref, gb_ref, w_ref, b_ref, o_ref, xn_ref, *, eps):
    # LayerNorm computed once per row tile (hoisted out of the vocab loop).
    @pl.when(pl.program_id(1) == 0)
    def _():
        x = x_ref[...].astype(jnp.float32)                      # (tm, E)
        g = gb_ref[0:1, :]
        beta = gb_ref[1:2, :]
        xn_ref[...] = _layer_norm(x, g, beta, eps).astype(xn_ref.dtype)

    o_ref[...] = (jnp.dot(xn_ref[...], w_ref[...],
                          preferred_element_type=jnp.float32)
                  + b_ref[...]).astype(o_ref.dtype)


def ln_head(x, ln_g, ln_b, w, bias, *, tm, tn):
    M, E = x.shape
    V = w.shape[1]
    gb = jnp.stack([ln_g.astype(jnp.float32), ln_b.astype(jnp.float32)], axis=0)
    kernel = functools.partial(_ln_head_kernel, eps=_LN_EPS)
    return pl.pallas_call(
        kernel,
        out_shape=jax.ShapeDtypeStruct((M, V), jnp.float32),
        grid_spec=pltpu.PrefetchScalarGridSpec(
            num_scalar_prefetch=0,
            grid=(M // tm, V // tn),
            in_specs=[
                pl.BlockSpec((tm, E), lambda i, j: (i, 0)),
                pl.BlockSpec((2, E), lambda i, j: (0, 0)),       # packed gamma/beta
                pl.BlockSpec((E, tn), lambda i, j: (0, j)),      # stream vocab columns
                pl.BlockSpec((1, tn), lambda i, j: (0, j)),
            ],
            out_specs=pl.BlockSpec((tm, tn), lambda i, j: (i, j)),   # lane-dense output
            scratch_shapes=[pltpu.VMEM((tm, E), jnp.bfloat16)],      # normalized rows
        ),
        compiler_params=pltpu.CompilerParams(
            dimension_semantics=("parallel", "arbitrary"),
            vmem_limit_bytes=_VMEM_LIMIT),
    )(x, gb, w, bias.reshape(1, V))


# ------------------------------------------------------------ parameters
def init_params(key, vocab_size, n_embd, n_layer, block_size, d_ff):
    keys = iter(jax.random.split(key, 4 * n_layer + 3))

    def dense(shape, dtype=jnp.bfloat16, scale=0.02):
        w = scale * jax.random.normal(next(keys), shape, dtype=jnp.float32)
        return w.astype(dtype)

    ones = lambda n: jnp.ones((n,), jnp.float32)
    zeros = lambda n: jnp.zeros((n,), jnp.float32)

    params = {
        "tok_emb": dense((vocab_size, n_embd), dtype=jnp.float32),
        "pos_emb": dense((block_size, n_embd), dtype=jnp.float32),
        "layers": [],
        "ln_f_g": ones(n_embd),
        "ln_f_b": zeros(n_embd),
        "head_w": dense((n_embd, vocab_size)),            # bf16
        "head_b": zeros(vocab_size),
    }
    for _ in range(n_layer):
        params["layers"].append({
            "w_qkv": dense((n_embd, 3 * n_embd)), "b_qkv": zeros(3 * n_embd),
            "w_o": dense((n_embd, n_embd)),       "b_o": zeros(n_embd),
            "ln1_g": ones(n_embd),                "ln1_b": zeros(n_embd),
            "w_ff1": dense((n_embd, d_ff)),       "b_ff1": zeros(d_ff),
            "w_ff2": dense((d_ff, n_embd)),       "b_ff2": zeros(n_embd),
            "ln2_g": ones(n_embd),                "ln2_b": zeros(n_embd),
        })
    return params


# ------------------------------------------------------------ forward
def minigpt_forward(params, idx, *, n_head, block_size):
    B, T = idx.shape
    assert T <= block_size, "Block size depășit"
    assert T % 8 == 0, "this Pallas port tiles the sequence in multiples of 8"

    E = params["tok_emb"].shape[1]
    V = params["head_w"].shape[1]
    F = params["layers"][0]["w_ff1"].shape[1]
    assert E % 128 == 0 and E % n_head == 0 and F % 128 == 0 and V % 128 == 0

    # TODO(synk): embedding lookup is a data-dependent row gather; kept as plain JAX glue.
    tok_emb = jnp.take(params["tok_emb"], idx, axis=0)            # (B, T, E)
    pos_emb = params["pos_emb"][:T][None, :, :]                   # (1, T, E)
    x = (tok_emb + pos_emb).astype(jnp.bfloat16)                  # bf16 inter-kernel activations
    M = B * T

    # block-diagonal head mask: hmask[i, j] = 1 iff lanes i, j belong to the same head
    head_id = jnp.arange(E, dtype=jnp.int32) // (E // n_head)
    hmask = (head_id[:, None] == head_id[None, :]).astype(jnp.bfloat16)   # (E, E)

    # tiles: multiples of 16 (bf16 sublane packing) or the full dim; prefer >=2 grid
    # steps so both TensorCores get work on v7x.
    tt = _pick_tile(T, min(128, max(16, T // 2)), 16)      # sequence tile (layer kernel)
    tm = _pick_tile(M, min(512, max(16, M // 2)), 16)      # row tile (lm-head kernel)
    tn = _pick_lane_tile(V, 1024)                          # vocab tile (lm-head kernel)

    for layer in params["layers"]:
        x = transformer_layer(x, layer, hmask, n_head=n_head, tt=tt)

    logits = ln_head(x.reshape(M, E), params["ln_f_g"], params["ln_f_b"],
                     params["head_w"], params["head_b"], tm=tm, tn=tn)
    return logits.reshape(B, T, V)


if __name__ == "__main__":
    vocab_size = 256
    n_embd = 128
    n_layer = 2
    n_head = 4
    block_size = 16
    d_ff = 2048          # nn.TransformerEncoderLayer default dim_feedforward
    B, T = 2, 8

    key = jax.random.PRNGKey(0)
    pkey, ikey = jax.random.split(key)
    params = init_params(pkey, vocab_size, n_embd, n_layer, block_size, d_ff)
    idx = jax.random.randint(ikey, (B, T), 0, vocab_size, dtype=jnp.int32)

    fwd = jax.jit(functools.partial(minigpt_forward, n_head=n_head,
                                    block_size=block_size))
    logits = fwd(params, idx)
    jax.block_until_ready(logits)

    assert logits.shape == (B, T, vocab_size)
    assert logits.dtype == jnp.float32
    assert bool(jnp.all(jnp.isfinite(logits)))
    print("KERNEL_OK")
</pallas_src>

<mosaic_0001>
module attributes {stable_mosaic.version = 11 : i64} {
  func.func @_ln_head_kernel(%arg0: i32, %arg1: i32, %arg2: memref<16x128xbf16, #tpu.memory_space<vmem>>, %arg3: memref<2x128xf32, #tpu.memory_space<vmem>>, %arg4: memref<128x256xbf16, #tpu.memory_space<vmem>>, %arg5: memref<1x256xf32, #tpu.memory_space<vmem>>, %arg6: memref<16x256xf32, #tpu.memory_space<vmem>>, %arg7: memref<16x128xbf16, #tpu.memory_space<vmem>>) attributes {dimension_semantics = [#tpu.dimension_semantics<parallel>, #tpu.dimension_semantics<arbitrary>], iteration_bounds = array<i64: 1, 1>, scalar_prefetch = 0 : i64, scratch_operands = 1 : i64, tpu.core_type = #tpu.core_type<tc>, window_params = [{transform_indices = @transform_0, window_bounds = array<i64: 16, 128>}, {pipeline_mode = #tpu.pipeline_mode<synchronous>, transform_indices = @transform_1, window_bounds = array<i64: 2, 128>}, {transform_indices = @transform_2, window_bounds = array<i64: 128, 256>}, {transform_indices = @transform_3, window_bounds = array<i64: 1, 256>}, {transform_indices = @transform_4, window_bounds = array<i64: 16, 256>}]} {
    %c0_i32 = arith.constant 0 : i32
    %0 = arith.cmpi eq, %arg1, %c0_i32 : i32
    %1 = arith.extui %0 : i1 to i32
    %c0_i32_0 = arith.constant 0 : i32
    %2 = arith.cmpi ne, %1, %c0_i32_0 : i32
    scf.if %2 {
      %c0_8 = arith.constant 0 : index
      %c0_9 = arith.constant 0 : index
      %10 = vector.load %arg2[%c0_8, %c0_9] : memref<16x128xbf16, #tpu.memory_space<vmem>>, vector<16x128xbf16>
      %11 = arith.extf %10 : vector<16x128xbf16> to vector<16x128xf32>
      %c0_10 = arith.constant 0 : index
      %c0_11 = arith.constant 0 : index
      %12 = vector.load %arg3[%c0_10, %c0_11] : memref<2x128xf32, #tpu.memory_space<vmem>>, vector<1x128xf32>
      %c1 = arith.constant 1 : index
      %c0_12 = arith.constant 0 : index
      %13 = vector.load %arg3[%c1, %c0_12] : memref<2x128xf32, #tpu.memory_space<vmem>>, vector<1x128xf32>
      %cst_13 = arith.constant dense<0.000000e+00> : vector<16xf32>
      %14 = vector.multi_reduction <add>, %11, %cst_13 [1] : vector<16x128xf32> to vector<16xf32>
      %15 = vector.shape_cast %14 : vector<16xf32> to vector<16x1xf32>
      %cst_14 = arith.constant 1.280000e+02 : f32
      %16 = vector.broadcast %cst_14 : f32 to vector<16x1xf32>
      %17 = arith.divf %15, %16 : vector<16x1xf32>
      %18 = vector.broadcast %17 : vector<16x1xf32> to vector<16x128xf32>
      %19 = arith.subf %11, %18 : vector<16x128xf32>
      %20 = arith.mulf %19, %19 : vector<16x128xf32>
      %cst_15 = arith.constant dense<0.000000e+00> : vector<16xf32>
      %21 = vector.multi_reduction <add>, %20, %cst_15 [1] : vector<16x128xf32> to vector<16xf32>
      %22 = vector.shape_cast %21 : vector<16xf32> to vector<16x1xf32>
      %cst_16 = arith.constant 1.280000e+02 : f32
      %23 = vector.broadcast %cst_16 : f32 to vector<16x1xf32>
      %24 = arith.divf %22, %23 : vector<16x1xf32>
      %25 = vector.broadcast %17 : vector<16x1xf32> to vector<16x128xf32>
      %26 = arith.subf %11, %25 : vector<16x128xf32>
      %cst_17 = arith.constant 9.99999974E-6 : f32
      %27 = vector.broadcast %cst_17 : f32 to vector<16x1xf32>
      %28 = arith.addf %24, %27 : vector<16x1xf32>
      %29 = math.rsqrt %28 : vector<16x1xf32>
      %30 = vector.broadcast %29 : vector<16x1xf32> to vector<16x128xf32>
      %31 = arith.mulf %26, %30 : vector<16x128xf32>
      %32 = vector.broadcast %12 : vector<1x128xf32> to vector<16x128xf32>
      %33 = arith.mulf %31, %32 : vector<16x128xf32>
      %34 = vector.broadcast %13 : vector<1x128xf32> to vector<16x128xf32>
      %35 = arith.addf %33, %34 : vector<16x128xf32>
      %36 = arith.truncf %35 : vector<16x128xf32> to vector<16x128xbf16>
      %c0_18 = arith.constant 0 : index
      %c0_19 = arith.constant 0 : index
      %37 = vector.load %arg7[%c0_18, %c0_19] : memref<16x128xbf16, #tpu.memory_space<vmem>>, vector<16x128xbf16>
      tpu.vector_store %arg7[%c0_18, %c0_19], %36 {strides = array<i32>} : memref<16x128xbf16, #tpu.memory_space<vmem>>, vector<16x128xbf16>,
    } else {
    }
    %c0 = arith.constant 0 : index
    %c0_1 = arith.constant 0 : index
    %3 = vector.load %arg7[%c0, %c0_1] : memref<16x128xbf16, #tpu.memory_space<vmem>>, vector<16x128xbf16>
    %c0_2 = arith.constant 0 : index
    %c0_3 = arith.constant 0 : index
    %4 = vector.load %arg4[%c0_2, %c0_3] : memref<128x256xbf16, #tpu.memory_space<vmem>>, vector<128x256xbf16>
    %cst = arith.constant dense<0.000000e+00> : vector<16x256xf32>
    %5 = tpu.matmul %3, %4, %cst {dimension_numbers = #tpu.dot_dimension_numbers<[1], [0], [0], [1], [0, 0, 1, 1], [], []>} : vector<16x128xbf16>, vector<128x256xbf16>, vector<16x256xf32> -> vector<16x256xf32>
    %c0_4 = arith.constant 0 : index
    %c0_5 = arith.constant 0 : index
    %6 = vector.load %arg5[%c0_4, %c0_5] : memref<1x256xf32, #tpu.memory_space<vmem>>, vector<1x256xf32>
    %7 = vector.broadcast %6 : vector<1x256xf32> to vector<16x256xf32>
    %8 = arith.addf %5, %7 : vector<16x256xf32>
    %c0_6 = arith.constant 0 : index
    %c0_7 = arith.constant 0 : index
    %9 = vector.load %arg6[%c0_6, %c0_7] : memref<16x256xf32, #tpu.memory_space<vmem>>, vector<16x256xf32>
    tpu.vector_store %arg6[%c0_6, %c0_7], %8 {strides = array<i32>} : memref<16x256xf32, #tpu.memory_space<vmem>>, vector<16x256xf32>,
    return
  }
  func.func @transform_0(%arg0: i32, %arg1: i32) -> (i32, i32) {
    %c0_i32 = arith.constant 0 : i32
    %c0_i32_0 = arith.constant 0 : i32
    return %arg0, %c0_i32 : i32, i32
  }
  func.func @transform_1(%arg0: i32, %arg1: i32) -> (i32, i32) {
    %c0_i32 = arith.constant 0 : i32
    %c0_i32_0 = arith.constant 0 : i32
    %c0_i32_1 = arith.constant 0 : i32
    return %c0_i32, %c0_i32_0 : i32, i32
  }
  func.func @transform_2(%arg0: i32, %arg1: i32) -> (i32, i32) {
    %c0_i32 = arith.constant 0 : i32
    %c0_i32_0 = arith.constant 0 : i32
    return %c0_i32, %arg1 : i32, i32
  }
  func.func @transform_3(%arg0: i32, %arg1: i32) -> (i32, i32) {
    %c0_i32 = arith.constant 0 : i32
    %c0_i32_0 = arith.constant 0 : i32
    return %c0_i32, %arg1 : i32, i32
  }
  func.func @transform_4(%arg0: i32, %arg1: i32) -> (i32, i32) {
    %c0_i32 = arith.constant 0 : i32
    return %arg0, %arg1 : i32, i32
  }
}

module attributes {stable_mosaic.version = 11 : i64} {
  func.func @_layer_kernel(%arg0: i32, %arg1: memref<2x8x128xbf16, #tpu.memory_space<vmem>>, %arg2: memref<128x384xbf16, #tpu.memory_space<vmem>>, %arg3: memref<128x128xbf16, #tpu.memory_space<vmem>>, %arg4: memref<128x2048xbf16, #tpu.memory_space<vmem>>, %arg5: memref<2048x128xbf16, #tpu.memory_space<vmem>>, %arg6: memref<128x128xbf16, #tpu.memory_space<vmem>>, %arg7: memref<8x2048xf32, #tpu.memory_space<vmem>>, %arg8: memref<2x8x128xbf16, #tpu.memory_space<vmem>>) attributes {dimension_semantics = [#tpu.dimension_semantics<parallel>], iteration_bounds = array<i64: 1>, scalar_prefetch = 0 : i64, scratch_operands = 0 : i64, tpu.core_type = #tpu.core_type<tc>, window_params = [{transform_indices = @transform_0, window_bounds = array<i64: 2, 8, 128>}, {pipeline_mode = #tpu.pipeline_mode<synchronous>, transform_indices = @transform_1, window_bounds = array<i64: 128, 384>}, {pipeline_mode = #tpu.pipeline_mode<synchronous>, transform_indices = @transform_2, window_bounds = array<i64: 128, 128>}, {pipeline_mode = #tpu.pipeline_mode<synchronous>, transform_indices = @transform_3, window_bounds = array<i64: 128, 2048>}, {pipeline_mode = #tpu.pipeline_mode<synchronous>, transform_indices = @transform_4, window_bounds = array<i64: 2048, 128>}, {pipeline_mode = #tpu.pipeline_mode<synchronous>, transform_indices = @transform_5, window_bounds = array<i64: 128, 128>}, {pipeline_mode = #tpu.pipeline_mode<synchronous>, transform_indices = @transform_6, window_bounds = array<i64: 8, 2048>}, {transform_indices = @transform_7, window_bounds = array<i64: 2, 8, 128>}]} {
    %c0 = arith.constant 0 : index
    %c0_0 = arith.constant 0 : index
    %c0_1 = arith.constant 0 : index
    %0 = vector.load %arg1[%c0, %c0_0, %c0_1] : memref<2x8x128xbf16, #tpu.memory_space<vmem>>, vector<2x8x128xbf16>
    %1 = vector.shape_cast %0 : vector<2x8x128xbf16> to vector<16x128xbf16>
    %2 = arith.extf %1 : vector<16x128xbf16> to vector<16x128xf32>
    %c0_2 = arith.constant 0 : index
    %c0_3 = arith.constant 0 : index
    %3 = vector.load %arg2[%c0_2, %c0_3] : memref<128x384xbf16, #tpu.memory_space<vmem>>, vector<128x384xbf16>
    %c0_4 = arith.constant 0 : index
    %c0_5 = arith.constant 0 : index
    %4 = vector.load %arg3[%c0_4, %c0_5] : memref<128x128xbf16, #tpu.memory_space<vmem>>, vector<128x128xbf16>
    %c0_6 = arith.constant 0 : index
    %c0_7 = arith.constant 0 : index
    %5 = vector.load %arg4[%c0_6, %c0_7] : memref<128x2048xbf16, #tpu.memory_space<vmem>>, vector<128x2048xbf16>
    %c0_8 = arith.constant 0 : index
    %c0_9 = arith.constant 0 : index
    %6 = vector.load %arg5[%c0_8, %c0_9] : memref<2048x128xbf16, #tpu.memory_space<vmem>>, vector<2048x128xbf16>
    %c0_10 = arith.constant 0 : index
    %c0_11 = arith.constant 0 : index
    %7 = vector.load %arg6[%c0_10, %c0_11] : memref<128x128xbf16, #tpu.memory_space<vmem>>, vector<128x128xbf16>
    %c0_12 = arith.constant 0 : index
    %c0_13 = arith.constant 0 : index
    %8 = vector.load %arg7[%c0_12, %c0_13] : memref<8x2048xf32, #tpu.memory_space<vmem>>, vector<1x384xf32>
    %c1 = arith.constant 1 : index
    %c0_14 = arith.constant 0 : index
    %9 = vector.load %arg7[%c1, %c0_14] : memref<8x2048xf32, #tpu.memory_space<vmem>>, vector<1x2048xf32>
    %c2 = arith.constant 2 : index
    %c0_15 = arith.constant 0 : index
    %10 = vector.load %arg7[%c2, %c0_15] : memref<8x2048xf32, #tpu.memory_space<vmem>>, vector<1x128xf32>
    %c3 = arith.constant 3 : index
    %c0_16 = arith.constant 0 : index
    %11 = vector.load %arg7[%c3, %c0_16] : memref<8x2048xf32, #tpu.memory_space<vmem>>, vector<1x128xf32>
    %c4 = arith.constant 4 : index
    %c0_17 = arith.constant 0 : index
    %12 = vector.load %arg7[%c4, %c0_17] : memref<8x2048xf32, #tpu.memory_space<vmem>>, vector<1x128xf32>
    %c5 = arith.constant 5 : index
    %c0_18 = arith.constant 0 : index
    %13 = vector.load %arg7[%c5, %c0_18] : memref<8x2048xf32, #tpu.memory_space<vmem>>, vector<1x128xf32>
    %c6 = arith.constant 6 : index
    %c0_19 = arith.constant 0 : index
    %14 = vector.load %arg7[%c6, %c0_19] : memref<8x2048xf32, #tpu.memory_space<vmem>>, vector<1x128xf32>
    %c7 = arith.constant 7 : index
    %c0_20 = arith.constant 0 : index
    %15 = vector.load %arg7[%c7, %c0_20] : memref<8x2048xf32, #tpu.memory_space<vmem>>, vector<1x128xf32>
    %cst = arith.constant dense<0.000000e+00> : vector<16x384xf32>
    %16 = tpu.matmul %1, %3, %cst {dimension_numbers = #tpu.dot_dimension_numbers<[1], [0], [0], [1], [0, 0, 1, 1], [], []>} : vector<16x128xbf16>, vector<128x384xbf16>, vector<16x384xf32> -> vector<16x384xf32>
    %17 = vector.broadcast %8 : vector<1x384xf32> to vector<16x384xf32>
    %18 = arith.addf %16, %17 : vector<16x384xf32>
    %19 = vector.extract_strided_slice %18 {offsets = [0, 0], sizes = [8, 128], strides = [1, 1]} : vector<16x384xf32> to vector<8x128xf32>
    %cst_21 = arith.constant 0.176776692 : f32
    %20 = vector.broadcast %cst_21 : f32 to vector<8x128xf32>
    %21 = arith.mulf %19, %20 : vector<8x128xf32>
    %22 = vector.extract_strided_slice %18 {offsets = [0, 128], sizes = [8, 128], strides = [1, 1]} : vector<16x384xf32> to vector<8x128xf32>
    %23 = arith.mulf %21, %22 : vector<8x128xf32>
    %24 = arith.truncf %23 : vector<8x128xf32> to vector<8x128xbf16>
    %cst_22 = arith.constant dense<0.000000e+00> : vector<8x128xf32>
    %25 = tpu.matmul %24, %7, %cst_22 {dimension_numbers = #tpu.dot_dimension_numbers<[1], [0], [0], [1], [0, 0, 1, 1], [], []>} : vector<8x128xbf16>, vector<128x128xbf16>, vector<8x128xf32> -> vector<8x128xf32>
    %26 = vector.extract_strided_slice %18 {offsets = [8, 128], sizes = [8, 128], strides = [1, 1]} : vector<16x384xf32> to vector<8x128xf32>
    %27 = arith.mulf %21, %26 : vector<8x128xf32>
    %28 = arith.truncf %27 : vector<8x128xf32> to vector<8x128xbf16>
    %cst_23 = arith.constant dense<0.000000e+00> : vector<8x128xf32>
    %29 = tpu.matmul %28, %7, %cst_23 {dimension_numbers = #tpu.dot_dimension_numbers<[1], [0], [0], [1], [0, 0, 1, 1], [], []>} : vector<8x128xbf16>, vector<128x128xbf16>, vector<8x128xf32> -> vector<8x128xf32>
    %30 = arith.maximumf %25, %29 : vector<8x128xf32>
    %31 = arith.subf %25, %30 : vector<8x128xf32>
    %32 = math.exp %31 : vector<8x128xf32>
    %33 = arith.subf %29, %30 : vector<8x128xf32>
    %34 = math.exp %33 : vector<8x128xf32>
    %35 = arith.addf %32, %34 : vector<8x128xf32>
    %cst_24 = arith.constant 1.000000e+00 : f32
    %36 = vector.broadcast %cst_24 : f32 to vector<8x128xf32>
    %37 = arith.divf %36, %35 : vector<8x128xf32>
    %cst_25 = arith.constant 0.000000e+00 : f32
    %38 = vector.broadcast %cst_25 : f32 to vector<8x128xf32>
    %39 = vector.extract_strided_slice %18 {offsets = [0, 256], sizes = [8, 128], strides = [1, 1]} : vector<16x384xf32> to vector<8x128xf32>
    %40 = arith.mulf %32, %37 : vector<8x128xf32>
    %41 = arith.mulf %40, %39 : vector<8x128xf32>
    %42 = arith.addf %38, %41 : vector<8x128xf32>
    %43 = vector.extract_strided_slice %18 {offsets = [8, 256], sizes = [8, 128], strides = [1, 1]} : vector<16x384xf32> to vector<8x128xf32>
    %44 = arith.mulf %34, %37 : vector<8x128xf32>
    %45 = arith.mulf %44, %43 : vector<8x128xf32>
    %46 = arith.addf %42, %45 : vector<8x128xf32>
    %47 = vector.extract_strided_slice %18 {offsets = [8, 0], sizes = [8, 128], strides = [1, 1]} : vector<16x384xf32> to vector<8x128xf32>
    %cst_26 = arith.constant 0.176776692 : f32
    %48 = vector.broadcast %cst_26 : f32 to vector<8x128xf32>
    %49 = arith.mulf %47, %48 : vector<8x128xf32>
    %50 = vector.extract_strided_slice %18 {offsets = [0, 128], sizes = [8, 128], strides = [1, 1]} : vector<16x384xf32> to vector<8x128xf32>
    %51 = arith.mulf %49, %50 : vector<8x128xf32>
    %52 = arith.truncf %51 : vector<8x128xf32> to vector<8x128xbf16>
    %cst_27 = arith.constant dense<0.000000e+00> : vector<8x128xf32>
    %53 = tpu.matmul %52, %7, %cst_27 {dimension_numbers = #tpu.dot_dimension_numbers<[1], [0], [0], [1], [0, 0, 1, 1], [], []>} : vector<8x128xbf16>, vector<128x128xbf16>, vector<8x128xf32> -> vector<8x128xf32>
    %54 = vector.extract_strided_slice %18 {offsets = [8, 128], sizes = [8, 128], strides = [1, 1]} : vector<16x384xf32> to vector<8x128xf32>
    %55 = arith.mulf %49, %54 : vector<8x128xf32>
    %56 = arith.truncf %55 : vector<8x128xf32> to vector<8x128xbf16>
    %cst_28 = arith.constant dense<0.000000e+00> : vector<8x128xf32>
    %57 = tpu.matmul %56, %7, %cst_28 {dimension_numbers = #tpu.dot_dimension_numbers<[1], [0], [0], [1], [0, 0, 1, 1], [], []>} : vector<8x128xbf16>, vector<128x128xbf16>, vector<8x128xf32> -> vector<8x128xf32>
    %58 = arith.maximumf %53, %57 : vector<8x128xf32>
    %59 = arith.subf %53, %58 : vector<8x128xf32>
    %60 = math.exp %59 : vector<8x128xf32>
    %61 = arith.subf %57, %58 : vector<8x128xf32>
    %62 = math.exp %61 : vector<8x128xf32>
    %63 = arith.addf %60, %62 : vector<8x128xf32>
    %cst_29 = arith.constant 1.000000e+00 : f32
    %64 = vector.broadcast %cst_29 : f32 to vector<8x128xf32>
    %65 = arith.divf %64, %63 : vector<8x128xf32>
    %cst_30 = arith.constant 0.000000e+00 : f32
    %66 = vector.broadcast %cst_30 : f32 to vector<8x128xf32>
    %67 = vector.extract_strided_slice %18 {offsets = [0, 256], sizes = [8, 128], strides = [1, 1]} : vector<16x384xf32> to vector<8x128xf32>
    %68 = arith.mulf %60, %65 : vector<8x128xf32>
    %69 = arith.mulf %68, %67 : vector<8x128xf32>
    %70 = arith.addf %66, %69 : vector<8x128xf32>
    %71 = vector.extract_strided_slice %18 {offsets = [8, 256], sizes = [8, 128], strides = [1, 1]} : vector<16x384xf32> to vector<8x128xf32>
    %72 = arith.mulf %62, %65 : vector<8x128xf32>
    %73 = arith.mulf %72, %71 : vector<8x128xf32>
    %74 = arith.addf %70, %73 : vector<8x128xf32>
    %75 = tpu.concatenate %46, %74 in 0 : vector<8x128xf32>, vector<8x128xf32> -> vector<16x128xf32>
    %76 = arith.truncf %75 : vector<16x128xf32> to vector<16x128xbf16>
    %cst_31 = arith.constant dense<0.000000e+00> : vector<16x128xf32>
    %77 = tpu.matmul %76, %4, %cst_31 {dimension_numbers = #tpu.dot_dimension_numbers<[1], [0], [0], [1], [0, 0, 1, 1], [], []>} : vector<16x128xbf16>, vector<128x128xbf16>, vector<16x128xf32> -> vector<16x128xf32>
    %78 = vector.broadcast %10 : vector<1x128xf32> to vector<16x128xf32>
    %79 = arith.addf %77, %78 : vector<16x128xf32>
    %80 = arith.addf %2, %79 : vector<16x128xf32>
    %cst_32 = arith.constant dense<0.000000e+00> : vector<16xf32>
    %81 = vector.multi_reduction <add>, %80, %cst_32 [1] : vector<16x128xf32> to vector<16xf32>
    %82 = vector.shape_cast %81 : vector<16xf32> to vector<16x1xf32>
    %cst_33 = arith.constant 1.280000e+02 : f32
    %83 = vector.broadcast %cst_33 : f32 to vector<16x1xf32>
    %84 = arith.divf %82, %83 : vector<16x1xf32>
    %85 = vector.broadcast %84 : vector<16x1xf32> to vector<16x128xf32>
    %86 = arith.subf %80, %85 : vector<16x128xf32>
    %87 = arith.mulf %86, %86 : vector<16x128xf32>
    %cst_34 = arith.constant dense<0.000000e+00> : vector<16xf32>
    %88 = vector.multi_reduction <add>, %87, %cst_34 [1] : vector<16x128xf32> to vector<16xf32>
    %89 = vector.shape_cast %88 : vector<16xf32> to vector<16x1xf32>
    %cst_35 = arith.constant 1.280000e+02 : f32
    %90 = vector.broadcast %cst_35 : f32 to vector<16x1xf32>
    %91 = arith.divf %89, %90 : vector<16x1xf32>
    %92 = vector.broadcast %84 : vector<16x1xf32> to vector<16x128xf32>
    %93 = arith.subf %80, %92 : vector<16x128xf32>
    %cst_36 = arith.constant 9.99999974E-6 : f32
    %94 = vector.broadcast %cst_36 : f32 to vector<16x1xf32>
    %95 = arith.addf %91, %94 : vector<16x1xf32>
    %96 = math.rsqrt %95 : vector<16x1xf32>
    %97 = vector.broadcast %96 : vector<16x1xf32> to vector<16x128xf32>
    %98 = arith.mulf %93, %97 : vector<16x128xf32>
    %99 = vector.broadcast %12 : vector<1x128xf32> to vector<16x128xf32>
    %100 = arith.mulf %98, %99 : vector<16x128xf32>
    %101 = vector.broadcast %13 : vector<1x128xf32> to vector<16x128xf32>
    %102 = arith.addf %100, %101 : vector<16x128xf32>
    %103 = arith.truncf %102 : vector<16x128xf32> to vector<16x128xbf16>
    %cst_37 = arith.constant dense<0.000000e+00> : vector<16x2048xf32>
    %104 = tpu.matmul %103, %5, %cst_37 {dimension_numbers = #tpu.dot_dimension_numbers<[1], [0], [0], [1], [0, 0, 1, 1], [], []>} : vector<16x128xbf16>, vector<128x2048xbf16>, vector<16x2048xf32> -> vector<16x2048xf32>
    %105 = vector.broadcast %9 : vector<1x2048xf32> to vector<16x2048xf32>
    %106 = arith.addf %104, %105 : vector<16x2048xf32>
    %cst_38 = arith.constant 0.000000e+00 : f32
    %107 = vector.broadcast %cst_38 : f32 to vector<16x2048xf32>
    %108 = arith.maximumf %106, %107 : vector<16x2048xf32>
    %109 = arith.truncf %108 : vector<16x2048xf32> to vector<16x2048xbf16>
    %cst_39 = arith.constant dense<0.000000e+00> : vector<16x128xf32>
    %110 = tpu.matmul %109, %6, %cst_39 {dimension_numbers = #tpu.dot_dimension_numbers<[1], [0], [0], [1], [0, 0, 1, 1], [], []>} : vector<16x2048xbf16>, vector<2048x128xbf16>, vector<16x128xf32> -> vector<16x128xf32>
    %111 = vector.broadcast %11 : vector<1x128xf32> to vector<16x128xf32>
    %112 = arith.addf %110, %111 : vector<16x128xf32>
    %113 = arith.addf %102, %112 : vector<16x128xf32>
    %cst_40 = arith.constant dense<0.000000e+00> : vector<16xf32>
    %114 = vector.multi_reduction <add>, %113, %cst_40 [1] : vector<16x128xf32> to vector<16xf32>
    %115 = vector.shape_cast %114 : vector<16xf32> to vector<16x1xf32>
    %cst_41 = arith.constant 1.280000e+02 : f32
    %116 = vector.broadcast %cst_41 : f32 to vector<16x1xf32>
    %117 = arith.divf %115, %116 : vector<16x1xf32>
    %118 = vector.broadcast %117 : vector<16x1xf32> to vector<16x128xf32>
    %119 = arith.subf %113, %118 : vector<16x128xf32>
    %120 = arith.mulf %119, %119 : vector<16x128xf32>
    %cst_42 = arith.constant dense<0.000000e+00> : vector<16xf32>
    %121 = vector.multi_reduction <add>, %120, %cst_42 [1] : vector<16x128xf32> to vector<16xf32>
    %122 = vector.shape_cast %121 : vector<16xf32> to vector<16x1xf32>
    %cst_43 = arith.constant 1.280000e+02 : f32
    %123 = vector.broadcast %cst_43 : f32 to vector<16x1xf32>
    %124 = arith.divf %122, %123 : vector<16x1xf32>
    %125 = vector.broadcast %117 : vector<16x1xf32> to vector<16x128xf32>
    %126 = arith.subf %113, %125 : vector<16x128xf32>
    %cst_44 = arith.constant 9.99999974E-6 : f32
    %127 = vector.broadcast %cst_44 : f32 to vector<16x1xf32>
    %128 = arith.addf %124, %127 : vector<16x1xf32>
    %129 = math.rsqrt %128 : vector<16x1xf32>
    %130 = vector.broadcast %129 : vector<16x1xf32> to vector<16x128xf32>
    %131 = arith.mulf %126, %130 : vector<16x128xf32>
    %132 = vector.broadcast %14 : vector<1x128xf32> to vector<16x128xf32>
    %133 = arith.mulf %131, %132 : vector<16x128xf32>
    %134 = vector.broadcast %15 : vector<1x128xf32> to vector<16x128xf32>
    %135 = arith.addf %133, %134 : vector<16x128xf32>
    %136 = arith.truncf %135 : vector<16x128xf32> to vector<16x128xbf16>
    %137 = vector.extract_strided_slice %136 {offsets = [0, 0], sizes = [8, 128], strides = [1, 1]} : vector<16x128xbf16> to vector<8x128xbf16>
    %c0_45 = arith.constant 0 : index
    %c0_46 = arith.constant 0 : index
    %c0_47 = arith.constant 0 : index
    %138 = vector.load %arg8[%c0_45, %c0_46, %c0_47] : memref<2x8x128xbf16, #tpu.memory_space<vmem>>, vector<1x8x128xbf16>
    %139 = vector.shape_cast %138 : vector<1x8x128xbf16> to vector<8x128xbf16>
    %140 = vector.shape_cast %137 : vector<8x128xbf16> to vector<1x8x128xbf16>
    tpu.vector_store %arg8[%c0_45, %c0_46, %c0_47], %140 {strides = array<i32>} : memref<2x8x128xbf16, #tpu.memory_space<vmem>>, vector<1x8x128xbf16>,
    %141 = vector.extract_strided_slice %136 {offsets = [8, 0], sizes = [8, 128], strides = [1, 1]} : vector<16x128xbf16> to vector<8x128xbf16>
    %c1_48 = arith.constant 1 : index
    %c0_49 = arith.constant 0 : index
    %c0_50 = arith.constant 0 : index
    %142 = vector.load %arg8[%c1_48, %c0_49, %c0_50] : memref<2x8x128xbf16, #tpu.memory_space<vmem>>, vector<1x8x128xbf16>
    %143 = vector.shape_cast %142 : vector<1x8x128xbf16> to vector<8x128xbf16>
    %144 = vector.shape_cast %141 : vector<8x128xbf16> to vector<1x8x128xbf16>
    tpu.vector_store %arg8[%c1_48, %c0_49, %c0_50], %144 {strides = array<i32>} : memref<2x8x128xbf16, #tpu.memory_space<vmem>>, vector<1x8x128xbf16>,
    return
  }
  func.func @transform_0(%arg0: i32) -> (i32, i32, i32) {
    %c0_i32 = arith.constant 0 : i32
    %c0_i32_0 = arith.constant 0 : i32
    %c0_i32_1 = arith.constant 0 : i32
    return %c0_i32, %arg0, %c0_i32_0 : i32, i32, i32
  }
  func.func @transform_1(%arg0: i32) -> (i32, i32) {
    %c0_i32 = arith.constant 0 : i32
    %c0_i32_0 = arith.constant 0 : i32
    %c0_i32_1 = arith.constant 0 : i32
    return %c0_i32, %c0_i32_0 : i32, i32
  }
  func.func @transform_2(%arg0: i32) -> (i32, i32) {
    %c0_i32 = arith.constant 0 : i32
    %c0_i32_0 = arith.constant 0 : i32
    %c0_i32_1 = arith.constant 0 : i32
    return %c0_i32, %c0_i32_0 : i32, i32
  }
  func.func @transform_3(%arg0: i32) -> (i32, i32) {
    %c0_i32 = arith.constant 0 : i32
    %c0_i32_0 = arith.constant 0 : i32
    %c0_i32_1 = arith.constant 0 : i32
    return %c0_i32, %c0_i32_0 : i32, i32
  }
  func.func @transform_4(%arg0: i32) -> (i32, i32) {
    %c0_i32 = arith.constant 0 : i32
    %c0_i32_0 = arith.constant 0 : i32
    %c0_i32_1 = arith.constant 0 : i32
    return %c0_i32, %c0_i32_0 : i32, i32
  }
  func.func @transform_5(%arg0: i32) -> (i32, i32) {
    %c0_i32 = arith.constant 0 : i32
    %c0_i32_0 = arith.constant 0 : i32
    %c0_i32_1 = arith.constant 0 : i32
    return %c0_i32, %c0_i32_0 : i32, i32
  }
  func.func @transform_6(%arg0: i32) -> (i32, i32) {
    %c0_i32 = arith.constant 0 : i32
    %c0_i32_0 = arith.constant 0 : i32
    %c0_i32_1 = arith.constant 0 : i32
    return %c0_i32, %c0_i32_0 : i32, i32
  }
  func.func @transform_7(%arg0: i32) -> (i32, i32, i32) {
    %c0_i32 = arith.constant 0 : i32
    %c0_i32_0 = arith.constant 0 : i32
    %c0_i32_1 = arith.constant 0 : i32
    return %c0_i32, %arg0, %c0_i32_0 : i32, i32, i32
  }
}

</mosaic_0001>

<llo_original>
// kernel: minigpt_forward.5
$region0: #{minigpt_forward.5}
  #allocation0 [shape = 'u32[]', space=smem, size = 0x4, offset = 0x4, fixed_abs, tag = 'smem constant byte address 0x4 - core index']
  #allocation1 [shape = 'u32[72,128]{1,0:T(1,128)}', space=vmem, size = 0x9000, scoped, tag = 'internal scratch']
  #allocation2 [shape = 'bf16[16,128]{1,0:T(8,128)(2,1)}', space=vmem, size = 0x1000, scoped, tag = 'scratch operand']
  %s0 = inlined_call_operand.vmem [shape: bf16[16,128], index: 0, kind: input, shape index: {}]
  %s1 = inlined_call_operand.vmem [shape: f32[2,128], index: 1, kind: input, shape index: {}]
  %s2 = inlined_call_operand.vmem [shape: bf16[128,256], index: 2, kind: input, shape index: {}]
  %s3 = inlined_call_operand.vmem [shape: f32[1,256], index: 3, kind: input, shape index: {}]
  %s4 = inlined_call_operand.hbm [shape: f32[16,256], index: 4, kind: output, shape index: {}]
  %s5 = sld [smem:[#allocation0]]
  $region30: #{minigpt_forward.5} parent=0
    _
  %s7 = ssub.s32 1, %s5
  %s8 = scalar_select 0, %s7, %s5
  $region1: #{minigpt_forward.5} parent=0
    #allocation3 [shape = 'u8[16384]{0}', space=vmem, size = 0x4000, scoped, tag = 'output window, operand 0, single buffered']
    #allocation4 [shape = 's32[1]{0}', space=sflag, size = 0x4, scoped, tag = 'scoped memory for minigpt_forward.5']
    %9 = vsyncpa [#allocation4], 0
    // Predicated region
    $region2: #{minigpt_forward.5} parent=1 // pred_check
      _
    $region3: #{minigpt_forward.5} parent=1 // pred_check_branch
      %11 = sbr.rel (0) target = $region5
    $region4: #{minigpt_forward.5} parent=1 // pred_region
      _
    $region5: #{minigpt_forward.5} parent=1 // pred_fallthru
      _
    // Predicated region
    $region6: #{minigpt_forward.5} parent=1 // pred_check
      _
    $region7: #{minigpt_forward.5} parent=1 // pred_check_branch
      %13 = sbr.rel (0) target = $region9
    $region8: #{minigpt_forward.5} parent=1 // pred_region
      _
    $region9: #{minigpt_forward.5} parent=1 // pred_fallthru
      _
    // Predicated region
    $region10: #{minigpt_forward.5} parent=1 // pred_check
      _
    $region11: #{minigpt_forward.5} parent=1 // pred_check_branch
      %15 = sbr.rel (0) target = $region13
    $region12: #{minigpt_forward.5} parent=1 // pred_region
      _
    $region13: #{minigpt_forward.5} parent=1 // pred_fallthru
      _
    // Predicated region
    $region14: #{minigpt_forward.5} parent=1 // pred_check
      _
    $region15: #{minigpt_forward.5} parent=1 // pred_check_branch
      %17 = sbr.rel (0) target = $region17
    $region16: #{minigpt_forward.5} parent=1 // pred_region
      _
    $region17: #{minigpt_forward.5} parent=1 // pred_fallthru
      _
    %p18 = scmp.eq.s32.totalorder 0, 0
    // Predicated region
    $region18: #{minigpt_forward.5} parent=1 // pred_check
      %p19 = pneg %p18
    $region19: #{minigpt_forward.5} parent=1 // pred_check_branch
      %21 = sbr.rel (%p19) target = $region21
    $region20: #{minigpt_forward.5} parent=1 // pred_region
      %v22 = vld [vmem:[%s0] sm:$0xf]
      %v23 = vld [vmem:[%s0 + $0x4] sm:$0xf]
      %v24 = vunpack.c.l.bf16 %v22
      %v25 = vunpack.c.l.bf16 %v23
      %v26 = vld [vmem:[%s1] sm:$0x1]
      %v27 = vld [vmem:[%s1 + $0x1] sm:$0x1]
      %28 = vadd.xlane.f32.xlu0 %v24
      %v29 = vpop.xlane.xlu0 %28
      %30 = vadd.xlane.f32.xlu0 %v25
      %v31 = vpop.xlane.xlu0 %30
      %v32 = vrcp.pop 128.0
      %v33 = vmul.f32 128.0, %v32
      %v34 = vsub.f32 1.0, %v33
      %v35 = vmul.f32 %v32, %v34
      %v36 = vadd.f32 %v32, %v35
      %vm37 = vweird.f32 %v32
      %v38 = vsel %vm37, %v32, %v36
      %v39 = vmul.f32 %v29, %v38
      %v40 = vmul.f32 %v31, %v38
      %v41 = vsub.f32 %v24, %v39
      %v42 = vsub.f32 %v25, %v40
      %v43 = vmul.f32 %v41, %v41
      %v44 = vmul.f32 %v42, %v42
      %45 = vadd.xlane.f32.xlu0 %v43
      %v46 = vpop.xlane.xlu0 %45
      %47 = vadd.xlane.f32.xlu0 %v44
      %v48 = vpop.xlane.xlu0 %47
      %v49 = vmul.f32 %v46, %v38
      %v50 = vmul.f32 %v48, %v38
      %v51 = vadd.f32 %v49, 1e-05
      %v52 = vadd.f32 %v50, 1e-05
      %v53 = vrsqrt.pop %v51
      %v54 = vmul.f32 %v53, %v51
      %v55 = vmul.f32 %v54, %v53
      %v56 = vmul.f32 0.5, %v55
      %v57 = vsub.f32 1.5, %v56
      %v58 = vmul.f32 %v53, %v57
      %vm59 = vweird.f32 %v51
      %vm60 = vweird.f32 %v53
      %vm61 = vmor %vm59, %vm60
      %v62 = vsel %vm61, %v53, %v58
      %v63 = vrsqrt.pop %v52
      %v64 = vmul.f32 %v63, %v52
      %v65 = vmul.f32 %v64, %v63
      %v66 = vmul.f32 0.5, %v65
      %v67 = vsub.f32 1.5, %v66
      %v68 = vmul.f32 %v63, %v67
      %vm69 = vweird.f32 %v52
      %vm70 = vweird.f32 %v63
      %vm71 = vmor %vm69, %vm70
      %v72 = vsel %vm71, %v63, %v68
      %v73 = vmul.f32 %v41, %v62
      %v74 = vmul.f32 %v42, %v72
      %v75 = vperm.slane %v26, 0
      %v76 = vmul.f32 %v73, %v75
      %v77 = vmul.f32 %v74, %v75
      %v78 = vperm.slane %v27, 0
      %v79 = vadd.f32 %v76, %v78
      %v80 = vadd.f32 %v77, %v78
      %v81 = vpack.c.bf16 %v79, %v79
      %v82 = vpack.c.bf16 %v80, %v80
      %83 = vst [vmem:[#allocation2] sm:$0xf] %v81
      %84 = vst [vmem:[#allocation2 + $0x4] sm:$0xf] %v82
    $region21: #{minigpt_forward.5} parent=1 // pred_fallthru
      _
    %v85 = vld [vmem:[#allocation2] sm:$0xf]
    %v86 = vld [vmem:[#allocation2 + $0x4] sm:$0xf]
    %v87 = vld [vmem:[%s2] sm:$0xff]
    %v88 = vld [vmem:[%s2 + $0x8] sm:$0xff]
    %v89 = vld [vmem:[%s2 + $0x10] sm:$0xff]
    %v90 = vld [vmem:[%s2 + $0x18] sm:$0xff]
    %v91 = vld [vmem:[%s2 + $0x20] sm:$0xff]
    %v92 = vld [vmem:[%s2 + $0x28] sm:$0xff]
    %v93 = vld [vmem:[%s2 + $0x30] sm:$0xff]
    %v94 = vld [vmem:[%s2 + $0x38] sm:$0xff]
    %v95 = vld [vmem:[%s2 + $0x40] sm:$0xff]
    %v96 = vld [vmem:[%s2 + $0x48] sm:$0xff]
    %v97 = vld [vmem:[%s2 + $0x50] sm:$0xff]
    %v98 = vld [vmem:[%s2 + $0x58] sm:$0xff]
    %v99 = vld [vmem:[%s2 + $0x60] sm:$0xff]
    %v100 = vld [vmem:[%s2 + $0x68] sm:$0xff]
    %v101 = vld [vmem:[%s2 + $0x70] sm:$0xff]
    %v102 = vld [vmem:[%s2 + $0x78] sm:$0xff]
    %v103 = vld [vmem:[%s3] sm:$0x3]
    %v105 = vperm.slane %v103, 0
    %v106 = vperm.slane %v103, 1
    %v111 = vunpack.c.l.b16 %v85
    %v112 = vunpack.c.l.b16 %v86
    %v113 = vpack.c.b16 %v112, %v111
    %v131 = vunpack.c.l.b16 %v87
    %v132 = vunpack.c.h.b16 %v87
    %v133 = vunpack.c.l.b16 %v88
    %v134 = vunpack.c.h.b16 %v88
    %v135 = vunpack.c.l.b16 %v89
    %v136 = vunpack.c.h.b16 %v89
    %v137 = vunpack.c.l.b16 %v90
    %v138 = vunpack.c.h.b16 %v90
    %v139 = vunpack.c.l.b16 %v91
    %v140 = vunpack.c.h.b16 %v91
    %v141 = vunpack.c.l.b16 %v92
    %v142 = vunpack.c.h.b16 %v92
    %v143 = vunpack.c.l.b16 %v93
    %v144 = vunpack.c.h.b16 %v93
    %v145 = vunpack.c.l.b16 %v94
    %v146 = vunpack.c.h.b16 %v94
    %v147 = vunpack.c.l.b16 %v95
    %v148 = vunpack.c.h.b16 %v95
    %v149 = vunpack.c.l.b16 %v96
    %v150 = vunpack.c.h.b16 %v96
    %v151 = vunpack.c.l.b16 %v97
    %v152 = vunpack.c.h.b16 %v97
    %v153 = vunpack.c.l.b16 %v98
    %v154 = vunpack.c.h.b16 %v98
    %v155 = vunpack.c.l.b16 %v99
    %v156 = vunpack.c.h.b16 %v99
    %v157 = vunpack.c.l.b16 %v100
    %v158 = vunpack.c.h.b16 %v100
    %v159 = vunpack.c.l.b16 %v101
    %v160 = vunpack.c.h.b16 %v101
    %v161 = vunpack.c.l.b16 %v102
    %v162 = vunpack.c.h.b16 %v102
    %v163 = vpack.c.b16 %v133, %v131
    %v164 = vpack.c.b16 %v134, %v132
    %v165 = vpack.c.b16 %v137, %v135
    %v166 = vpack.c.b16 %v138, %v136
    %v167 = vpack.c.b16 %v141, %v139
    %v168 = vpack.c.b16 %v142, %v140
    %v169 = vpack.c.b16 %v145, %v143
    %v170 = vpack.c.b16 %v146, %v144
    %v171 = vpack.c.b16 %v149, %v147
    %v172 = vpack.c.b16 %v150, %v148
    %v173 = vpack.c.b16 %v153, %v151
    %v174 = vpack.c.b16 %v154, %v152
    %v175 = vpack.c.b16 %v157, %v155
    %v176 = vpack.c.b16 %v158, %v156
    %v177 = vpack.c.b16 %v161, %v159
    %v178 = vpack.c.b16 %v162, %v160
    %195 = vmatpush.bf16.msra.mxu0 %v177
    %196 = vmatpush.bf16.msra.mxu0 %v175
    %197 = vmatpush.bf16.msra.mxu0 %v173
    %198 = vmatpush.bf16.msra.mxu0 %v171
    %199 = vmatpush.bf16.msra.mxu0 %v169
    %200 = vmatpush.bf16.msra.mxu0 %v167
    %201 = vmatpush.bf16.msra.mxu0 %v165
    %202 = vmatpush.bf16.msra.mxu0 %v163
    %203 = vmatmul.bf16.gmra.mxu0 %v113
    %v204 = vpop.f32.mrf.mxu0
    %v205 = vadd.f32 %v105, %v204
    %v206 = vpop.f32.mrf.mxu0
    %v207 = vadd.f32 %v105, %v206
    %208 = vdwg.mxu0
    %209 = vmatpush.bf16.msra.mxu0 %v178
    %210 = vmatpush.bf16.msra.mxu0 %v176
    %211 = vmatpush.bf16.msra.mxu0 %v174
    %212 = vmatpush.bf16.msra.mxu0 %v172
    %213 = vmatpush.bf16.msra.mxu0 %v170
    %214 = vmatpush.bf16.msra.mxu0 %v168
    %215 = vmatpush.bf16.msra.mxu0 %v166
    %216 = vmatpush.bf16.msra.mxu0 %v164
    %217 = vmatmul.bf16.gmra.mxu0 %v113
    %v218 = vpop.f32.mrf.mxu0
    %v219 = vadd.f32 %v106, %v218
    %v220 = vpop.f32.mrf.mxu0
    %v221 = vadd.f32 %v106, %v220
    %222 = vdwg.mxu0
    %223 = vst [vmem:[#allocation3] sm:$0xff] %v205
    %224 = vst [vmem:[#allocation3 + $0x8] sm:$0xff] %v219
    %225 = vst [vmem:[#allocation3 + $0x10] sm:$0xff] %v207
    %226 = vst [vmem:[#allocation3 + $0x18] sm:$0xff] %v221
    // Predicated region
    $region22: #{minigpt_forward.5} parent=1 // pred_check
      _
    $region23: #{minigpt_forward.5} parent=1 // pred_check_branch
      %228 = sbr.rel (0) target = $region25
    $region24: #{minigpt_forward.5} parent=1 // pred_region
      %230 = vsyncadd [#allocation4], 0
      %s231 = sshll.u32 [#allocation3], 4
      %s232 = int_to_ptr.vmem [resolvable:$true] %s231
      %s233 = sshll.u32 %s4, 4
      %s234 = int_to_ptr.hbm [resolvable:$true] %s233
      %239 = dma.vmem_to_hbm [thread:$0]  %s232, 512, %s234, [#allocation4], 256, 256, 16
    $region25: #{minigpt_forward.5} parent=1 // pred_fallthru
      _
    // Predicated region
    $region26: #{minigpt_forward.5} parent=1 // pred_check
      _
    $region27: #{minigpt_forward.5} parent=1 // pred_check_branch
      %241 = sbr.rel (0) target = $region29
    $region28: #{minigpt_forward.5} parent=1 // pred_region
      %243 = dma.done [#allocation4], 512
    $region29: #{minigpt_forward.5} parent=1 // pred_fallthru
      _
    %244 = vsyncpa [#allocation4], 1

// kernel: minigpt_forward.3
$region0: #{minigpt_forward.3}
  #allocation0 [shape = 'u32[]', space=smem, size = 0x4, offset = 0x4, fixed_abs, tag = 'smem constant byte address 0x4 - core index']
  #allocation1 [shape = 'u32[72,128]{1,0:T(1,128)}', space=vmem, size = 0x9000, scoped, tag = 'internal scratch']
  %s0 = inlined_call_operand.vmem [shape: bf16[2,8,128], index: 0, kind: input, shape index: {}]
  %s1 = inlined_call_operand.vmem [shape: bf16[128,384], index: 1, kind: input, shape index: {}]
  %s2 = inlined_call_operand.vmem [shape: bf16[128,128], index: 2, kind: input, shape index: {}]
  %s3 = inlined_call_operand.hbm [shape: bf16[128,2048], index: 3, kind: input, shape index: {}]
  %s4 = inlined_call_operand.hbm [shape: bf16[2048,128], index: 4, kind: input, shape index: {}]
  %s5 = inlined_call_operand.vmem [shape: bf16[128,128], index: 5, kind: input, shape index: {}]
  %s6 = inlined_call_operand.vmem [shape: f32[8,2048], index: 6, kind: input, shape index: {}]
  %s7 = inlined_call_operand.vmem [shape: bf16[2,8,128], index: 7, kind: output, shape index: {}]
  %s8 = sld [smem:[#allocation0]]
  $region46: #{minigpt_forward.3} parent=0
    _
  %s10 = ssub.s32 1, %s8
  %s11 = scalar_select 0, %s10, %s8
  $region1: #{minigpt_forward.3} parent=0
    #allocation2 [shape = 'u8[524288]{0}', space=vmem, size = 0x80000, scoped, tag = 'input window, operand 3, single buffered']
    #allocation3 [shape = 's32[1]{0}', space=sflag, size = 0x4, scoped, tag = 'scoped memory for minigpt_forward.3']
    #allocation4 [shape = 'u8[524288]{0}', space=vmem, size = 0x80000, scoped, tag = 'input window, operand 4, single buffered']
    #allocation5 [shape = 's32[1]{0}', space=sflag, size = 0x4, scoped, tag = 'scoped memory for minigpt_forward.3']
    %12 = vsyncpa [#allocation3], 0
    %13 = vsyncpa [#allocation5], 0
    // Predicated region
    $region2: #{minigpt_forward.3} parent=1 // pred_check
      _
    $region3: #{minigpt_forward.3} parent=1 // pred_check_branch
      %15 = sbr.rel (0) target = $region5
    $region4: #{minigpt_forward.3} parent=1 // pred_region
      _
    $region5: #{minigpt_forward.3} parent=1 // pred_fallthru
      _
    // Predicated region
    $region6: #{minigpt_forward.3} parent=1 // pred_check
      _
    $region7: #{minigpt_forward.3} parent=1 // pred_check_branch
      %17 = sbr.rel (0) target = $region9
    $region8: #{minigpt_forward.3} parent=1 // pred_region
      _
    $region9: #{minigpt_forward.3} parent=1 // pred_fallthru
      _
    // Predicated region
    $region10: #{minigpt_forward.3} parent=1 // pred_check
      _
    $region11: #{minigpt_forward.3} parent=1 // pred_check_branch
      %19 = sbr.rel (0) target = $region13
    $region12: #{minigpt_forward.3} parent=1 // pred_region
      _
    $region13: #{minigpt_forward.3} parent=1 // pred_fallthru
      _
    // Predicated region
    $region14: #{minigpt_forward.3} parent=1 // pred_check
      _
    $region15: #{minigpt_forward.3} parent=1 // pred_check_branch
      %21 = sbr.rel (0) target = $region17
    $region16: #{minigpt_forward.3} parent=1 // pred_region
      %23 = vsyncadd [#allocation3], 0
      %s24 = sshll.u32 %s3, 4
      %s25 = int_to_ptr.hbm [resolvable:$true] %s24
      %s26 = sshll.u32 [#allocation2], 4
      %s27 = int_to_ptr.vmem [resolvable:$true] %s26
      %32 = dma.hbm_to_vmem [thread:$0]  %s25, 16384, %s27, [#allocation3], 1024, 1024, 64
    $region17: #{minigpt_forward.3} parent=1 // pred_fallthru
      _
    // Predicated region
    $region18: #{minigpt_forward.3} parent=1 // pred_check
      _
    $region19: #{minigpt_forward.3} parent=1 // pred_check_branch
      %34 = sbr.rel (0) target = $region21
    $region20: #{minigpt_forward.3} parent=1 // pred_region
      %36 = vsyncadd [#allocation5], 0
      %s37 = sshll.u32 %s4, 4
      %s38 = int_to_ptr.hbm [resolvable:$true] %s37
      %s39 = sshll.u32 [#allocation4], 4
      %s40 = int_to_ptr.vmem [resolvable:$true] %s39
      %45 = dma.hbm_to_vmem [thread:$0]  %s38, 16384, %s40, [#allocation5], 64, 64, 4
    $region21: #{minigpt_forward.3} parent=1 // pred_fallthru
      _
    // Predicated region
    $region22: #{minigpt_forward.3} parent=1 // pred_check
      _
    $region23: #{minigpt_forward.3} parent=1 // pred_check_branch
      %47 = sbr.rel (0) target = $region25
    $region24: #{minigpt_forward.3} parent=1 // pred_region
      _
    $region25: #{minigpt_forward.3} parent=1 // pred_fallthru
      _
    // Predicated region
    $region26: #{minigpt_forward.3} parent=1 // pred_check
      _
    $region27: #{minigpt_forward.3} parent=1 // pred_check_branch
      %49 = sbr.rel (0) target = $region29
    $region28: #{minigpt_forward.3} parent=1 // pred_region
      _
    $region29: #{minigpt_forward.3} parent=1 // pred_fallthru
      _
    // Predicated region
    $region30: #{minigpt_forward.3} parent=1 // pred_check
      _
    $region31: #{minigpt_forward.3} parent=1 // pred_check_branch
      %51 = sbr.rel (0) target = $region33
    $region32: #{minigpt_forward.3} parent=1 // pred_region
      %53 = dma.done [#allocation3], 16384
    $region33: #{minigpt_forward.3} parent=1 // pred_fallthru
      _
    // Predicated region
    $region34: #{minigpt_forward.3} parent=1 // pred_check
      _
    $region35: #{minigpt_forward.3} parent=1 // pred_check_branch
      %55 = sbr.rel (0) target = $region37
    $region36: #{minigpt_forward.3} parent=1 // pred_region
      %57 = dma.done [#allocation5], 16384
    $region37: #{minigpt_forward.3} parent=1 // pred_fallthru
      _
    %v58 = vld [vmem:[%s0] sm:$0xf]
    %v59 = vld [vmem:[%s0 + $0x4] sm:$0xf]
    %v60 = vunpack.c.l.bf16 %v58
    %v61 = vunpack.c.l.bf16 %v59
    %v62 = vld [vmem:[%s1] sm:$0xff]
    %v63 = vld [vmem:[%s1 + $0x8] sm:$0xf]
    %v64 = vld [vmem:[%s1 + $0xc] sm:$0xff]
    %v65 = vld [vmem:[%s1 + $0x14] sm:$0xf]
    %v66 = vld [vmem:[%s1 + $0x18] sm:$0xff]
    %v67 = vld [vmem:[%s1 + $0x20] sm:$0xf]
    %v68 = vld [vmem:[%s1 + $0x24] sm:$0xff]
    %v69 = vld [vmem:[%s1 + $0x2c] sm:$0xf]
    %v70 = vld [vmem:[%s1 + $0x30] sm:$0xff]
    %v71 = vld [vmem:[%s1 + $0x38] sm:$0xf]
    %v72 = vld [vmem:[%s1 + $0x3c] sm:$0xff]
    %v73 = vld [vmem:[%s1 + $0x44] sm:$0xf]
    %v74 = vld [vmem:[%s1 + $0x48] sm:$0xff]
    %v75 = vld [vmem:[%s1 + $0x50] sm:$0xf]
    %v76 = vld [vmem:[%s1 + $0x54] sm:$0xff]
    %v77 = vld [vmem:[%s1 + $0x5c] sm:$0xf]
    %v78 = vld [vmem:[%s1 + $0x60] sm:$0xff]
    %v79 = vld [vmem:[%s1 + $0x68] sm:$0xf]
    %v80 = vld [vmem:[%s1 + $0x6c] sm:$0xff]
    %v81 = vld [vmem:[%s1 + $0x74] sm:$0xf]
    %v82 = vld [vmem:[%s1 + $0x78] sm:$0xff]
    %v83 = vld [vmem:[%s1 + $0x80] sm:$0xf]
    %v84 = vld [vmem:[%s1 + $0x84] sm:$0xff]
    %v85 = vld [vmem:[%s1 + $0x8c] sm:$0xf]
    %v86 = vld [vmem:[%s1 + $0x90] sm:$0xff]
    %v87 = vld [vmem:[%s1 + $0x98] sm:$0xf]
    %v88 = vld [vmem:[%s1 + $0x9c] sm:$0xff]
    %v89 = vld [vmem:[%s1 + $0xa4] sm:$0xf]
    %v90 = vld [vmem:[%s1 + $0xa8] sm:$0xff]
    %v91 = vld [vmem:[%s1 + $0xb0] sm:$0xf]
    %v92 = vld [vmem:[%s1 + $0xb4] sm:$0xff]
    %v93 = vld [vmem:[%s1 + $0xbc] sm:$0xf]
    %v94 = vld [vmem:[%s2] sm:$0xf]
    %v95 = vld [vmem:[%s2 + $0x4] sm:$0xf]
    %v96 = vld [vmem:[%s2 + $0x8] sm:$0xf]
    %v97 = vld [vmem:[%s2 + $0xc] sm:$0xf]
    %v98 = vld [vmem:[%s2 + $0x10] sm:$0xf]
    %v99 = vld [vmem:[%s2 + $0x14] sm:$0xf]
    %v100 = vld [vmem:[%s2 + $0x18] sm:$0xf]
    %v101 = vld [vmem:[%s2 + $0x1c] sm:$0xf]
    %v102 = vld [vmem:[%s2 + $0x20] sm:$0xf]
    %v103 = vld [vmem:[%s2 + $0x24] sm:$0xf]
    %v104 = vld [vmem:[%s2 + $0x28] sm:$0xf]
    %v105 = vld [vmem:[%s2 + $0x2c] sm:$0xf]
    %v106 = vld [vmem:[%s2 + $0x30] sm:$0xf]
    %v107 = vld [vmem:[%s2 + $0x34] sm:$0xf]
    %v108 = vld [vmem:[%s2 + $0x38] sm:$0xf]
    %v109 = vld [vmem:[%s2 + $0x3c] sm:$0xf]
    %v110 = vld [vmem:[#allocation2] sm:$0xff]
    %v111 = vld [vmem:[#allocation2 + $0x8] sm:$0xff]
    %v112 = vld [vmem:[#allocation2 + $0x10] sm:$0xff]
    %v113 = vld [vmem:[#allocation2 + $0x18] sm:$0xff]
    %v114 = vld [vmem:[#allocation2 + $0x20] sm:$0xff]
    %v115 = vld [vmem:[#allocation2 + $0x28] sm:$0xff]
    %v116 = vld [vmem:[#allocation2 + $0x30] sm:$0xff]
    %v117 = vld [vmem:[#allocation2 + $0x38] sm:$0xff]
    %v118 = vld [vmem:[#allocation2 + $0x40] sm:$0xff]
    %v119 = vld [vmem:[#allocation2 + $0x48] sm:$0xff]
    %v120 = vld [vmem:[#allocation2 + $0x50] sm:$0xff]
    %v121 = vld [vmem:[#allocation2 + $0x58] sm:$0xff]
    %v122 = vld [vmem:[#allocation2 + $0x60] sm:$0xff]
    %v123 = vld [vmem:[#allocation2 + $0x68] sm:$0xff]
    %v124 = vld [vmem:[#allocation2 + $0x70] sm:$0xff]
    %v125 = vld [vmem:[#allocation2 + $0x78] sm:$0xff]
    %v126 = vld [vmem:[#allocation2 + $0x80] sm:$0xff]
    %v127 = vld [vmem:[#allocation2 + $0x88] sm:$0xff]
    %v128 = vld [vmem:[#allocation2 + $0x90] sm:$0xff]
    %v129 = vld [vmem:[#allocation2 + $0x98] sm:$0xff]
    %v130 = vld [vmem:[#allocation2 + $0xa0] sm:$0xff]
    %v131 = vld [vmem:[#allocation2 + $0xa8] sm:$0xff]
    %v132 = vld [vmem:[#allocation2 + $0xb0] sm:$0xff]
    %v133 = vld [vmem:[#allocation2 + $0xb8] sm:$0xff]
    %v134 = vld [vmem:[#allocation2 + $0xc0] sm:$0xff]
    %v135 = vld [vmem:[#allocation2 + $0xc8] sm:$0xff]
    %v136 = vld [vmem:[#allocation2 + $0xd0] sm:$0xff]
    %v137 = vld [vmem:[#allocation2 + $0xd8] sm:$0xff]
    %v138 = vld [vmem:[#allocation2 + $0xe0] sm:$0xff]
    %v139 = vld [vmem:[#allocation2 + $0xe8] sm:$0xff]
    %v140 = vld [vmem:[#allocation2 + $0xf0] sm:$0xff]
    %v141 = vld [vmem:[#allocation2 + $0xf8] sm:$0xff]
    %v142 = vld [vmem:[#allocation2 + $0x100] sm:$0xff]
    %v143 = vld [vmem:[#allocation2 + $0x108] sm:$0xff]
    %v144 = vld [vmem:[#allocation2 + $0x110] sm:$0xff]
    %v145 = vld [vmem:[#allocation2 + $0x118] sm:$0xff]
    %v146 = vld [vmem:[#allocation2 + $0x120] sm:$0xff]
    %v147 = vld [vmem:[#allocation2 + $0x128] sm:$0xff]
    %v148 = vld [vmem:[#allocation2 + $0x130] sm:$0xff]
    %v149 = vld [vmem:[#allocation2 + $0x138] sm:$0xff]
    %v150 = vld [vmem:[#allocation2 + $0x140] sm:$0xff]
    %v151 = vld [vmem:[#allocation2 + $0x148] sm:$0xff]
    %v152 = vld [vmem:[#allocation2 + $0x150] sm:$0xff]
    %v153 = vld [vmem:[#allocation2 + $0x158] sm:$0xff]
    %v154 = vld [vmem:[#allocation2 + $0x160] sm:$0xff]
    %v155 = vld [vmem:[#allocation2 + $0x168] sm:$0xff]
    %v156 = vld [vmem:[#allocation2 + $0x170] sm:$0xff]
    %v157 = vld [vmem:[#allocation2 + $0x178] sm:$0xff]
    %v158 = vld [vmem:[#allocation2 + $0x180] sm:$0xff]
    %v159 = vld [vmem:[#allocation2 + $0x188] sm:$0xff]
    %v160 = vld [vmem:[#allocation2 + $0x190] sm:$0xff]
    %v161 = vld [vmem:[#allocation2 + $0x198] sm:$0xff]
    %v162 = vld [vmem:[#allocation2 + $0x1a0] sm:$0xff]
    %v163 = vld [vmem:[#allocation2 + $0x1a8] sm:$0xff]
    %v164 = vld [vmem:[#allocation2 + $0x1b0] sm:$0xff]
    %v165 = vld [vmem:[#allocation2 + $0x1b8] sm:$0xff]
    %v166 = vld [vmem:[#allocation2 + $0x1c0] sm:$0xff]
    %v167 = vld [vmem:[#allocation2 + $0x1c8] sm:$0xff]
    %v168 = vld [vmem:[#allocation2 + $0x1d0] sm:$0xff]
    %v169 = vld [vmem:[#allocation2 + $0x1d8] sm:$0xff]
    %v170 = vld [vmem:[#allocation2 + $0x1e0] sm:$0xff]
    %v171 = vld [vmem:[#allocation2 + $0x1e8] sm:$0xff]
    %v172 = vld [vmem:[#allocation2 + $0x1f0] sm:$0xff]
    %v173 = vld [vmem:[#allocation2 + $0x1f8] sm:$0xff]
    %v174 = vld [vmem:[#allocation2 + $0x200] sm:$0xff]
    %v175 = vld [vmem:[#allocation2 + $0x208] sm:$0xff]
    %v176 = vld [vmem:[#allocation2 + $0x210] sm:$0xff]
    %v177 = vld [vmem:[#allocation2 + $0x218] sm:$0xff]
    %v178 = vld [vmem:[#allocation2 + $0x220] sm:$0xff]
    %v179 = vld [vmem:[#allocation2 + $0x228] sm:$0xff]
    %v180 = vld [vmem:[#allocation2 + $0x230] sm:$0xff]
    %v181 = vld [vmem:[#allocation2 + $0x238] sm:$0xff]
    %v182 = vld [vmem:[#allocation2 + $0x240] sm:$0xff]
    %v183 = vld [vmem:[#allocation2 + $0x248] sm:$0xff]
    %v184 = vld [vmem:[#allocation2 + $0x250] sm:$0xff]
    %v185 = vld [vmem:[#allocation2 + $0x258] sm:$0xff]
    %v186 = vld [vmem:[#allocation2 + $0x260] sm:$0xff]
    %v187 = vld [vmem:[#allocation2 + $0x268] sm:$0xff]
    %v188 = vld [vmem:[#allocation2 + $0x270] sm:$0xff]
    %v189 = vld [vmem:[#allocation2 + $0x278] sm:$0xff]
    %v190 = vld [vmem:[#allocation2 + $0x280] sm:$0xff]
    %v191 = vld [vmem:[#allocation2 + $0x288] sm:$0xff]
    %v192 = vld [vmem:[#allocation2 + $0x290] sm:$0xff]
    %v193 = vld [vmem:[#allocation2 + $0x298] sm:$0xff]
    %v194 = vld [vmem:[#allocation2 + $0x2a0] sm:$0xff]
    %v195 = vld [vmem:[#allocation2 + $0x2a8] sm:$0xff]
    %v196 = vld [vmem:[#allocation2 + $0x2b0] sm:$0xff]
    %v197 = vld [vmem:[#allocation2 + $0x2b8] sm:$0xff]
    %v198 = vld [vmem:[#allocation2 + $0x2c0] sm:$0xff]
    %v199 = vld [vmem:[#allocation2 + $0x2c8] sm:$0xff]
    %v200 = vld [vmem:[#allocation2 + $0x2d0] sm:$0xff]
    %v201 = vld [vmem:[#allocation2 + $0x2d8] sm:$0xff]
    %v202 = vld [vmem:[#allocation2 + $0x2e0] sm:$0xff]
    %v203 = vld [vmem:[#allocation2 + $0x2e8] sm:$0xff]
    %v204 = vld [vmem:[#allocation2 + $0x2f0] sm:$0xff]
    %v205 = vld [vmem:[#allocation2 + $0x2f8] sm:$0xff]
    %v206 = vld [vmem:[#allocation2 + $0x300] sm:$0xff]
    %v207 = vld [vmem:[#allocation2 + $0x308] sm:$0xff]
    %v208 = vld [vmem:[#allocation2 + $0x310] sm:$0xff]
    %v209 = vld [vmem:[#allocation2 + $0x318] sm:$0xff]
    %v210 = vld [vmem:[#allocation2 + $0x320] sm:$0xff]
    %v211 = vld [vmem:[#allocation2 + $0x328] sm:$0xff]
    %v212 = vld [vmem:[#allocation2 + $0x330] sm:$0xff]
    %v213 = vld [vmem:[#allocation2 + $0x338] sm:$0xff]
    %v214 = vld [vmem:[#allocation2 + $0x340] sm:$0xff]
    %v215 = vld [vmem:[#allocation2 + $0x348] sm:$0xff]
    %v216 = vld [vmem:[#allocation2 + $0x350] sm:$0xff]
    %v217 = vld [vmem:[#allocation2 + $0x358] sm:$0xff]
    %v218 = vld [vmem:[#allocation2 + $0x360] sm:$0xff]
    %v219 = vld [vmem:[#allocation2 + $0x368] sm:$0xff]
    %v220 = vld [vmem:[#allocation2 + $0x370] sm:$0xff]
    %v221 = vld [vmem:[#allocation2 + $0x378] sm:$0xff]
    %v222 = vld [vmem:[#allocation2 + $0x380] sm:$0xff]
    %v223 = vld [vmem:[#allocation2 + $0x388] sm:$0xff]
    %v224 = vld [vmem:[#allocation2 + $0x390] sm:$0xff]
    %v225 = vld [vmem:[#allocation2 + $0x398] sm:$0xff]
    %v226 = vld [vmem:[#allocation2 + $0x3a0] sm:$0xff]
    %v227 = vld [vmem:[#allocation2 + $0x3a8] sm:$0xff]
    %v228 = vld [vmem:[#allocation2 + $0x3b0] sm:$0xff]
    %v229 = vld [vmem:[#allocation2 + $0x3b8] sm:$0xff]
    %v230 = vld [vmem:[#allocation2 + $0x3c0] sm:$0xff]
    %v231 = vld [vmem:[#allocation2 + $0x3c8] sm:$0xff]
    %v232 = vld [vmem:[#allocation2 + $0x3d0] sm:$0xff]
    %v233 = vld [vmem:[#allocation2 + $0x3d8] sm:$0xff]
    %v234 = vld [vmem:[#allocation2 + $0x3e0] sm:$0xff]
    %v235 = vld [vmem:[#allocation2 + $0x3e8] sm:$0xff]
    %v236 = vld [vmem:[#allocation2 + $0x3f0] sm:$0xff]
    %v237 = vld [vmem:[#allocation2 + $0x3f8] sm:$0xff]
    %v238 = vld [vmem:[#allocation4] sm:$0xf]
    %v239 = vld [vmem:[#allocation4 + $0x4] sm:$0xf]
    %v240 = vld [vmem:[#allocation4 + $0x8] sm:$0xf]
    %v241 = vld [vmem:[#allocation4 + $0xc] sm:$0xf]
    %v242 = vld [vmem:[#allocation4 + $0x10] sm:$0xf]
    %v243 = vld [vmem:[#allocation4 + $0x14] sm:$0xf]
    %v244 = vld [vmem:[#allocation4 + $0x18] sm:$0xf]
    %v245 = vld [vmem:[#allocation4 + $0x1c] sm:$0xf]
    %v246 = vld [vmem:[#allocation4 + $0x20] sm:$0xf]
    %v247 = vld [vmem:[#allocation4 + $0x24] sm:$0xf]
    %v248 = vld [vmem:[#allocation4 + $0x28] sm:$0xf]
    %v249 = vld [vmem:[#allocation4 + $0x2c] sm:$0xf]
    %v250 = vld [vmem:[#allocation4 + $0x30] sm:$0xf]
    %v251 = vld [vmem:[#allocation4 + $0x34] sm:$0xf]
    %v252 = vld [vmem:[#allocation4 + $0x38] sm:$0xf]
    %v253 = vld [vmem:[#allocation4 + $0x3c] sm:$0xf]
    %v254 = vld [vmem:[#allocation4 + $0x40] sm:$0xf]
    %v255 = vld [vmem:[#allocation4 + $0x44] sm:$0xf]
    %v256 = vld [vmem:[#allocation4 + $0x48] sm:$0xf]
    %v257 = vld [vmem:[#allocation4 + $0x4c] sm:$0xf]
    %v258 = vld [vmem:[#allocation4 + $0x50] sm:$0xf]
    %v259 = vld [vmem:[#allocation4 + $0x54] sm:$0xf]
    %v260 = vld [vmem:[#allocation4 + $0x58] sm:$0xf]
    %v261 = vld [vmem:[#allocation4 + $0x5c] sm:$0xf]
    %v262 = vld [vmem:[#allocation4 + $0x60] sm:$0xf]
    %v263 = vld [vmem:[#allocation4 + $0x64] sm:$0xf]
    %v264 = vld [vmem:[#allocation4 + $0x68] sm:$0xf]
    %v265 = vld [vmem:[#allocation4 + $0x6c] sm:$0xf]
    %v266 = vld [vmem:[#allocation4 + $0x70] sm:$0xf]
    %v267 = vld [vmem:[#allocation4 + $0x74] sm:$0xf]
    %v268 = vld [vmem:[#allocation4 + $0x78] sm:$0xf]
    %v269 = vld [vmem:[#allocation4 + $0x7c] sm:$0xf]
    %v270 = vld [vmem:[#allocation4 + $0x80] sm:$0xf]
    %v271 = vld [vmem:[#allocation4 + $0x84] sm:$0xf]
    %v272 = vld [vmem:[#allocation4 + $0x88] sm:$0xf]
    %v273 = vld [vmem:[#allocation4 + $0x8c] sm:$0xf]
    %v274 = vld [vmem:[#allocation4 + $0x90] sm:$0xf]
    %v275 = vld [vmem:[#allocation4 + $0x94] sm:$0xf]
    %v276 = vld [vmem:[#allocation4 + $0x98] sm:$0xf]
    %v277 = vld [vmem:[#allocation4 + $0x9c] sm:$0xf]
    %v278 = vld [vmem:[#allocation4 + $0xa0] sm:$0xf]
    %v279 = vld [vmem:[#allocation4 + $0xa4] sm:$0xf]
    %v280 = vld [vmem:[#allocation4 + $0xa8] sm:$0xf]
    %v281 = vld [vmem:[#allocation4 + $0xac] sm:$0xf]
    %v282 = vld [vmem:[#allocation4 + $0xb0] sm:$0xf]
    %v283 = vld [vmem:[#allocation4 + $0xb4] sm:$0xf]
    %v284 = vld [vmem:[#allocation4 + $0xb8] sm:$0xf]
    %v285 = vld [vmem:[#allocation4 + $0xbc] sm:$0xf]
    %v286 = vld [vmem:[#allocation4 + $0xc0] sm:$0xf]
    %v287 = vld [vmem:[#allocation4 + $0xc4] sm:$0xf]
    %v288 = vld [vmem:[#allocation4 + $0xc8] sm:$0xf]
    %v289 = vld [vmem:[#allocation4 + $0xcc] sm:$0xf]
    %v290 = vld [vmem:[#allocation4 + $0xd0] sm:$0xf]
    %v291 = vld [vmem:[#allocation4 + $0xd4] sm:$0xf]
    %v292 = vld [vmem:[#allocation4 + $0xd8] sm:$0xf]
    %v293 = vld [vmem:[#allocation4 + $0xdc] sm:$0xf]
    %v294 = vld [vmem:[#allocation4 + $0xe0] sm:$0xf]
    %v295 = vld [vmem:[#allocation4 + $0xe4] sm:$0xf]
    %v296 = vld [vmem:[#allocation4 + $0xe8] sm:$0xf]
    %v297 = vld [vmem:[#allocation4 + $0xec] sm:$0xf]
    %v298 = vld [vmem:[#allocation4 + $0xf0] sm:$0xf]
    %v299 = vld [vmem:[#allocation4 + $0xf4] sm:$0xf]
    %v300 = vld [vmem:[#allocation4 + $0xf8] sm:$0xf]
    %v301 = vld [vmem:[#allocation4 + $0xfc] sm:$0xf]
    %v302 = vld [vmem:[#allocation4 + $0x100] sm:$0xf]
    %v303 = vld [vmem:[#allocation4 + $0x104] sm:$0xf]
    %v304 = vld [vmem:[#allocation4 + $0x108] sm:$0xf]
    %v305 = vld [vmem:[#allocation4 + $0x10c] sm:$0xf]
    %v306 = vld [vmem:[#allocation4 + $0x110] sm:$0xf]
    %v307 = vld [vmem:[#allocation4 + $0x114] sm:$0xf]
    %v308 = vld [vmem:[#allocation4 + $0x118] sm:$0xf]
    %v309 = vld [vmem:[#allocation4 + $0x11c] sm:$0xf]
    %v310 = vld [vmem:[#allocation4 + $0x120] sm:$0xf]
    %v311 = vld [vmem:[#allocation4 + $0x124] sm:$0xf]
    %v312 = vld [vmem:[#allocation4 + $0x128] sm:$0xf]
    %v313 = vld [vmem:[#allocation4 + $0x12c] sm:$0xf]
    %v314 = vld [vmem:[#allocation4 + $0x130] sm:$0xf]
    %v315 = vld [vmem:[#allocation4 + $0x134] sm:$0xf]
    %v316 = vld [vmem:[#allocation4 + $0x138] sm:$0xf]
    %v317 = vld [vmem:[#allocation4 + $0x13c] sm:$0xf]
    %v318 = vld [vmem:[#allocation4 + $0x140] sm:$0xf]
    %v319 = vld [vmem:[#allocation4 + $0x144] sm:$0xf]
    %v320 = vld [vmem:[#allocation4 + $0x148] sm:$0xf]
    %v321 = vld [vmem:[#allocation4 + $0x14c] sm:$0xf]
    %v322 = vld [vmem:[#allocation4 + $0x150] sm:$0xf]
    %v323 = vld [vmem:[#allocation4 + $0x154] sm:$0xf]
    %v324 = vld [vmem:[#allocation4 + $0x158] sm:$0xf]
    %v325 = vld [vmem:[#allocation4 + $0x15c] sm:$0xf]
    %v326 = vld [vmem:[#allocation4 + $0x160] sm:$0xf]
    %v327 = vld [vmem:[#allocation4 + $0x164] sm:$0xf]
    %v328 = vld [vmem:[#allocation4 + $0x168] sm:$0xf]
    %v329 = vld [vmem:[#allocation4 + $0x16c] sm:$0xf]
    %v330 = vld [vmem:[#allocation4 + $0x170] sm:$0xf]
    %v331 = vld [vmem:[#allocation4 + $0x174] sm:$0xf]
    %v332 = vld [vmem:[#allocation4 + $0x178] sm:$0xf]
    %v333 = vld [vmem:[#allocation4 + $0x17c] sm:$0xf]
    %v334 = vld [vmem:[#allocation4 + $0x180] sm:$0xf]
    %v335 = vld [vmem:[#allocation4 + $0x184] sm:$0xf]
    %v336 = vld [vmem:[#allocation4 + $0x188] sm:$0xf]
    %v337 = vld [vmem:[#allocation4 + $0x18c] sm:$0xf]
    %v338 = vld [vmem:[#allocation4 + $0x190] sm:$0xf]
    %v339 = vld [vmem:[#allocation4 + $0x194] sm:$0xf]
    %v340 = vld [vmem:[#allocation4 + $0x198] sm:$0xf]
    %v341 = vld [vmem:[#allocation4 + $0x19c] sm:$0xf]
    %v342 = vld [vmem:[#allocation4 + $0x1a0] sm:$0xf]
    %v343 = vld [vmem:[#allocation4 + $0x1a4] sm:$0xf]
    %v344 = vld [vmem:[#allocation4 + $0x1a8] sm:$0xf]
    %v345 = vld [vmem:[#allocation4 + $0x1ac] sm:$0xf]
    %v346 = vld [vmem:[#allocation4 + $0x1b0] sm:$0xf]
    %v347 = vld [vmem:[#allocation4 + $0x1b4] sm:$0xf]
    %v348 = vld [vmem:[#allocation4 + $0x1b8] sm:$0xf]
    %v349 = vld [vmem:[#allocation4 + $0x1bc] sm:$0xf]
    %v350 = vld [vmem:[#allocation4 + $0x1c0] sm:$0xf]
    %v351 = vld [vmem:[#allocation4 + $0x1c4] sm:$0xf]
    %v352 = vld [vmem:[#allocation4 + $0x1c8] sm:$0xf]
    %v353 = vld [vmem:[#allocation4 + $0x1cc] sm:$0xf]
    %v354 = vld [vmem:[#allocation4 + $0x1d0] sm:$0xf]
    %v355 = vld [vmem:[#allocation4 + $0x1d4] sm:$0xf]
    %v356 = vld [vmem:[#allocation4 + $0x1d8] sm:$0xf]
    %v357 = vld [vmem:[#allocation4 + $0x1dc] sm:$0xf]
    %v358 = vld [vmem:[#allocation4 + $0x1e0] sm:$0xf]
    %v359 = vld [vmem:[#allocation4 + $0x1e4] sm:$0xf]
    %v360 = vld [vmem:[#allocation4 + $0x1e8] sm:$0xf]
    %v361 = vld [vmem:[#allocation4 + $0x1ec] sm:$0xf]
    %v362 = vld [vmem:[#allocation4 + $0x1f0] sm:$0xf]
    %v363 = vld [vmem:[#allocation4 + $0x1f4] sm:$0xf]
    %v364 = vld [vmem:[#allocation4 + $0x1f8] sm:$0xf]
    %v365 = vld [vmem:[#allocation4 + $0x1fc] sm:$0xf]
    %v366 = vld [vmem:[#allocation4 + $0x200] sm:$0xf]
    %v367 = vld [vmem:[#allocation4 + $0x204] sm:$0xf]
    %v368 = vld [vmem:[#allocation4 + $0x208] sm:$0xf]
    %v369 = vld [vmem:[#allocation4 + $0x20c] sm:$0xf]
    %v370 = vld [vmem:[#allocation4 + $0x210] sm:$0xf]
    %v371 = vld [vmem:[#allocation4 + $0x214] sm:$0xf]
    %v372 = vld [vmem:[#allocation4 + $0x218] sm:$0xf]
    %v373 = vld [vmem:[#allocation4 + $0x21c] sm:$0xf]
    %v374 = vld [vmem:[#allocation4 + $0x220] sm:$0xf]
    %v375 = vld [vmem:[#allocation4 + $0x224] sm:$0xf]
    %v376 = vld [vmem:[#allocation4 + $0x228] sm:$0xf]
    %v377 = vld [vmem:[#allocation4 + $0x22c] sm:$0xf]
    %v378 = vld [vmem:[#allocation4 + $0x230] sm:$0xf]
    %v379 = vld [vmem:[#allocation4 + $0x234] sm:$0xf]
    %v380 = vld [vmem:[#allocation4 + $0x238] sm:$0xf]
    %v381 = vld [vmem:[#allocation4 + $0x23c] sm:$0xf]
    %v382 = vld [vmem:[#allocation4 + $0x240] sm:$0xf]
    %v383 = vld [vmem:[#allocation4 + $0x244] sm:$0xf]
    %v384 = vld [vmem:[#allocation4 + $0x248] sm:$0xf]
    %v385 = vld [vmem:[#allocation4 + $0x24c] sm:$0xf]
    %v386 = vld [vmem:[#allocation4 + $0x250] sm:$0xf]
    %v387 = vld [vmem:[#allocation4 + $0x254] sm:$0xf]
    %v388 = vld [vmem:[#allocation4 + $0x258] sm:$0xf]
    %v389 = vld [vmem:[#allocation4 + $0x25c] sm:$0xf]
    %v390 = vld [vmem:[#allocation4 + $0x260] sm:$0xf]
    %v391 = vld [vmem:[#allocation4 + $0x264] sm:$0xf]
    %v392 = vld [vmem:[#allocation4 + $0x268] sm:$0xf]
    %v393 = vld [vmem:[#allocation4 + $0x26c] sm:$0xf]
    %v394 = vld [vmem:[#allocation4 + $0x270] sm:$0xf]
    %v395 = vld [vmem:[#allocation4 + $0x274] sm:$0xf]
    %v396 = vld [vmem:[#allocation4 + $0x278] sm:$0xf]
    %v397 = vld [vmem:[#allocation4 + $0x27c] sm:$0xf]
    %v398 = vld [vmem:[#allocation4 + $0x280] sm:$0xf]
    %v399 = vld [vmem:[#allocation4 + $0x284] sm:$0xf]
    %v400 = vld [vmem:[#allocation4 + $0x288] sm:$0xf]
    %v401 = vld [vmem:[#allocation4 + $0x28c] sm:$0xf]
    %v402 = vld [vmem:[#allocation4 + $0x290] sm:$0xf]
    %v403 = vld [vmem:[#allocation4 + $0x294] sm:$0xf]
    %v404 = vld [vmem:[#allocation4 + $0x298] sm:$0xf]
    %v405 = vld [vmem:[#allocation4 + $0x29c] sm:$0xf]
    %v406 = vld [vmem:[#allocation4 + $0x2a0] sm:$0xf]
    %v407 = vld [vmem:[#allocation4 + $0x2a4] sm:$0xf]
    %v408 = vld [vmem:[#allocation4 + $0x2a8] sm:$0xf]
    %v409 = vld [vmem:[#allocation4 + $0x2ac] sm:$0xf]
    %v410 = vld [vmem:[#allocation4 + $0x2b0] sm:$0xf]
    %v411 = vld [vmem:[#allocation4 + $0x2b4] sm:$0xf]
    %v412 = vld [vmem:[#allocation4 + $0x2b8] sm:$0xf]
    %v413 = vld [vmem:[#allocation4 + $0x2bc] sm:$0xf]
    %v414 = vld [vmem:[#allocation4 + $0x2c0] sm:$0xf]
    %v415 = vld [vmem:[#allocation4 + $0x2c4] sm:$0xf]
    %v416 = vld [vmem:[#allocation4 + $0x2c8] sm:$0xf]
    %v417 = vld [vmem:[#allocation4 + $0x2cc] sm:$0xf]
    %v418 = vld [vmem:[#allocation4 + $0x2d0] sm:$0xf]
    %v419 = vld [vmem:[#allocation4 + $0x2d4] sm:$0xf]
    %v420 = vld [vmem:[#allocation4 + $0x2d8] sm:$0xf]
    %v421 = vld [vmem:[#allocation4 + $0x2dc] sm:$0xf]
    %v422 = vld [vmem:[#allocation4 + $0x2e0] sm:$0xf]
    %v423 = vld [vmem:[#allocation4 + $0x2e4] sm:$0xf]
    %v424 = vld [vmem:[#allocation4 + $0x2e8] sm:$0xf]
    %v425 = vld [vmem:[#allocation4 + $0x2ec] sm:$0xf]
    %v426 = vld [vmem:[#allocation4 + $0x2f0] sm:$0xf]
    %v427 = vld [vmem:[#allocation4 + $0x2f4] sm:$0xf]
    %v428 = vld [vmem:[#allocation4 + $0x2f8] sm:$0xf]
    %v429 = vld [vmem:[#allocation4 + $0x2fc] sm:$0xf]
    %v430 = vld [vmem:[#allocation4 + $0x300] sm:$0xf]
    %v431 = vld [vmem:[#allocation4 + $0x304] sm:$0xf]
    %v432 = vld [vmem:[#allocation4 + $0x308] sm:$0xf]
    %v433 = vld [vmem:[#allocation4 + $0x30c] sm:$0xf]
    %v434 = vld [vmem:[#allocation4 + $0x310] sm:$0xf]
    %v435 = vld [vmem:[#allocation4 + $0x314] sm:$0xf]
    %v436 = vld [vmem:[#allocation4 + $0x318] sm:$0xf]
    %v437 = vld [vmem:[#allocation4 + $0x31c] sm:$0xf]
    %v438 = vld [vmem:[#allocation4 + $0x320] sm:$0xf]
    %v439 = vld [vmem:[#allocation4 + $0x324] sm:$0xf]
    %v440 = vld [vmem:[#allocation4 + $0x328] sm:$0xf]
    %v441 = vld [vmem:[#allocation4 + $0x32c] sm:$0xf]
    %v442 = vld [vmem:[#allocation4 + $0x330] sm:$0xf]
    %v443 = vld [vmem:[#allocation4 + $0x334] sm:$0xf]
    %v444 = vld [vmem:[#allocation4 + $0x338] sm:$0xf]
    %v445 = vld [vmem:[#allocation4 + $0x33c] sm:$0xf]
    %v446 = vld [vmem:[#allocation4 + $0x340] sm:$0xf]
    %v447 = vld [vmem:[#allocation4 + $0x344] sm:$0xf]
    %v448 = vld [vmem:[#allocation4 + $0x348] sm:$0xf]
    %v449 = vld [vmem:[#allocation4 + $0x34c] sm:$0xf]
    %v450 = vld [vmem:[#allocation4 + $0x350] sm:$0xf]
    %v451 = vld [vmem:[#allocation4 + $0x354] sm:$0xf]
    %v452 = vld [vmem:[#allocation4 + $0x358] sm:$0xf]
    %v453 = vld [vmem:[#allocation4 + $0x35c] sm:$0xf]
    %v454 = vld [vmem:[#allocation4 + $0x360] sm:$0xf]
    %v455 = vld [vmem:[#allocation4 + $0x364] sm:$0xf]
    %v456 = vld [vmem:[#allocation4 + $0x368] sm:$0xf]
    %v457 = vld [vmem:[#allocation4 + $0x36c] sm:$0xf]
    %v458 = vld [vmem:[#allocation4 + $0x370] sm:$0xf]
    %v459 = vld [vmem:[#allocation4 + $0x374] sm:$0xf]
    %v460 = vld [vmem:[#allocation4 + $0x378] sm:$0xf]
    %v461 = vld [vmem:[#allocation4 + $0x37c] sm:$0xf]
    %v462 = vld [vmem:[#allocation4 + $0x380] sm:$0xf]
    %v463 = vld [vmem:[#allocation4 + $0x384] sm:$0xf]
    %v464 = vld [vmem:[#allocation4 + $0x388] sm:$0xf]
    %v465 = vld [vmem:[#allocation4 + $0x38c] sm:$0xf]
    %v466 = vld [vmem:[#allocation4 + $0x390] sm:$0xf]
    %v467 = vld [vmem:[#allocation4 + $0x394] sm:$0xf]
    %v468 = vld [vmem:[#allocation4 + $0x398] sm:$0xf]
    %v469 = vld [vmem:[#allocation4 + $0x39c] sm:$0xf]
    %v470 = vld [vmem:[#allocation4 + $0x3a0] sm:$0xf]
    %v471 = vld [vmem:[#allocation4 + $0x3a4] sm:$0xf]
    %v472 = vld [vmem:[#allocation4 + $0x3a8] sm:$0xf]
    %v473 = vld [vmem:[#allocation4 + $0x3ac] sm:$0xf]
    %v474 = vld [vmem:[#allocation4 + $0x3b0] sm:$0xf]
    %v475 = vld [vmem:[#allocation4 + $0x3b4] sm:$0xf]
    %v476 = vld [vmem:[#allocation4 + $0x3b8] sm:$0xf]
    %v477 = vld [vmem:[#allocation4 + $0x3bc] sm:$0xf]
    %v478 = vld [vmem:[#allocation4 + $0x3c0] sm:$0xf]
    %v479 = vld [vmem:[#allocation4 + $0x3c4] sm:$0xf]
    %v480 = vld [vmem:[#allocation4 + $0x3c8] sm:$0xf]
    %v481 = vld [vmem:[#allocation4 + $0x3cc] sm:$0xf]
    %v482 = vld [vmem:[#allocation4 + $0x3d0] sm:$0xf]
    %v483 = vld [vmem:[#allocation4 + $0x3d4] sm:$0xf]
    %v484 = vld [vmem:[#allocation4 + $0x3d8] sm:$0xf]
    %v485 = vld [vmem:[#allocation4 + $0x3dc] sm:$0xf]
    %v486 = vld [vmem:[#allocation4 + $0x3e0] sm:$0xf]
    %v487 = vld [vmem:[#allocation4 + $0x3e4] sm:$0xf]
    %v488 = vld [vmem:[#allocation4 + $0x3e8] sm:$0xf]
    %v489 = vld [vmem:[#allocation4 + $0x3ec] sm:$0xf]
    %v490 = vld [vmem:[#allocation4 + $0x3f0] sm:$0xf]
    %v491 = vld [vmem:[#allocation4 + $0x3f4] sm:$0xf]
    %v492 = vld [vmem:[#allocation4 + $0x3f8] sm:$0xf]
    %v493 = vld [vmem:[#allocation4 + $0x3fc] sm:$0xf]
    %v494 = vld [vmem:[%s5] sm:$0xf]
    %v495 = vld [vmem:[%s5 + $0x4] sm:$0xf]
    %v496 = vld [vmem:[%s5 + $0x8] sm:$0xf]
    %v497 = vld [vmem:[%s5 + $0xc] sm:$0xf]
    %v498 = vld [vmem:[%s5 + $0x10] sm:$0xf]
    %v499 = vld [vmem:[%s5 + $0x14] sm:$0xf]
    %v500 = vld [vmem:[%s5 + $0x18] sm:$0xf]
    %v501 = vld [vmem:[%s5 + $0x1c] sm:$0xf]
    %v502 = vld [vmem:[%s5 + $0x20] sm:$0xf]
    %v503 = vld [vmem:[%s5 + $0x24] sm:$0xf]
    %v504 = vld [vmem:[%s5 + $0x28] sm:$0xf]
    %v505 = vld [vmem:[%s5 + $0x2c] sm:$0xf]
    %v506 = vld [vmem:[%s5 + $0x30] sm:$0xf]
    %v507 = vld [vmem:[%s5 + $0x34] sm:$0xf]
    %v508 = vld [vmem:[%s5 + $0x38] sm:$0xf]
    %v509 = vld [vmem:[%s5 + $0x3c] sm:$0xf]
    %v510 = vld [vmem:[%s6] ss:$8 sm:$0x7]
    %s511 = scalar_lea.vmem %s6, 1
    %v512 = vld [vmem:[%s511] ss:$8 sm:$0xf]
    %v513 = vld [vmem:[%s511] ss:$8 sm:$0xf0]
    %v514 = vor.u32 %v512, %v513
    %s515 = scalar_lea.vmem %s6, 65
    %v516 = vld [vmem:[%s515] ss:$8 sm:$0xf]
    %v517 = vld [vmem:[%s515] ss:$8 sm:$0xf0]
    %v518 = vor.u32 %v516, %v517
    %v519 = vld [vmem:[%s6 + $0x2] ss:$0 sm:$0xff]
    %v520 = vld [vmem:[%s6 + $0x3] ss:$0 sm:$0xff]
    %v521 = vld [vmem:[%s6 + $0x4] ss:$0 sm:$0xff]
    %v522 = vld [vmem:[%s6 + $0x5] ss:$0 sm:$0xff]
    %v523 = vld [vmem:[%s6 + $0x6] ss:$0 sm:$0xff]
    %v524 = vld [vmem:[%s6 + $0x7] ss:$0 sm:$0xff]
    %v526 = vperm.slane %v510, 0
    %v527 = vperm.slane %v510, 1
    %v528 = vperm.slane %v510, 2
    %v534 = vunpack.c.l.b16 %v58
    %v535 = vunpack.c.l.b16 %v59
    %v536 = vpack.c.b16 %v535, %v534
    %v570 = vunpack.c.l.b16 %v62
    %v571 = vunpack.c.h.b16 %v62
    %v572 = vunpack.c.l.b16 %v63
    %v573 = vunpack.c.l.b16 %v64
    %v574 = vunpack.c.h.b16 %v64
    %v575 = vunpack.c.l.b16 %v65
    %v576 = vunpack.c.l.b16 %v66
    %v577 = vunpack.c.h.b16 %v66
    %v578 = vunpack.c.l.b16 %v67
    %v579 = vunpack.c.l.b16 %v68
    %v580 = vunpack.c.h.b16 %v68
    %v581 = vunpack.c.l.b16 %v69
    %v582 = vunpack.c.l.b16 %v70
    %v583 = vunpack.c.h.b16 %v70
    %v584 = vunpack.c.l.b16 %v71
    %v585 = vunpack.c.l.b16 %v72
    %v586 = vunpack.c.h.b16 %v72
    %v587 = vunpack.c.l.b16 %v73
    %v588 = vunpack.c.l.b16 %v74
    %v589 = vunpack.c.h.b16 %v74
    %v590 = vunpack.c.l.b16 %v75
    %v591 = vunpack.c.l.b16 %v76
    %v592 = vunpack.c.h.b16 %v76
    %v593 = vunpack.c.l.b16 %v77
    %v594 = vunpack.c.l.b16 %v78
    %v595 = vunpack.c.h.b16 %v78
    %v596 = vunpack.c.l.b16 %v79
    %v597 = vunpack.c.l.b16 %v80
    %v598 = vunpack.c.h.b16 %v80
    %v599 = vunpack.c.l.b16 %v81
    %v600 = vunpack.c.l.b16 %v82
    %v601 = vunpack.c.h.b16 %v82
    %v602 = vunpack.c.l.b16 %v83
    %v603 = vunpack.c.l.b16 %v84
    %v604 = vunpack.c.h.b16 %v84
    %v605 = vunpack.c.l.b16 %v85
    %v606 = vunpack.c.l.b16 %v86
    %v607 = vunpack.c.h.b16 %v86
    %v608 = vunpack.c.l.b16 %v87
    %v609 = vunpack.c.l.b16 %v88
    %v610 = vunpack.c.h.b16 %v88
    %v611 = vunpack.c.l.b16 %v89
    %v612 = vunpack.c.l.b16 %v90
    %v613 = vunpack.c.h.b16 %v90
    %v614 = vunpack.c.l.b16 %v91
    %v615 = vunpack.c.l.b16 %v92
    %v616 = vunpack.c.h.b16 %v92
    %v617 = vunpack.c.l.b16 %v93
    %v618 = vpack.c.b16 %v573, %v570
    %v619 = vpack.c.b16 %v574, %v571
    %v620 = vpack.c.b16 %v575, %v572
    %v621 = vpack.c.b16 %v579, %v576
    %v622 = vpack.c.b16 %v580, %v577
    %v623 = vpack.c.b16 %v581, %v578
    %v624 = vpack.c.b16 %v585, %v582
    %v625 = vpack.c.b16 %v586, %v583
    %v626 = vpack.c.b16 %v587, %v584
    %v627 = vpack.c.b16 %v591, %v588
    %v628 = vpack.c.b16 %v592, %v589
    %v629 = vpack.c.b16 %v593, %v590
    %v630 = vpack.c.b16 %v597, %v594
    %v631 = vpack.c.b16 %v598, %v595
    %v632 = vpack.c.b16 %v599, %v596
    %v633 = vpack.c.b16 %v603, %v600
    %v634 = vpack.c.b16 %v604, %v601
    %v635 = vpack.c.b16 %v605, %v602
    %v636 = vpack.c.b16 %v609, %v606
    %v637 = vpack.c.b16 %v610, %v607
    %v638 = vpack.c.b16 %v611, %v608
    %v639 = vpack.c.b16 %v615, %v612
    %v640 = vpack.c.b16 %v616, %v613
    %v641 = vpack.c.b16 %v617, %v614
    %666 = vmatpush.bf16.msra.mxu0 %v639
    %667 = vmatpush.bf16.msra.mxu0 %v636
    %668 = vmatpush.bf16.msra.mxu0 %v633
    %669 = vmatpush.bf16.msra.mxu0 %v630
    %670 = vmatpush.bf16.msra.mxu0 %v627
    %671 = vmatpush.bf16.msra.mxu0 %v624
    %672 = vmatpush.bf16.msra.mxu0 %v621
    %673 = vmatpush.bf16.msra.mxu0 %v618
    %674 = vmatmul.bf16.gmra.mxu0 %v536
    %v675 = vpop.f32.mrf.mxu0
    %v676 = vadd.f32 %v526, %v675
    %v677 = vpop.f32.mrf.mxu0
    %v678 = vadd.f32 %v526, %v677
    %679 = vdwg.mxu0
    %680 = vmatpush.bf16.msra.mxu0 %v640
    %681 = vmatpush.bf16.msra.mxu0 %v637
    %682 = vmatpush.bf16.msra.mxu0 %v634
    %683 = vmatpush.bf16.msra.mxu0 %v631
    %684 = vmatpush.bf16.msra.mxu0 %v628
    %685 = vmatpush.bf16.msra.mxu0 %v625
    %686 = vmatpush.bf16.msra.mxu0 %v622
    %687 = vmatpush.bf16.msra.mxu0 %v619
    %688 = vmatmul.bf16.gmra.mxu0 %v536
    %v689 = vpop.f32.mrf.mxu0
    %v690 = vadd.f32 %v527, %v689
    %v691 = vpop.f32.mrf.mxu0
    %v692 = vadd.f32 %v527, %v691
    %693 = vdwg.mxu0
    %694 = vmatpush.bf16.msra.mxu0 %v641
    %695 = vmatpush.bf16.msra.mxu0 %v638
    %696 = vmatpush.bf16.msra.mxu0 %v635
    %697 = vmatpush.bf16.msra.mxu0 %v632
    %698 = vmatpush.bf16.msra.mxu0 %v629
    %699 = vmatpush.bf16.msra.mxu0 %v626
    %700 = vmatpush.bf16.msra.mxu0 %v623
    %701 = vmatpush.bf16.msra.mxu0 %v620
    %702 = vmatmul.bf16.gmra.mxu0 %v536
    %v703 = vpop.f32.mrf.mxu0
    %v704 = vadd.f32 %v528, %v703
    %v705 = vpop.f32.mrf.mxu0
    %v706 = vadd.f32 %v528, %v705
    %707 = vdwg.mxu0
    %v708 = vmul.f32 %v676, 0.17677669
    %v709 = vmul.f32 %v708, %v690
    %v710 = vpack.c.bf16 %v709, %v709
    %v727 = vunpack.c.l.b16 %v494
    %v728 = vunpack.c.l.b16 %v495
    %v729 = vunpack.c.l.b16 %v496
    %v730 = vunpack.c.l.b16 %v497
    %v731 = vunpack.c.l.b16 %v498
    %v732 = vunpack.c.l.b16 %v499
    %v733 = vunpack.c.l.b16 %v500
    %v734 = vunpack.c.l.b16 %v501
    %v735 = vunpack.c.l.b16 %v502
    %v736 = vunpack.c.l.b16 %v503
    %v737 = vunpack.c.l.b16 %v504
    %v738 = vunpack.c.l.b16 %v505
    %v739 = vunpack.c.l.b16 %v506
    %v740 = vunpack.c.l.b16 %v507
    %v741 = vunpack.c.l.b16 %v508
    %v742 = vunpack.c.l.b16 %v509
    %v743 = vpack.c.b16 %v728, %v727
    %v744 = vpack.c.b16 %v730, %v729
    %v745 = vpack.c.b16 %v732, %v731
    %v746 = vpack.c.b16 %v734, %v733
    %v747 = vpack.c.b16 %v736, %v735
    %v748 = vpack.c.b16 %v738, %v737
    %v749 = vpack.c.b16 %v740, %v739
    %v750 = vpack.c.b16 %v742, %v741
    %759 = vmatpush.bf16.msra.mxu0 %v750
    %760 = vmatpush.bf16.msra.mxu0 %v749
    %761 = vmatpush.bf16.msra.mxu0 %v748
    %762 = vmatpush.bf16.msra.mxu0 %v747
    %763 = vmatpush.bf16.msra.mxu0 %v746
    %764 = vmatpush.bf16.msra.mxu0 %v745
    %765 = vmatpush.bf16.msra.mxu0 %v744
    %766 = vmatpush.bf16.msra.mxu0 %v743
    %767 = vmatmul.bf16.gmra.mxu0 %v710
    %v768 = vpop.f32.mrf.mxu0
    %v769 = vadd.f32 0.0, %v768
    %v770 = vpop.f32.mrf.mxu0
    %771 = vdwg.mxu0
    %v772 = vmul.f32 %v708, %v692
    %v773 = vpack.c.bf16 %v772, %v772
    %774 = vmatpush.bf16.msra.mxu0 %v750
    %775 = vmatpush.bf16.msra.mxu0 %v749
    %776 = vmatpush.bf16.msra.mxu0 %v748
    %777 = vmatpush.bf16.msra.mxu0 %v747
    %778 = vmatpush.bf16.msra.mxu0 %v746
    %779 = vmatpush.bf16.msra.mxu0 %v745
    %780 = vmatpush.bf16.msra.mxu0 %v744
    %781 = vmatpush.bf16.msra.mxu0 %v743
    %782 = vmatmul.bf16.gmra.mxu0 %v773
    %v783 = vpop.f32.mrf.mxu0
    %v784 = vadd.f32 0.0, %v783
    %v785 = vpop.f32.mrf.mxu0
    %786 = vdwg.mxu0
    %v787 = vmax.f32 %v769, %v784
    %v788 = vsub.f32 %v769, %v787
    %v789 = vmul.f32 %v788, 1.442695
    %v790 = vpow.pop %v789
    %v791 = vsub.f32 %v784, %v787
    %v792 = vmul.f32 %v791, 1.442695
    %v793 = vpow.pop %v792
    %v794 = vadd.f32 %v790, %v793
    %v795 = vrcp.pop %v794
    %v796 = vmul.f32 %v794, %v795
    %v797 = vsub.f32 1.0, %v796
    %v798 = vmul.f32 %v795, %v797
    %v799 = vadd.f32 %v795, %v798
    %vm800 = vweird.f32 %v794
    %vm801 = vweird.f32 %v795
    %vm802 = vmor %vm800, %vm801
    %v803 = vsel %vm802, %v795, %v799
    %v804 = vand.u32 2147483647, %v794
    %vm805 = vcmp.eq.f32.partialorder %v804, 8.507059e+37
    %v806 = vand.u32 %v794, 2147483648
    %v807 = vor.u32 1.1754944e-38, %v806
    %v808 = vsel %vm805, %v807, %v803
    %v809 = vmul.f32 1.0, %v808
    %v810 = vmul.f32 %v790, %v809
    %v811 = vmul.f32 %v810, %v704
    %v812 = vadd.f32 %v811, 0.0
    %v813 = vmul.f32 %v793, %v809
    %v814 = vmul.f32 %v813, %v706
    %v815 = vadd.f32 %v812, %v814
    %v816 = vmul.f32 %v678, 0.17677669
    %v817 = vmul.f32 %v816, %v690
    %v818 = vpack.c.bf16 %v817, %v817
    %819 = vmatpush.bf16.msra.mxu0 %v750
    %820 = vmatpush.bf16.msra.mxu0 %v749
    %821 = vmatpush.bf16.msra.mxu0 %v748
    %822 = vmatpush.bf16.msra.mxu0 %v747
    %823 = vmatpush.bf16.msra.mxu0 %v746
    %824 = vmatpush.bf16.msra.mxu0 %v745
    %825 = vmatpush.bf16.msra.mxu0 %v744
    %826 = vmatpush.bf16.msra.mxu0 %v743
    %827 = vmatmul.bf16.gmra.mxu0 %v818
    %v828 = vpop.f32.mrf.mxu0
    %v829 = vadd.f32 0.0, %v828
    %v830 = vpop.f32.mrf.mxu0
    %831 = vdwg.mxu0
    %v832 = vmul.f32 %v816, %v692
    %v833 = vpack.c.bf16 %v832, %v832
    %834 = vmatpush.bf16.msra.mxu0 %v750
    %835 = vmatpush.bf16.msra.mxu0 %v749
    %836 = vmatpush.bf16.msra.mxu0 %v748
    %837 = vmatpush.bf16.msra.mxu0 %v747
    %838 = vmatpush.bf16.msra.mxu0 %v746
    %839 = vmatpush.bf16.msra.mxu0 %v745
    %840 = vmatpush.bf16.msra.mxu0 %v744
    %841 = vmatpush.bf16.msra.mxu0 %v743
    %842 = vmatmul.bf16.gmra.mxu0 %v833
    %v843 = vpop.f32.mrf.mxu0
    %v844 = vadd.f32 0.0, %v843
    %v845 = vpop.f32.mrf.mxu0
    %846 = vdwg.mxu0
    %v847 = vmax.f32 %v829, %v844
    %v848 = vsub.f32 %v829, %v847
    %v849 = vmul.f32 %v848, 1.442695
    %v850 = vpow.pop %v849
    %v851 = vsub.f32 %v844, %v847
    %v852 = vmul.f32 %v851, 1.442695
    %v853 = vpow.pop %v852
    %v854 = vadd.f32 %v850, %v853
    %v855 = vrcp.pop %v854
    %v856 = vmul.f32 %v854, %v855
    %v857 = vsub.f32 1.0, %v856
    %v858 = vmul.f32 %v855, %v857
    %v859 = vadd.f32 %v855, %v858
    %vm860 = vweird.f32 %v854
    %vm861 = vweird.f32 %v855
    %vm862 = vmor %vm860, %vm861
    %v863 = vsel %vm862, %v855, %v859
    %v864 = vand.u32 2147483647, %v854
    %vm865 = vcmp.eq.f32.partialorder %v864, 8.507059e+37
    %v866 = vand.u32 %v854, 2147483648
    %v867 = vor.u32 1.1754944e-38, %v866
    %v868 = vsel %vm865, %v867, %v863
    %v869 = vmul.f32 1.0, %v868
    %v870 = vmul.f32 %v850, %v869
    %v871 = vmul.f32 %v870, %v704
    %v872 = vadd.f32 %v871, 0.0
    %v873 = vmul.f32 %v853, %v869
    %v874 = vmul.f32 %v873, %v706
    %v875 = vadd.f32 %v872, %v874
    %v876 = vpack.c.bf16 %v875, %v815
    %v893 = vunpack.c.l.b16 %v94
    %v894 = vunpack.c.l.b16 %v95
    %v895 = vunpack.c.l.b16 %v96
    %v896 = vunpack.c.l.b16 %v97
    %v897 = vunpack.c.l.b16 %v98
    %v898 = vunpack.c.l.b16 %v99
    %v899 = vunpack.c.l.b16 %v100
    %v900 = vunpack.c.l.b16 %v101
    %v901 = vunpack.c.l.b16 %v102
    %v902 = vunpack.c.l.b16 %v103
    %v903 = vunpack.c.l.b16 %v104
    %v904 = vunpack.c.l.b16 %v105
    %v905 = vunpack.c.l.b16 %v106
    %v906 = vunpack.c.l.b16 %v107
    %v907 = vunpack.c.l.b16 %v108
    %v908 = vunpack.c.l.b16 %v109
    %v909 = vpack.c.b16 %v894, %v893
    %v910 = vpack.c.b16 %v896, %v895
    %v911 = vpack.c.b16 %v898, %v897
    %v912 = vpack.c.b16 %v900, %v899
    %v913 = vpack.c.b16 %v902, %v901
    %v914 = vpack.c.b16 %v904, %v903
    %v915 = vpack.c.b16 %v906, %v905
    %v916 = vpack.c.b16 %v908, %v907
    %925 = vmatpush.bf16.msra.mxu0 %v916
    %926 = vmatpush.bf16.msra.mxu0 %v915
    %927 = vmatpush.bf16.msra.mxu0 %v914
    %928 = vmatpush.bf16.msra.mxu0 %v913
    %929 = vmatpush.bf16.msra.mxu0 %v912
    %930 = vmatpush.bf16.msra.mxu0 %v911
    %931 = vmatpush.bf16.msra.mxu0 %v910
    %932 = vmatpush.bf16.msra.mxu0 %v909
    %933 = vmatmul.bf16.gmra.mxu0 %v876
    %v934 = vpop.f32.mrf.mxu0
    %v935 = vadd.f32 %v519, %v934
    %v936 = vpop.f32.mrf.mxu0
    %v937 = vadd.f32 %v519, %v936
    %938 = vdwg.mxu0
    %v939 = vadd.f32 %v60, %v935
    %v940 = vadd.f32 %v61, %v937
    %941 = vadd.xlane.f32.xlu0 %v939
    %v942 = vpop.xlane.xlu0 %941
    %943 = vadd.xlane.f32.xlu0 %v940
    %v944 = vpop.xlane.xlu0 %943
    %v945 = vrcp.pop 128.0
    %v946 = vmul.f32 128.0, %v945
    %v947 = vsub.f32 1.0, %v946
    %v948 = vmul.f32 %v945, %v947
    %v949 = vadd.f32 %v945, %v948
    %vm950 = vweird.f32 %v945
    %v951 = vsel %vm950, %v945, %v949
    %v952 = vmul.f32 %v942, %v951
    %v953 = vmul.f32 %v944, %v951
    %v954 = vsub.f32 %v939, %v952
    %v955 = vsub.f32 %v940, %v953
    %v956 = vmul.f32 %v954, %v954
    %v957 = vmul.f32 %v955, %v955
    %958 = vadd.xlane.f32.xlu0 %v956
    %v959 = vpop.xlane.xlu0 %958
    %960 = vadd.xlane.f32.xlu0 %v957
    %v961 = vpop.xlane.xlu0 %960
    %v962 = vmul.f32 %v959, %v951
    %v963 = vmul.f32 %v961, %v951
    %v964 = vadd.f32 %v962, 1e-05
    %v965 = vadd.f32 %v963, 1e-05
    %v966 = vrsqrt.pop %v964
    %v967 = vmul.f32 %v966, %v964
    %v968 = vmul.f32 %v967, %v966
    %v969 = vmul.f32 0.5, %v968
    %v970 = vsub.f32 1.5, %v969
    %v971 = vmul.f32 %v966, %v970
    %vm972 = vweird.f32 %v964
    %vm973 = vweird.f32 %v966
    %vm974 = vmor %vm972, %vm973
    %v975 = vsel %vm974, %v966, %v971
    %v976 = vrsqrt.pop %v965
    %v977 = vmul.f32 %v976, %v965
    %v978 = vmul.f32 %v977, %v976
    %v979 = vmul.f32 0.5, %v978
    %v980 = vsub.f32 1.5, %v979
    %v981 = vmul.f32 %v976, %v980
    %vm982 = vweird.f32 %v965
    %vm983 = vweird.f32 %v976
    %vm984 = vmor %vm982, %vm983
    %v985 = vsel %vm984, %v976, %v981
    %v986 = vmul.f32 %v954, %v975
    %v987 = vmul.f32 %v955, %v985
    %v988 = vmul.f32 %v986, %v521
    %v989 = vmul.f32 %v987, %v521
    %v990 = vadd.f32 %v988, %v522
    %v991 = vadd.f32 %v989, %v522
    %v992 = vpack.c.bf16 %v991, %v990
    %v995 = vperm.slane %v514, 0
    %v996 = vperm.slane %v514, 1
    %v997 = vperm.slane %v514, 2
    %v998 = vperm.slane %v514, 3
    %v999 = vperm.slane %v514, 4
    %v1000 = vperm.slane %v514, 5
    %v1001 = vperm.slane %v514, 6
    %v1002 = vperm.slane %v514, 7
    %v1003 = vperm.slane %v518, 0
    %v1004 = vperm.slane %v518, 1
    %v1005 = vperm.slane %v518, 2
    %v1006 = vperm.slane %v518, 3
    %v1007 = vperm.slane %v518, 4
    %v1008 = vperm.slane %v518, 5
    %v1009 = vperm.slane %v518, 6
    %v1010 = vperm.slane %v518, 7
    %v1155 = vunpack.c.l.b16 %v110
    %v1156 = vunpack.c.h.b16 %v110
    %v1157 = vunpack.c.l.b16 %v111
    %v1158 = vunpack.c.h.b16 %v111
    %v1159 = vunpack.c.l.b16 %v112
    %v1160 = vunpack.c.h.b16 %v112
    %v1161 = vunpack.c.l.b16 %v113
    %v1162 = vunpack.c.h.b16 %v113
    %v1163 = vunpack.c.l.b16 %v114
    %v1164 = vunpack.c.h.b16 %v114
    %v1165 = vunpack.c.l.b16 %v115
    %v1166 = vunpack.c.h.b16 %v115
    %v1167 = vunpack.c.l.b16 %v116
    %v1168 = vunpack.c.h.b16 %v116
    %v1169 = vunpack.c.l.b16 %v117
    %v1170 = vunpack.c.h.b16 %v117
    %v1171 = vunpack.c.l.b16 %v118
    %v1172 = vunpack.c.h.b16 %v118
    %v1173 = vunpack.c.l.b16 %v119
    %v1174 = vunpack.c.h.b16 %v119
    %v1175 = vunpack.c.l.b16 %v120
    %v1176 = vunpack.c.h.b16 %v120
    %v1177 = vunpack.c.l.b16 %v121
    %v1178 = vunpack.c.h.b16 %v121
    %v1179 = vunpack.c.l.b16 %v122
    %v1180 = vunpack.c.h.b16 %v122
    %v1181 = vunpack.c.l.b16 %v123
    %v1182 = vunpack.c.h.b16 %v123
    %v1183 = vunpack.c.l.b16 %v124
    %v1184 = vunpack.c.h.b16 %v124
    %v1185 = vunpack.c.l.b16 %v125
    %v1186 = vunpack.c.h.b16 %v125
    %v1187 = vunpack.c.l.b16 %v126
    %v1188 = vunpack.c.h.b16 %v126
    %v1189 = vunpack.c.l.b16 %v127
    %v1190 = vunpack.c.h.b16 %v127
    %v1191 = vunpack.c.l.b16 %v128
    %v1192 = vunpack.c.h.b16 %v128
    %v1193 = vunpack.c.l.b16 %v129
    %v1194 = vunpack.c.h.b16 %v129
    %v1195 = vunpack.c.l.b16 %v130
    %v1196 = vunpack.c.h.b16 %v130
    %v1197 = vunpack.c.l.b16 %v131
    %v1198 = vunpack.c.h.b16 %v131
    %v1199 = vunpack.c.l.b16 %v132
    %v1200 = vunpack.c.h.b16 %v132
    %v1201 = vunpack.c.l.b16 %v133
    %v1202 = vunpack.c.h.b16 %v133
    %v1203 = vunpack.c.l.b16 %v134
    %v1204 = vunpack.c.h.b16 %v134
    %v1205 = vunpack.c.l.b16 %v135
    %v1206 = vunpack.c.h.b16 %v135
    %v1207 = vunpack.c.l.b16 %v136
    %v1208 = vunpack.c.h.b16 %v136
    %v1209 = vunpack.c.l.b16 %v137
    %v1210 = vunpack.c.h.b16 %v137
    %v1211 = vunpack.c.l.b16 %v138
    %v1212 = vunpack.c.h.b16 %v138
    %v1213 = vunpack.c.l.b16 %v139
    %v1214 = vunpack.c.h.b16 %v139
    %v1215 = vunpack.c.l.b16 %v140
    %v1216 = vunpack.c.h.b16 %v140
    %v1217 = vunpack.c.l.b16 %v141
    %v1218 = vunpack.c.h.b16 %v141
    %v1219 = vunpack.c.l.b16 %v142
    %v1220 = vunpack.c.h.b16 %v142
    %v1221 = vunpack.c.l.b16 %v143
    %v1222 = vunpack.c.h.b16 %v143
    %v1223 = vunpack.c.l.b16 %v144
    %v1224 = vunpack.c.h.b16 %v144
    %v1225 = vunpack.c.l.b16 %v145
    %v1226 = vunpack.c.h.b16 %v145
    %v1227 = vunpack.c.l.b16 %v146
    %v1228 = vunpack.c.h.b16 %v146
    %v1229 = vunpack.c.l.b16 %v147
    %v1230 = vunpack.c.h.b16 %v147
    %v1231 = vunpack.c.l.b16 %v148
    %v1232 = vunpack.c.h.b16 %v148
    %v1233 = vunpack.c.l.b16 %v149
    %v1234 = vunpack.c.h.b16 %v149
    %v1235 = vunpack.c.l.b16 %v150
    %v1236 = vunpack.c.h.b16 %v150
    %v1237 = vunpack.c.l.b16 %v151
    %v1238 = vunpack.c.h.b16 %v151
    %v1239 = vunpack.c.l.b16 %v152
    %v1240 = vunpack.c.h.b16 %v152
    %v1241 = vunpack.c.l.b16 %v153
    %v1242 = vunpack.c.h.b16 %v153
    %v1243 = vunpack.c.l.b16 %v154
    %v1244 = vunpack.c.h.b16 %v154
    %v1245 = vunpack.c.l.b16 %v155
    %v1246 = vunpack.c.h.b16 %v155
    %v1247 = vunpack.c.l.b16 %v156
    %v1248 = vunpack.c.h.b16 %v156
    %v1249 = vunpack.c.l.b16 %v157
    %v1250 = vunpack.c.h.b16 %v157
    %v1251 = vunpack.c.l.b16 %v158
    %v1252 = vunpack.c.h.b16 %v158
    %v1253 = vunpack.c.l.b16 %v159
    %v1254 = vunpack.c.h.b16 %v159
    %v1255 = vunpack.c.l.b16 %v160
    %v1256 = vunpack.c.h.b16 %v160
    %v1257 = vunpack.c.l.b16 %v161
    %v1258 = vunpack.c.h.b16 %v161
    %v1259 = vunpack.c.l.b16 %v162
    %v1260 = vunpack.c.h.b16 %v162
    %v1261 = vunpack.c.l.b16 %v163
    %v1262 = vunpack.c.h.b16 %v163
    %v1263 = vunpack.c.l.b16 %v164
    %v1264 = vunpack.c.h.b16 %v164
    %v1265 = vunpack.c.l.b16 %v165
    %v1266 = vunpack.c.h.b16 %v165
    %v1267 = vunpack.c.l.b16 %v166
    %v1268 = vunpack.c.h.b16 %v166
    %v1269 = vunpack.c.l.b16 %v167
    %v1270 = vunpack.c.h.b16 %v167
    %v1271 = vunpack.c.l.b16 %v168
    %v1272 = vunpack.c.h.b16 %v168
    %v1273 = vunpack.c.l.b16 %v169
    %v1274 = vunpack.c.h.b16 %v169
    %v1275 = vunpack.c.l.b16 %v170
    %v1276 = vunpack.c.h.b16 %v170
    %v1277 = vunpack.c.l.b16 %v171
    %v1278 = vunpack.c.h.b16 %v171
    %v1279 = vunpack.c.l.b16 %v172
    %v1280 = vunpack.c.h.b16 %v172
    %v1281 = vunpack.c.l.b16 %v173
    %v1282 = vunpack.c.h.b16 %v173
    %v1283 = vunpack.c.l.b16 %v174
    %v1284 = vunpack.c.h.b16 %v174
    %v1285 = vunpack.c.l.b16 %v175
    %v1286 = vunpack.c.h.b16 %v175
    %v1287 = vunpack.c.l.b16 %v176
    %v1288 = vunpack.c.h.b16 %v176
    %v1289 = vunpack.c.l.b16 %v177
    %v1290 = vunpack.c.h.b16 %v177
    %v1291 = vunpack.c.l.b16 %v178
    %v1292 = vunpack.c.h.b16 %v178
    %v1293 = vunpack.c.l.b16 %v179
    %v1294 = vunpack.c.h.b16 %v179
    %v1295 = vunpack.c.l.b16 %v180
    %v1296 = vunpack.c.h.b16 %v180
    %v1297 = vunpack.c.l.b16 %v181
    %v1298 = vunpack.c.h.b16 %v181
    %v1299 = vunpack.c.l.b16 %v182
    %v1300 = vunpack.c.h.b16 %v182
    %v1301 = vunpack.c.l.b16 %v183
    %v1302 = vunpack.c.h.b16 %v183
    %v1303 = vunpack.c.l.b16 %v184
    %v1304 = vunpack.c.h.b16 %v184
    %v1305 = vunpack.c.l.b16 %v185
    %v1306 = vunpack.c.h.b16 %v185
    %v1307 = vunpack.c.l.b16 %v186
    %v1308 = vunpack.c.h.b16 %v186
    %v1309 = vunpack.c.l.b16 %v187
    %v1310 = vunpack.c.h.b16 %v187
    %v1311 = vunpack.c.l.b16 %v188
    %v1312 = vunpack.c.h.b16 %v188
    %v1313 = vunpack.c.l.b16 %v189
    %v1314 = vunpack.c.h.b16 %v189
    %v1315 = vunpack.c.l.b16 %v190
    %v1316 = vunpack.c.h.b16 %v190
    %v1317 = vunpack.c.l.b16 %v191
    %v1318 = vunpack.c.h.b16 %v191
    %v1319 = vunpack.c.l.b16 %v192
    %v1320 = vunpack.c.h.b16 %v192
    %v1321 = vunpack.c.l.b16 %v193
    %v1322 = vunpack.c.h.b16 %v193
    %v1323 = vunpack.c.l.b16 %v194
    %v1324 = vunpack.c.h.b16 %v194
    %v1325 = vunpack.c.l.b16 %v195
    %v1326 = vunpack.c.h.b16 %v195
    %v1327 = vunpack.c.l.b16 %v196
    %v1328 = vunpack.c.h.b16 %v196
    %v1329 = vunpack.c.l.b16 %v197
    %v1330 = vunpack.c.h.b16 %v197
    %v1331 = vunpack.c.l.b16 %v198
    %v1332 = vunpack.c.h.b16 %v198
    %v1333 = vunpack.c.l.b16 %v199
    %v1334 = vunpack.c.h.b16 %v199
    %v1335 = vunpack.c.l.b16 %v200
    %v1336 = vunpack.c.h.b16 %v200
    %v1337 = vunpack.c.l.b16 %v201
    %v1338 = vunpack.c.h.b16 %v201
    %v1339 = vunpack.c.l.b16 %v202
    %v1340 = vunpack.c.h.b16 %v202
    %v1341 = vunpack.c.l.b16 %v203
    %v1342 = vunpack.c.h.b16 %v203
    %v1343 = vunpack.c.l.b16 %v204
    %v1344 = vunpack.c.h.b16 %v204
    %v1345 = vunpack.c.l.b16 %v205
    %v1346 = vunpack.c.h.b16 %v205
    %v1347 = vunpack.c.l.b16 %v206
    %v1348 = vunpack.c.h.b16 %v206
    %v1349 = vunpack.c.l.b16 %v207
    %v1350 = vunpack.c.h.b16 %v207
    %v1351 = vunpack.c.l.b16 %v208
    %v1352 = vunpack.c.h.b16 %v208
    %v1353 = vunpack.c.l.b16 %v209
    %v1354 = vunpack.c.h.b16 %v209
    %v1355 = vunpack.c.l.b16 %v210
    %v1356 = vunpack.c.h.b16 %v210
    %v1357 = vunpack.c.l.b16 %v211
    %v1358 = vunpack.c.h.b16 %v211
    %v1359 = vunpack.c.l.b16 %v212
    %v1360 = vunpack.c.h.b16 %v212
    %v1361 = vunpack.c.l.b16 %v213
    %v1362 = vunpack.c.h.b16 %v213
    %v1363 = vunpack.c.l.b16 %v214
    %v1364 = vunpack.c.h.b16 %v214
    %v1365 = vunpack.c.l.b16 %v215
    %v1366 = vunpack.c.h.b16 %v215
    %v1367 = vunpack.c.l.b16 %v216
    %v1368 = vunpack.c.h.b16 %v216
    %v1369 = vunpack.c.l.b16 %v217
    %v1370 = vunpack.c.h.b16 %v217
    %v1371 = vunpack.c.l.b16 %v218
    %v1372 = vunpack.c.h.b16 %v218
    %v1373 = vunpack.c.l.b16 %v219
    %v1374 = vunpack.c.h.b16 %v219
    %v1375 = vunpack.c.l.b16 %v220
    %v1376 = vunpack.c.h.b16 %v220
    %v1377 = vunpack.c.l.b16 %v221
    %v1378 = vunpack.c.h.b16 %v221
    %v1379 = vunpack.c.l.b16 %v222
    %v1380 = vunpack.c.h.b16 %v222
    %v1381 = vunpack.c.l.b16 %v223
    %v1382 = vunpack.c.h.b16 %v223
    %v1383 = vunpack.c.l.b16 %v224
    %v1384 = vunpack.c.h.b16 %v224
    %v1385 = vunpack.c.l.b16 %v225
    %v1386 = vunpack.c.h.b16 %v225
    %v1387 = vunpack.c.l.b16 %v226
    %v1388 = vunpack.c.h.b16 %v226
    %v1389 = vunpack.c.l.b16 %v227
    %v1390 = vunpack.c.h.b16 %v227
    %v1391 = vunpack.c.l.b16 %v228
    %v1392 = vunpack.c.h.b16 %v228
    %v1393 = vunpack.c.l.b16 %v229
    %v1394 = vunpack.c.h.b16 %v229
    %v1395 = vunpack.c.l.b16 %v230
    %v1396 = vunpack.c.h.b16 %v230
    %v1397 = vunpack.c.l.b16 %v231
    %v1398 = vunpack.c.h.b16 %v231
    %v1399 = vunpack.c.l.b16 %v232
    %v1400 = vunpack.c.h.b16 %v232
    %v1401 = vunpack.c.l.b16 %v233
    %v1402 = vunpack.c.h.b16 %v233
    %v1403 = vunpack.c.l.b16 %v234
    %v1404 = vunpack.c.h.b16 %v234
    %v1405 = vunpack.c.l.b16 %v235
    %v1406 = vunpack.c.h.b16 %v235
    %v1407 = vunpack.c.l.b16 %v236
    %v1408 = vunpack.c.h.b16 %v236
    %v1409 = vunpack.c.l.b16 %v237
    %v1410 = vunpack.c.h.b16 %v237
    %v1411 = vpack.c.b16 %v1171, %v1155
    %v1412 = vpack.c.b16 %v1172, %v1156
    %v1413 = vpack.c.b16 %v1173, %v1157
    %v1414 = vpack.c.b16 %v1174, %v1158
    %v1415 = vpack.c.b16 %v1175, %v1159
    %v1416 = vpack.c.b16 %v1176, %v1160
    %v1417 = vpack.c.b16 %v1177, %v1161
    %v1418 = vpack.c.b16 %v1178, %v1162
    %v1419 = vpack.c.b16 %v1179, %v1163
    %v1420 = vpack.c.b16 %v1180, %v1164
    %v1421 = vpack.c.b16 %v1181, %v1165
    %v1422 = vpack.c.b16 %v1182, %v1166
    %v1423 = vpack.c.b16 %v1183, %v1167
    %v1424 = vpack.c.b16 %v1184, %v1168
    %v1425 = vpack.c.b16 %v1185, %v1169
    %v1426 = vpack.c.b16 %v1186, %v1170
    %v1427 = vpack.c.b16 %v1203, %v1187
    %v1428 = vpack.c.b16 %v1204, %v1188
    %v1429 = vpack.c.b16 %v1205, %v1189
    %v1430 = vpack.c.b16 %v1206, %v1190
    %v1431 = vpack.c.b16 %v1207, %v1191
    %v1432 = vpack.c.b16 %v1208, %v1192
    %v1433 = vpack.c.b16 %v1209, %v1193
    %v1434 = vpack.c.b16 %v1210, %v1194
    %v1435 = vpack.c.b16 %v1211, %v1195
    %v1436 = vpack.c.b16 %v1212, %v1196
    %v1437 = vpack.c.b16 %v1213, %v1197
    %v1438 = vpack.c.b16 %v1214, %v1198
    %v1439 = vpack.c.b16 %v1215, %v1199
    %v1440 = vpack.c.b16 %v1216, %v1200
    %v1441 = vpack.c.b16 %v1217, %v1201
    %v1442 = vpack.c.b16 %v1218, %v1202
    %v1443 = vpack.c.b16 %v1235, %v1219
    %v1444 = vpack.c.b16 %v1236, %v1220
    %v1445 = vpack.c.b16 %v1237, %v1221
    %v1446 = vpack.c.b16 %v1238, %v1222
    %v1447 = vpack.c.b16 %v1239, %v1223
    %v1448 = vpack.c.b16 %v1240, %v1224
    %v1449 = vpack.c.b16 %v1241, %v1225
    %v1450 = vpack.c.b16 %v1242, %v1226
    %v1451 = vpack.c.b16 %v1243, %v1227
    %v1452 = vpack.c.b16 %v1244, %v1228
    %v1453 = vpack.c.b16 %v1245, %v1229
    %v1454 = vpack.c.b16 %v1246, %v1230
    %v1455 = vpack.c.b16 %v1247, %v1231
    %v1456 = vpack.c.b16 %v1248, %v1232
    %v1457 = vpack.c.b16 %v1249, %v1233
    %v1458 = vpack.c.b16 %v1250, %v1234
    %v1459 = vpack.c.b16 %v1267, %v1251
    %v1460 = vpack.c.b16 %v1268, %v1252
    %v1461 = vpack.c.b16 %v1269, %v1253
    %v1462 = vpack.c.b16 %v1270, %v1254
    %v1463 = vpack.c.b16 %v1271, %v1255
    %v1464 = vpack.c.b16 %v1272, %v1256
    %v1465 = vpack.c.b16 %v1273, %v1257
    %v1466 = vpack.c.b16 %v1274, %v1258
    %v1467 = vpack.c.b16 %v1275, %v1259
    %v1468 = vpack.c.b16 %v1276, %v1260
    %v1469 = vpack.c.b16 %v1277, %v1261
    %v1470 = vpack.c.b16 %v1278, %v1262
    %v1471 = vpack.c.b16 %v1279, %v1263
    %v1472 = vpack.c.b16 %v1280, %v1264
    %v1473 = vpack.c.b16 %v1281, %v1265
    %v1474 = vpack.c.b16 %v1282, %v1266
    %v1475 = vpack.c.b16 %v1299, %v1283
    %v1476 = vpack.c.b16 %v1300, %v1284
    %v1477 = vpack.c.b16 %v1301, %v1285
    %v1478 = vpack.c.b16 %v1302, %v1286
    %v1479 = vpack.c.b16 %v1303, %v1287
    %v1480 = vpack.c.b16 %v1304, %v1288
    %v1481 = vpack.c.b16 %v1305, %v1289
    %v1482 = vpack.c.b16 %v1306, %v1290
    %v1483 = vpack.c.b16 %v1307, %v1291
    %v1484 = vpack.c.b16 %v1308, %v1292
    %v1485 = vpack.c.b16 %v1309, %v1293
    %v1486 = vpack.c.b16 %v1310, %v1294
    %v1487 = vpack.c.b16 %v1311, %v1295
    %v1488 = vpack.c.b16 %v1312, %v1296
    %v1489 = vpack.c.b16 %v1313, %v1297
    %v1490 = vpack.c.b16 %v1314, %v1298
    %v1491 = vpack.c.b16 %v1331, %v1315
    %v1492 = vpack.c.b16 %v1332, %v1316
    %v1493 = vpack.c.b16 %v1333, %v1317
    %v1494 = vpack.c.b16 %v1334, %v1318
    %v1495 = vpack.c.b16 %v1335, %v1319
    %v1496 = vpack.c.b16 %v1336, %v1320
    %v1497 = vpack.c.b16 %v1337, %v1321
    %v1498 = vpack.c.b16 %v1338, %v1322
    %v1499 = vpack.c.b16 %v1339, %v1323
    %v1500 = vpack.c.b16 %v1340, %v1324
    %v1501 = vpack.c.b16 %v1341, %v1325
    %v1502 = vpack.c.b16 %v1342, %v1326
    %v1503 = vpack.c.b16 %v1343, %v1327
    %v1504 = vpack.c.b16 %v1344, %v1328
    %v1505 = vpack.c.b16 %v1345, %v1329
    %v1506 = vpack.c.b16 %v1346, %v1330
    %v1507 = vpack.c.b16 %v1363, %v1347
    %v1508 = vpack.c.b16 %v1364, %v1348
    %v1509 = vpack.c.b16 %v1365, %v1349
    %v1510 = vpack.c.b16 %v1366, %v1350
    %v1511 = vpack.c.b16 %v1367, %v1351
    %v1512 = vpack.c.b16 %v1368, %v1352
    %v1513 = vpack.c.b16 %v1369, %v1353
    %v1514 = vpack.c.b16 %v1370, %v1354
    %v1515 = vpack.c.b16 %v1371, %v1355
    %v1516 = vpack.c.b16 %v1372, %v1356
    %v1517 = vpack.c.b16 %v1373, %v1357
    %v1518 = vpack.c.b16 %v1374, %v1358
    %v1519 = vpack.c.b16 %v1375, %v1359
    %v1520 = vpack.c.b16 %v1376, %v1360
    %v1521 = vpack.c.b16 %v1377, %v1361
    %v1522 = vpack.c.b16 %v1378, %v1362
    %v1523 = vpack.c.b16 %v1395, %v1379
    %v1524 = vpack.c.b16 %v1396, %v1380
    %v1525 = vpack.c.b16 %v1397, %v1381
    %v1526 = vpack.c.b16 %v1398, %v1382
    %v1527 = vpack.c.b16 %v1399, %v1383
    %v1528 = vpack.c.b16 %v1400, %v1384
    %v1529 = vpack.c.b16 %v1401, %v1385
    %v1530 = vpack.c.b16 %v1402, %v1386
    %v1531 = vpack.c.b16 %v1403, %v1387
    %v1532 = vpack.c.b16 %v1404, %v1388
    %v1533 = vpack.c.b16 %v1405, %v1389
    %v1534 = vpack.c.b16 %v1406, %v1390
    %v1535 = vpack.c.b16 %v1407, %v1391
    %v1536 = vpack.c.b16 %v1408, %v1392
    %v1537 = vpack.c.b16 %v1409, %v1393
    %v1538 = vpack.c.b16 %v1410, %v1394
    %1667 = vmatpush.bf16.msra.mxu0 %v1523
    %1668 = vmatpush.bf16.msra.mxu0 %v1507
    %1669 = vmatpush.bf16.msra.mxu0 %v1491
    %1670 = vmatpush.bf16.msra.mxu0 %v1475
    %1671 = vmatpush.bf16.msra.mxu0 %v1459
    %1672 = vmatpush.bf16.msra.mxu0 %v1443
    %1673 = vmatpush.bf16.msra.mxu0 %v1427
    %1674 = vmatpush.bf16.msra.mxu0 %v1411
    %1675 = vmatmul.bf16.gmra.mxu0 %v992
    %v1676 = vpop.f32.mrf.mxu0
    %v1677 = vadd.f32 %v995, %v1676
    %v1678 = vpop.f32.mrf.mxu0
    %v1679 = vadd.f32 %v995, %v1678
    %1680 = vdwg.mxu0
    %1681 = vmatpush.bf16.msra.mxu0 %v1524
    %1682 = vmatpush.bf16.msra.mxu0 %v1508
    %1683 = vmatpush.bf16.msra.mxu0 %v1492
    %1684 = vmatpush.bf16.msra.mxu0 %v1476
    %1685 = vmatpush.bf16.msra.mxu0 %v1460
    %1686 = vmatpush.bf16.msra.mxu0 %v1444
    %1687 = vmatpush.bf16.msra.mxu0 %v1428
    %1688 = vmatpush.bf16.msra.mxu0 %v1412
    %1689 = vmatmul.bf16.gmra.mxu0 %v992
    %v1690 = vpop.f32.mrf.mxu0
    %v1691 = vadd.f32 %v996, %v1690
    %v1692 = vpop.f32.mrf.mxu0
    %v1693 = vadd.f32 %v996, %v1692
    %1694 = vdwg.mxu0
    %1695 = vmatpush.bf16.msra.mxu0 %v1525
    %1696 = vmatpush.bf16.msra.mxu0 %v1509
    %1697 = vmatpush.bf16.msra.mxu0 %v1493
    %1698 = vmatpush.bf16.msra.mxu0 %v1477
    %1699 = vmatpush.bf16.msra.mxu0 %v1461
    %1700 = vmatpush.bf16.msra.mxu0 %v1445
    %1701 = vmatpush.bf16.msra.mxu0 %v1429
    %1702 = vmatpush.bf16.msra.mxu0 %v1413
    %1703 = vmatmul.bf16.gmra.mxu0 %v992
    %v1704 = vpop.f32.mrf.mxu0
    %v1705 = vadd.f32 %v997, %v1704
    %v1706 = vpop.f32.mrf.mxu0
    %v1707 = vadd.f32 %v997, %v1706
    %1708 = vdwg.mxu0
    %1709 = vmatpush.bf16.msra.mxu0 %v1526
    %1710 = vmatpush.bf16.msra.mxu0 %v1510
    %1711 = vmatpush.bf16.msra.mxu0 %v1494
    %1712 = vmatpush.bf16.msra.mxu0 %v1478
    %1713 = vmatpush.bf16.msra.mxu0 %v1462
    %1714 = vmatpush.bf16.msra.mxu0 %v1446
    %1715 = vmatpush.bf16.msra.mxu0 %v1430
    %1716 = vmatpush.bf16.msra.mxu0 %v1414
    %1717 = vmatmul.bf16.gmra.mxu0 %v992
    %v1718 = vpop.f32.mrf.mxu0
    %v1719 = vadd.f32 %v998, %v1718
    %v1720 = vpop.f32.mrf.mxu0
    %v1721 = vadd.f32 %v998, %v1720
    %1722 = vdwg.mxu0
    %1723 = vmatpush.bf16.msra.mxu0 %v1527
    %1724 = vmatpush.bf16.msra.mxu0 %v1511
    %1725 = vmatpush.bf16.msra.mxu0 %v1495
    %1726 = vmatpush.bf16.msra.mxu0 %v1479
    %1727 = vmatpush.bf16.msra.mxu0 %v1463
    %1728 = vmatpush.bf16.msra.mxu0 %v1447
    %1729 = vmatpush.bf16.msra.mxu0 %v1431
    %1730 = vmatpush.bf16.msra.mxu0 %v1415
    %1731 = vmatmul.bf16.gmra.mxu0 %v992
    %v1732 = vpop.f32.mrf.mxu0
    %v1733 = vadd.f32 %v999, %v1732
    %v1734 = vpop.f32.mrf.mxu0
    %v1735 = vadd.f32 %v999, %v1734
    %1736 = vdwg.mxu0
    %1737 = vmatpush.bf16.msra.mxu0 %v1528
    %1738 = vmatpush.bf16.msra.mxu0 %v1512
    %1739 = vmatpush.bf16.msra.mxu0 %v1496
    %1740 = vmatpush.bf16.msra.mxu0 %v1480
    %1741 = vmatpush.bf16.msra.mxu0 %v1464
    %1742 = vmatpush.bf16.msra.mxu0 %v1448
    %1743 = vmatpush.bf16.msra.mxu0 %v1432
    %1744 = vmatpush.bf16.msra.mxu0 %v1416
    %1745 = vmatmul.bf16.gmra.mxu0 %v992
    %v1746 = vpop.f32.mrf.mxu0
    %v1747 = vadd.f32 %v1000, %v1746
    %v1748 = vpop.f32.mrf.mxu0
    %v1749 = vadd.f32 %v1000, %v1748
    %1750 = vdwg.mxu0
    %1751 = vmatpush.bf16.msra.mxu0 %v1529
    %1752 = vmatpush.bf16.msra.mxu0 %v1513
    %1753 = vmatpush.bf16.msra.mxu0 %v1497
    %1754 = vmatpush.bf16.msra.mxu0 %v1481
    %1755 = vmatpush.bf16.msra.mxu0 %v1465
    %1756 = vmatpush.bf16.msra.mxu0 %v1449
    %1757 = vmatpush.bf16.msra.mxu0 %v1433
    %1758 = vmatpush.bf16.msra.mxu0 %v1417
    %1759 = vmatmul.bf16.gmra.mxu0 %v992
    %v1760 = vpop.f32.mrf.mxu0
    %v1761 = vadd.f32 %v1001, %v1760
    %v1762 = vpop.f32.mrf.mxu0
    %v1763 = vadd.f32 %v1001, %v1762
    %1764 = vdwg.mxu0
    %1765 = vmatpush.bf16.msra.mxu0 %v1530
    %1766 = vmatpush.bf16.msra.mxu0 %v1514
    %1767 = vmatpush.bf16.msra.mxu0 %v1498
    %1768 = vmatpush.bf16.msra.mxu0 %v1482
    %1769 = vmatpush.bf16.msra.mxu0 %v1466
    %1770 = vmatpush.bf16.msra.mxu0 %v1450
    %1771 = vmatpush.bf16.msra.mxu0 %v1434
    %1772 = vmatpush.bf16.msra.mxu0 %v1418
    %1773 = vmatmul.bf16.gmra.mxu0 %v992
    %v1774 = vpop.f32.mrf.mxu0
    %v1775 = vadd.f32 %v1002, %v1774
    %v1776 = vpop.f32.mrf.mxu0
    %v1777 = vadd.f32 %v1002, %v1776
    %1778 = vdwg.mxu0
    %1779 = vmatpush.bf16.msra.mxu0 %v1531
    %1780 = vmatpush.bf16.msra.mxu0 %v1515
    %1781 = vmatpush.bf16.msra.mxu0 %v1499
    %1782 = vmatpush.bf16.msra.mxu0 %v1483
    %1783 = vmatpush.bf16.msra.mxu0 %v1467
    %1784 = vmatpush.bf16.msra.mxu0 %v1451
    %1785 = vmatpush.bf16.msra.mxu0 %v1435
    %1786 = vmatpush.bf16.msra.mxu0 %v1419
    %1787 = vmatmul.bf16.gmra.mxu0 %v992
    %v1788 = vpop.f32.mrf.mxu0
    %v1789 = vadd.f32 %v1003, %v1788
    %v1790 = vpop.f32.mrf.mxu0
    %v1791 = vadd.f32 %v1003, %v1790
    %1792 = vdwg.mxu0
    %1793 = vmatpush.bf16.msra.mxu0 %v1532
    %1794 = vmatpush.bf16.msra.mxu0 %v1516
    %1795 = vmatpush.bf16.msra.mxu0 %v1500
    %1796 = vmatpush.bf16.msra.mxu0 %v1484
    %1797 = vmatpush.bf16.msra.mxu0 %v1468
    %1798 = vmatpush.bf16.msra.mxu0 %v1452
    %1799 = vmatpush.bf16.msra.mxu0 %v1436
    %1800 = vmatpush.bf16.msra.mxu0 %v1420
    %1801 = vmatmul.bf16.gmra.mxu0 %v992
    %v1802 = vpop.f32.mrf.mxu0
    %v1803 = vadd.f32 %v1004, %v1802
    %v1804 = vpop.f32.mrf.mxu0
    %v1805 = vadd.f32 %v1004, %v1804
    %1806 = vdwg.mxu0
    %1807 = vmatpush.bf16.msra.mxu0 %v1533
    %1808 = vmatpush.bf16.msra.mxu0 %v1517
    %1809 = vmatpush.bf16.msra.mxu0 %v1501
    %1810 = vmatpush.bf16.msra.mxu0 %v1485
    %1811 = vmatpush.bf16.msra.mxu0 %v1469
    %1812 = vmatpush.bf16.msra.mxu0 %v1453
    %1813 = vmatpush.bf16.msra.mxu0 %v1437
    %1814 = vmatpush.bf16.msra.mxu0 %v1421
    %1815 = vmatmul.bf16.gmra.mxu0 %v992
    %v1816 = vpop.f32.mrf.mxu0
    %v1817 = vadd.f32 %v1005, %v1816
    %v1818 = vpop.f32.mrf.mxu0
    %v1819 = vadd.f32 %v1005, %v1818
    %1820 = vdwg.mxu0
    %1821 = vmatpush.bf16.msra.mxu0 %v1534
    %1822 = vmatpush.bf16.msra.mxu0 %v1518
    %1823 = vmatpush.bf16.msra.mxu0 %v1502
    %1824 = vmatpush.bf16.msra.mxu0 %v1486
    %1825 = vmatpush.bf16.msra.mxu0 %v1470
    %1826 = vmatpush.bf16.msra.mxu0 %v1454
    %1827 = vmatpush.bf16.msra.mxu0 %v1438
    %1828 = vmatpush.bf16.msra.mxu0 %v1422
    %1829 = vmatmul.bf16.gmra.mxu0 %v992
    %v1830 = vpop.f32.mrf.mxu0
    %v1831 = vadd.f32 %v1006, %v1830
    %v1832 = vpop.f32.mrf.mxu0
    %v1833 = vadd.f32 %v1006, %v1832
    %1834 = vdwg.mxu0
    %1835 = vmatpush.bf16.msra.mxu0 %v1535
    %1836 = vmatpush.bf16.msra.mxu0 %v1519
    %1837 = vmatpush.bf16.msra.mxu0 %v1503
    %1838 = vmatpush.bf16.msra.mxu0 %v1487
    %1839 = vmatpush.bf16.msra.mxu0 %v1471
    %1840 = vmatpush.bf16.msra.mxu0 %v1455
    %1841 = vmatpush.bf16.msra.mxu0 %v1439
    %1842 = vmatpush.bf16.msra.mxu0 %v1423
    %1843 = vmatmul.bf16.gmra.mxu0 %v992
    %v1844 = vpop.f32.mrf.mxu0
    %v1845 = vadd.f32 %v1007, %v1844
    %v1846 = vpop.f32.mrf.mxu0
    %v1847 = vadd.f32 %v1007, %v1846
    %1848 = vdwg.mxu0
    %1849 = vmatpush.bf16.msra.mxu0 %v1536
    %1850 = vmatpush.bf16.msra.mxu0 %v1520
    %1851 = vmatpush.bf16.msra.mxu0 %v1504
    %1852 = vmatpush.bf16.msra.mxu0 %v1488
    %1853 = vmatpush.bf16.msra.mxu0 %v1472
    %1854 = vmatpush.bf16.msra.mxu0 %v1456
    %1855 = vmatpush.bf16.msra.mxu0 %v1440
    %1856 = vmatpush.bf16.msra.mxu0 %v1424
    %1857 = vmatmul.bf16.gmra.mxu0 %v992
    %v1858 = vpop.f32.mrf.mxu0
    %v1859 = vadd.f32 %v1008, %v1858
    %v1860 = vpop.f32.mrf.mxu0
    %v1861 = vadd.f32 %v1008, %v1860
    %1862 = vdwg.mxu0
    %1863 = vmatpush.bf16.msra.mxu0 %v1537
    %1864 = vmatpush.bf16.msra.mxu0 %v1521
    %1865 = vmatpush.bf16.msra.mxu0 %v1505
    %1866 = vmatpush.bf16.msra.mxu0 %v1489
    %1867 = vmatpush.bf16.msra.mxu0 %v1473
    %1868 = vmatpush.bf16.msra.mxu0 %v1457
    %1869 = vmatpush.bf16.msra.mxu0 %v1441
    %1870 = vmatpush.bf16.msra.mxu0 %v1425
    %1871 = vmatmul.bf16.gmra.mxu0 %v992
    %v1872 = vpop.f32.mrf.mxu0
    %v1873 = vadd.f32 %v1009, %v1872
    %v1874 = vpop.f32.mrf.mxu0
    %v1875 = vadd.f32 %v1009, %v1874
    %1876 = vdwg.mxu0
    %1877 = vmatpush.bf16.msra.mxu0 %v1538
    %1878 = vmatpush.bf16.msra.mxu0 %v1522
    %1879 = vmatpush.bf16.msra.mxu0 %v1506
    %1880 = vmatpush.bf16.msra.mxu0 %v1490
    %1881 = vmatpush.bf16.msra.mxu0 %v1474
    %1882 = vmatpush.bf16.msra.mxu0 %v1458
    %1883 = vmatpush.bf16.msra.mxu0 %v1442
    %1884 = vmatpush.bf16.msra.mxu0 %v1426
    %1885 = vmatmul.bf16.gmra.mxu0 %v992
    %v1886 = vpop.f32.mrf.mxu0
    %v1887 = vadd.f32 %v1010, %v1886
    %v1888 = vpop.f32.mrf.mxu0
    %v1889 = vadd.f32 %v1010, %v1888
    %1890 = vdwg.mxu0
    %v1891 = vmax.f32 %v1677, 0.0
    %v1892 = vmax.f32 %v1691, 0.0
    %v1893 = vmax.f32 %v1705, 0.0
    %v1894 = vmax.f32 %v1719, 0.0
    %v1895 = vmax.f32 %v1733, 0.0
    %v1896 = vmax.f32 %v1747, 0.0
    %v1897 = vmax.f32 %v1761, 0.0
    %v1898 = vmax.f32 %v1775, 0.0
    %v1899 = vmax.f32 %v1789, 0.0
    %v1900 = vmax.f32 %v1803, 0.0
    %v1901 = vmax.f32 %v1817, 0.0
    %v1902 = vmax.f32 %v1831, 0.0
    %v1903 = vmax.f32 %v1845, 0.0
    %v1904 = vmax.f32 %v1859, 0.0
    %v1905 = vmax.f32 %v1873, 0.0
    %v1906 = vmax.f32 %v1887, 0.0
    %v1907 = vmax.f32 %v1679, 0.0
    %v1908 = vmax.f32 %v1693, 0.0
    %v1909 = vmax.f32 %v1707, 0.0
    %v1910 = vmax.f32 %v1721, 0.0
    %v1911 = vmax.f32 %v1735, 0.0
    %v1912 = vmax.f32 %v1749, 0.0
    %v1913 = vmax.f32 %v1763, 0.0
    %v1914 = vmax.f32 %v1777, 0.0
    %v1915 = vmax.f32 %v1791, 0.0
    %v1916 = vmax.f32 %v1805, 0.0
    %v1917 = vmax.f32 %v1819, 0.0
    %v1918 = vmax.f32 %v1833, 0.0
    %v1919 = vmax.f32 %v1847, 0.0
    %v1920 = vmax.f32 %v1861, 0.0
    %v1921 = vmax.f32 %v1875, 0.0
    %v1922 = vmax.f32 %v1889, 0.0
    %v1923 = vpack.c.bf16 %v1907, %v1891
    %v1924 = vpack.c.bf16 %v1908, %v1892
    %v1925 = vpack.c.bf16 %v1909, %v1893
    %v1926 = vpack.c.bf16 %v1910, %v1894
    %v1927 = vpack.c.bf16 %v1911, %v1895
    %v1928 = vpack.c.bf16 %v1912, %v1896
    %v1929 = vpack.c.bf16 %v1913, %v1897
    %v1930 = vpack.c.bf16 %v1914, %v1898
    %v1931 = vpack.c.bf16 %v1915, %v1899
    %v1932 = vpack.c.bf16 %v1916, %v1900
    %v1933 = vpack.c.bf16 %v1917, %v1901
    %v1934 = vpack.c.bf16 %v1918, %v1902
    %v1935 = vpack.c.bf16 %v1919, %v1903
    %v1936 = vpack.c.bf16 %v1920, %v1904
    %v1937 = vpack.c.bf16 %v1921, %v1905
    %v1938 = vpack.c.bf16 %v1922, %v1906
    %v2195 = vunpack.c.l.b16 %v238
    %v2196 = vunpack.c.l.b16 %v239
    %v2197 = vunpack.c.l.b16 %v240
    %v2198 = vunpack.c.l.b16 %v241
    %v2199 = vunpack.c.l.b16 %v242
    %v2200 = vunpack.c.l.b16 %v243
    %v2201 = vunpack.c.l.b16 %v244
    %v2202 = vunpack.c.l.b16 %v245
    %v2203 = vunpack.c.l.b16 %v246
    %v2204 = vunpack.c.l.b16 %v247
    %v2205 = vunpack.c.l.b16 %v248
    %v2206 = vunpack.c.l.b16 %v249
    %v2207 = vunpack.c.l.b16 %v250
    %v2208 = vunpack.c.l.b16 %v251
    %v2209 = vunpack.c.l.b16 %v252
    %v2210 = vunpack.c.l.b16 %v253
    %v2211 = vunpack.c.l.b16 %v254
    %v2212 = vunpack.c.l.b16 %v255
    %v2213 = vunpack.c.l.b16 %v256
    %v2214 = vunpack.c.l.b16 %v257
    %v2215 = vunpack.c.l.b16 %v258
    %v2216 = vunpack.c.l.b16 %v259
    %v2217 = vunpack.c.l.b16 %v260
    %v2218 = vunpack.c.l.b16 %v261
    %v2219 = vunpack.c.l.b16 %v262
    %v2220 = vunpack.c.l.b16 %v263
    %v2221 = vunpack.c.l.b16 %v264
    %v2222 = vunpack.c.l.b16 %v265
    %v2223 = vunpack.c.l.b16 %v266
    %v2224 = vunpack.c.l.b16 %v267
    %v2225 = vunpack.c.l.b16 %v268
    %v2226 = vunpack.c.l.b16 %v269
    %v2227 = vunpack.c.l.b16 %v270
    %v2228 = vunpack.c.l.b16 %v271
    %v2229 = vunpack.c.l.b16 %v272
    %v2230 = vunpack.c.l.b16 %v273
    %v2231 = vunpack.c.l.b16 %v274
    %v2232 = vunpack.c.l.b16 %v275
    %v2233 = vunpack.c.l.b16 %v276
    %v2234 = vunpack.c.l.b16 %v277
    %v2235 = vunpack.c.l.b16 %v278
    %v2236 = vunpack.c.l.b16 %v279
    %v2237 = vunpack.c.l.b16 %v280
    %v2238 = vunpack.c.l.b16 %v281
    %v2239 = vunpack.c.l.b16 %v282
    %v2240 = vunpack.c.l.b16 %v283
    %v2241 = vunpack.c.l.b16 %v284
    %v2242 = vunpack.c.l.b16 %v285
    %v2243 = vunpack.c.l.b16 %v286
    %v2244 = vunpack.c.l.b16 %v287
    %v2245 = vunpack.c.l.b16 %v288
    %v2246 = vunpack.c.l.b16 %v289
    %v2247 = vunpack.c.l.b16 %v290
    %v2248 = vunpack.c.l.b16 %v291
    %v2249 = vunpack.c.l.b16 %v292
    %v2250 = vunpack.c.l.b16 %v293
    %v2251 = vunpack.c.l.b16 %v294
    %v2252 = vunpack.c.l.b16 %v295
    %v2253 = vunpack.c.l.b16 %v296
    %v2254 = vunpack.c.l.b16 %v297
    %v2255 = vunpack.c.l.b16 %v298
    %v2256 = vunpack.c.l.b16 %v299
    %v2257 = vunpack.c.l.b16 %v300
    %v2258 = vunpack.c.l.b16 %v301
    %v2259 = vunpack.c.l.b16 %v302
    %v2260 = vunpack.c.l.b16 %v303
    %v2261 = vunpack.c.l.b16 %v304
    %v2262 = vunpack.c.l.b16 %v305
    %v2263 = vunpack.c.l.b16 %v306
    %v2264 = vunpack.c.l.b16 %v307
    %v2265 = vunpack.c.l.b16 %v308
    %v2266 = vunpack.c.l.b16 %v309
    %v2267 = vunpack.c.l.b16 %v310
    %v2268 = vunpack.c.l.b16 %v311
    %v2269 = vunpack.c.l.b16 %v312
    %v2270 = vunpack.c.l.b16 %v313
    %v2271 = vunpack.c.l.b16 %v314
    %v2272 = vunpack.c.l.b16 %v315
    %v2273 = vunpack.c.l.b16 %v316
    %v2274 = vunpack.c.l.b16 %v317
    %v2275 = vunpack.c.l.b16 %v318
    %v2276 = vunpack.c.l.b16 %v319
    %v2277 = vunpack.c.l.b16 %v320
    %v2278 = vunpack.c.l.b16 %v321
    %v2279 = vunpack.c.l.b16 %v322
    %v2280 = vunpack.c.l.b16 %v323
    %v2281 = vunpack.c.l.b16 %v324
    %v2282 = vunpack.c.l.b16 %v325
    %v2283 = vunpack.c.l.b16 %v326
    %v2284 = vunpack.c.l.b16 %v327
    %v2285 = vunpack.c.l.b16 %v328
    %v2286 = vunpack.c.l.b16 %v329
    %v2287 = vunpack.c.l.b16 %v330
    %v2288 = vunpack.c.l.b16 %v331
    %v2289 = vunpack.c.l.b16 %v332
    %v2290 = vunpack.c.l.b16 %v333
    %v2291 = vunpack.c.l.b16 %v334
    %v2292 = vunpack.c.l.b16 %v335
    %v2293 = vunpack.c.l.b16 %v336
    %v2294 = vunpack.c.l.b16 %v337
    %v2295 = vunpack.c.l.b16 %v338
    %v2296 = vunpack.c.l.b16 %v339
    %v2297 = vunpack.c.l.b16 %v340
    %v2298 = vunpack.c.l.b16 %v341
    %v2299 = vunpack.c.l.b16 %v342
    %v2300 = vunpack.c.l.b16 %v343
    %v2301 = vunpack.c.l.b16 %v344
    %v2302 = vunpack.c.l.b16 %v345
    %v2303 = vunpack.c.l.b16 %v346
    %v2304 = vunpack.c.l.b16 %v347
    %v2305 = vunpack.c.l.b16 %v348
    %v2306 = vunpack.c.l.b16 %v349
    %v2307 = vunpack.c.l.b16 %v350
    %v2308 = vunpack.c.l.b16 %v351
    %v2309 = vunpack.c.l.b16 %v352
    %v2310 = vunpack.c.l.b16 %v353
    %v2311 = vunpack.c.l.b16 %v354
    %v2312 = vunpack.c.l.b16 %v355
    %v2313 = vunpack.c.l.b16 %v356
    %v2314 = vunpack.c.l.b16 %v357
    %v2315 = vunpack.c.l.b16 %v358
    %v2316 = vunpack.c.l.b16 %v359
    %v2317 = vunpack.c.l.b16 %v360
    %v2318 = vunpack.c.l.b16 %v361
    %v2319 = vunpack.c.l.b16 %v362
    %v2320 = vunpack.c.l.b16 %v363
    %v2321 = vunpack.c.l.b16 %v364
    %v2322 = vunpack.c.l.b16 %v365
    %v2323 = vunpack.c.l.b16 %v366
    %v2324 = vunpack.c.l.b16 %v367
    %v2325 = vunpack.c.l.b16 %v368
    %v2326 = vunpack.c.l.b16 %v369
    %v2327 = vunpack.c.l.b16 %v370
    %v2328 = vunpack.c.l.b16 %v371
    %v2329 = vunpack.c.l.b16 %v372
    %v2330 = vunpack.c.l.b16 %v373
    %v2331 = vunpack.c.l.b16 %v374
    %v2332 = vunpack.c.l.b16 %v375
    %v2333 = vunpack.c.l.b16 %v376
    %v2334 = vunpack.c.l.b16 %v377
    %v2335 = vunpack.c.l.b16 %v378
    %v2336 = vunpack.c.l.b16 %v379
    %v2337 = vunpack.c.l.b16 %v380
    %v2338 = vunpack.c.l.b16 %v381
    %v2339 = vunpack.c.l.b16 %v382
    %v2340 = vunpack.c.l.b16 %v383
    %v2341 = vunpack.c.l.b16 %v384
    %v2342 = vunpack.c.l.b16 %v385
    %v2343 = vunpack.c.l.b16 %v386
    %v2344 = vunpack.c.l.b16 %v387
    %v2345 = vunpack.c.l.b16 %v388
    %v2346 = vunpack.c.l.b16 %v389
    %v2347 = vunpack.c.l.b16 %v390
    %v2348 = vunpack.c.l.b16 %v391
    %v2349 = vunpack.c.l.b16 %v392
    %v2350 = vunpack.c.l.b16 %v393
    %v2351 = vunpack.c.l.b16 %v394
    %v2352 = vunpack.c.l.b16 %v395
    %v2353 = vunpack.c.l.b16 %v396
    %v2354 = vunpack.c.l.b16 %v397
    %v2355 = vunpack.c.l.b16 %v398
    %v2356 = vunpack.c.l.b16 %v399
    %v2357 = vunpack.c.l.b16 %v400
    %v2358 = vunpack.c.l.b16 %v401
    %v2359 = vunpack.c.l.b16 %v402
    %v2360 = vunpack.c.l.b16 %v403
    %v2361 = vunpack.c.l.b16 %v404
    %v2362 = vunpack.c.l.b16 %v405
    %v2363 = vunpack.c.l.b16 %v406
    %v2364 = vunpack.c.l.b16 %v407
    %v2365 = vunpack.c.l.b16 %v408
    %v2366 = vunpack.c.l.b16 %v409
    %v2367 = vunpack.c.l.b16 %v410
    %v2368 = vunpack.c.l.b16 %v411
    %v2369 = vunpack.c.l.b16 %v412
    %v2370 = vunpack.c.l.b16 %v413
    %v2371 = vunpack.c.l.b16 %v414
    %v2372 = vunpack.c.l.b16 %v415
    %v2373 = vunpack.c.l.b16 %v416
    %v2374 = vunpack.c.l.b16 %v417
    %v2375 = vunpack.c.l.b16 %v418
    %v2376 = vunpack.c.l.b16 %v419
    %v2377 = vunpack.c.l.b16 %v420
    %v2378 = vunpack.c.l.b16 %v421
    %v2379 = vunpack.c.l.b16 %v422
    %v2380 = vunpack.c.l.b16 %v423
    %v2381 = vunpack.c.l.b16 %v424
    %v2382 = vunpack.c.l.b16 %v425
    %v2383 = vunpack.c.l.b16 %v426
    %v2384 = vunpack.c.l.b16 %v427
    %v2385 = vunpack.c.l.b16 %v428
    %v2386 = vunpack.c.l.b16 %v429
    %v2387 = vunpack.c.l.b16 %v430
    %v2388 = vunpack.c.l.b16 %v431
    %v2389 = vunpack.c.l.b16 %v432
    %v2390 = vunpack.c.l.b16 %v433
    %v2391 = vunpack.c.l.b16 %v434
    %v2392 = vunpack.c.l.b16 %v435
    %v2393 = vunpack.c.l.b16 %v436
    %v2394 = vunpack.c.l.b16 %v437
    %v2395 = vunpack.c.l.b16 %v438
    %v2396 = vunpack.c.l.b16 %v439
    %v2397 = vunpack.c.l.b16 %v440
    %v2398 = vunpack.c.l.b16 %v441
    %v2399 = vunpack.c.l.b16 %v442
    %v2400 = vunpack.c.l.b16 %v443
    %v2401 = vunpack.c.l.b16 %v444
    %v2402 = vunpack.c.l.b16 %v445
    %v2403 = vunpack.c.l.b16 %v446
    %v2404 = vunpack.c.l.b16 %v447
    %v2405 = vunpack.c.l.b16 %v448
    %v2406 = vunpack.c.l.b16 %v449
    %v2407 = vunpack.c.l.b16 %v450
    %v2408 = vunpack.c.l.b16 %v451
    %v2409 = vunpack.c.l.b16 %v452
    %v2410 = vunpack.c.l.b16 %v453
    %v2411 = vunpack.c.l.b16 %v454
    %v2412 = vunpack.c.l.b16 %v455
    %v2413 = vunpack.c.l.b16 %v456
    %v2414 = vunpack.c.l.b16 %v457
    %v2415 = vunpack.c.l.b16 %v458
    %v2416 = vunpack.c.l.b16 %v459
    %v2417 = vunpack.c.l.b16 %v460
    %v2418 = vunpack.c.l.b16 %v461
    %v2419 = vunpack.c.l.b16 %v462
    %v2420 = vunpack.c.l.b16 %v463
    %v2421 = vunpack.c.l.b16 %v464
    %v2422 = vunpack.c.l.b16 %v465
    %v2423 = vunpack.c.l.b16 %v466
    %v2424 = vunpack.c.l.b16 %v467
    %v2425 = vunpack.c.l.b16 %v468
    %v2426 = vunpack.c.l.b16 %v469
    %v2427 = vunpack.c.l.b16 %v470
    %v2428 = vunpack.c.l.b16 %v471
    %v2429 = vunpack.c.l.b16 %v472
    %v2430 = vunpack.c.l.b16 %v473
    %v2431 = vunpack.c.l.b16 %v474
    %v2432 = vunpack.c.l.b16 %v475
    %v2433 = vunpack.c.l.b16 %v476
    %v2434 = vunpack.c.l.b16 %v477
    %v2435 = vunpack.c.l.b16 %v478
    %v2436 = vunpack.c.l.b16 %v479
    %v2437 = vunpack.c.l.b16 %v480
    %v2438 = vunpack.c.l.b16 %v481
    %v2439 = vunpack.c.l.b16 %v482
    %v2440 = vunpack.c.l.b16 %v483
    %v2441 = vunpack.c.l.b16 %v484
    %v2442 = vunpack.c.l.b16 %v485
    %v2443 = vunpack.c.l.b16 %v486
    %v2444 = vunpack.c.l.b16 %v487
    %v2445 = vunpack.c.l.b16 %v488
    %v2446 = vunpack.c.l.b16 %v489
    %v2447 = vunpack.c.l.b16 %v490
    %v2448 = vunpack.c.l.b16 %v491
    %v2449 = vunpack.c.l.b16 %v492
    %v2450 = vunpack.c.l.b16 %v493
    %v2451 = vpack.c.b16 %v2196, %v2195
    %v2452 = vpack.c.b16 %v2198, %v2197
    %v2453 = vpack.c.b16 %v2200, %v2199
    %v2454 = vpack.c.b16 %v2202, %v2201
    %v2455 = vpack.c.b16 %v2204, %v2203
    %v2456 = vpack.c.b16 %v2206, %v2205
    %v2457 = vpack.c.b16 %v2208, %v2207
    %v2458 = vpack.c.b16 %v2210, %v2209
    %v2459 = vpack.c.b16 %v2212, %v2211
    %v2460 = vpack.c.b16 %v2214, %v2213
    %v2461 = vpack.c.b16 %v2216, %v2215
    %v2462 = vpack.c.b16 %v2218, %v2217
    %v2463 = vpack.c.b16 %v2220, %v2219
    %v2464 = vpack.c.b16 %v2222, %v2221
    %v2465 = vpack.c.b16 %v2224, %v2223
    %v2466 = vpack.c.b16 %v2226, %v2225
    %v2467 = vpack.c.b16 %v2228, %v2227
    %v2468 = vpack.c.b16 %v2230, %v2229
    %v2469 = vpack.c.b16 %v2232, %v2231
    %v2470 = vpack.c.b16 %v2234, %v2233
    %v2471 = vpack.c.b16 %v2236, %v2235
    %v2472 = vpack.c.b16 %v2238, %v2237
    %v2473 = vpack.c.b16 %v2240, %v2239
    %v2474 = vpack.c.b16 %v2242, %v2241
    %v2475 = vpack.c.b16 %v2244, %v2243
    %v2476 = vpack.c.b16 %v2246, %v2245
    %v2477 = vpack.c.b16 %v2248, %v2247
    %v2478 = vpack.c.b16 %v2250, %v2249
    %v2479 = vpack.c.b16 %v2252, %v2251
    %v2480 = vpack.c.b16 %v2254, %v2253
    %v2481 = vpack.c.b16 %v2256, %v2255
    %v2482 = vpack.c.b16 %v2258, %v2257
    %v2483 = vpack.c.b16 %v2260, %v2259
    %v2484 = vpack.c.b16 %v2262, %v2261
    %v2485 = vpack.c.b16 %v2264, %v2263
    %v2486 = vpack.c.b16 %v2266, %v2265
    %v2487 = vpack.c.b16 %v2268, %v2267
    %v2488 = vpack.c.b16 %v2270, %v2269
    %v2489 = vpack.c.b16 %v2272, %v2271
    %v2490 = vpack.c.b16 %v2274, %v2273
    %v2491 = vpack.c.b16 %v2276, %v2275
    %v2492 = vpack.c.b16 %v2278, %v2277
    %v2493 = vpack.c.b16 %v2280, %v2279
    %v2494 = vpack.c.b16 %v2282, %v2281
    %v2495 = vpack.c.b16 %v2284, %v2283
    %v2496 = vpack.c.b16 %v2286, %v2285
    %v2497 = vpack.c.b16 %v2288, %v2287
    %v2498 = vpack.c.b16 %v2290, %v2289
    %v2499 = vpack.c.b16 %v2292, %v2291
    %v2500 = vpack.c.b16 %v2294, %v2293
    %v2501 = vpack.c.b16 %v2296, %v2295
    %v2502 = vpack.c.b16 %v2298, %v2297
    %v2503 = vpack.c.b16 %v2300, %v2299
    %v2504 = vpack.c.b16 %v2302, %v2301
    %v2505 = vpack.c.b16 %v2304, %v2303
    %v2506 = vpack.c.b16 %v2306, %v2305
    %v2507 = vpack.c.b16 %v2308, %v2307
    %v2508 = vpack.c.b16 %v2310, %v2309
    %v2509 = vpack.c.b16 %v2312, %v2311
    %v2510 = vpack.c.b16 %v2314, %v2313
    %v2511 = vpack.c.b16 %v2316, %v2315
    %v2512 = vpack.c.b16 %v2318, %v2317
    %v2513 = vpack.c.b16 %v2320, %v2319
    %v2514 = vpack.c.b16 %v2322, %v2321
    %v2515 = vpack.c.b16 %v2324, %v2323
    %v2516 = vpack.c.b16 %v2326, %v2325
    %v2517 = vpack.c.b16 %v2328, %v2327
    %v2518 = vpack.c.b16 %v2330, %v2329
    %v2519 = vpack.c.b16 %v2332, %v2331
    %v2520 = vpack.c.b16 %v2334, %v2333
    %v2521 = vpack.c.b16 %v2336, %v2335
    %v2522 = vpack.c.b16 %v2338, %v2337
    %v2523 = vpack.c.b16 %v2340, %v2339
    %v2524 = vpack.c.b16 %v2342, %v2341
    %v2525 = vpack.c.b16 %v2344, %v2343
    %v2526 = vpack.c.b16 %v2346, %v2345
    %v2527 = vpack.c.b16 %v2348, %v2347
    %v2528 = vpack.c.b16 %v2350, %v2349
    %v2529 = vpack.c.b16 %v2352, %v2351
    %v2530 = vpack.c.b16 %v2354, %v2353
    %v2531 = vpack.c.b16 %v2356, %v2355
    %v2532 = vpack.c.b16 %v2358, %v2357
    %v2533 = vpack.c.b16 %v2360, %v2359
    %v2534 = vpack.c.b16 %v2362, %v2361
    %v2535 = vpack.c.b16 %v2364, %v2363
    %v2536 = vpack.c.b16 %v2366, %v2365
    %v2537 = vpack.c.b16 %v2368, %v2367
    %v2538 = vpack.c.b16 %v2370, %v2369
    %v2539 = vpack.c.b16 %v2372, %v2371
    %v2540 = vpack.c.b16 %v2374, %v2373
    %v2541 = vpack.c.b16 %v2376, %v2375
    %v2542 = vpack.c.b16 %v2378, %v2377
    %v2543 = vpack.c.b16 %v2380, %v2379
    %v2544 = vpack.c.b16 %v2382, %v2381
    %v2545 = vpack.c.b16 %v2384, %v2383
    %v2546 = vpack.c.b16 %v2386, %v2385
    %v2547 = vpack.c.b16 %v2388, %v2387
    %v2548 = vpack.c.b16 %v2390, %v2389
    %v2549 = vpack.c.b16 %v2392, %v2391
    %v2550 = vpack.c.b16 %v2394, %v2393
    %v2551 = vpack.c.b16 %v2396, %v2395
    %v2552 = vpack.c.b16 %v2398, %v2397
    %v2553 = vpack.c.b16 %v2400, %v2399
    %v2554 = vpack.c.b16 %v2402, %v2401
    %v2555 = vpack.c.b16 %v2404, %v2403
    %v2556 = vpack.c.b16 %v2406, %v2405
    %v2557 = vpack.c.b16 %v2408, %v2407
    %v2558 = vpack.c.b16 %v2410, %v2409
    %v2559 = vpack.c.b16 %v2412, %v2411
    %v2560 = vpack.c.b16 %v2414, %v2413
    %v2561 = vpack.c.b16 %v2416, %v2415
    %v2562 = vpack.c.b16 %v2418, %v2417
    %v2563 = vpack.c.b16 %v2420, %v2419
    %v2564 = vpack.c.b16 %v2422, %v2421
    %v2565 = vpack.c.b16 %v2424, %v2423
    %v2566 = vpack.c.b16 %v2426, %v2425
    %v2567 = vpack.c.b16 %v2428, %v2427
    %v2568 = vpack.c.b16 %v2430, %v2429
    %v2569 = vpack.c.b16 %v2432, %v2431
    %v2570 = vpack.c.b16 %v2434, %v2433
    %v2571 = vpack.c.b16 %v2436, %v2435
    %v2572 = vpack.c.b16 %v2438, %v2437
    %v2573 = vpack.c.b16 %v2440, %v2439
    %v2574 = vpack.c.b16 %v2442, %v2441
    %v2575 = vpack.c.b16 %v2444, %v2443
    %v2576 = vpack.c.b16 %v2446, %v2445
    %v2577 = vpack.c.b16 %v2448, %v2447
    %v2578 = vpack.c.b16 %v2450, %v2449
    %2707 = vmatpush.bf16.msra.mxu0 %v2458
    %2708 = vmatpush.bf16.msra.mxu0 %v2457
    %2709 = vmatpush.bf16.msra.mxu0 %v2456
    %2710 = vmatpush.bf16.msra.mxu0 %v2455
    %2711 = vmatpush.bf16.msra.mxu0 %v2454
    %2712 = vmatpush.bf16.msra.mxu0 %v2453
    %2713 = vmatpush.bf16.msra.mxu0 %v2452
    %2714 = vmatpush.bf16.msra.mxu0 %v2451
    %2715 = vmatmul.bf16.gmra.mxu0 %v1923
    %v2716 = vpop.f32.mrf.mxu0
    %v2717 = vadd.f32 %v520, %v2716
    %v2718 = vpop.f32.mrf.mxu0
    %v2719 = vadd.f32 %v520, %v2718
    %2720 = vdwg.mxu0
    %2721 = vmatpush.bf16.msra.mxu0 %v2466
    %2722 = vmatpush.bf16.msra.mxu0 %v2465
    %2723 = vmatpush.bf16.msra.mxu0 %v2464
    %2724 = vmatpush.bf16.msra.mxu0 %v2463
    %2725 = vmatpush.bf16.msra.mxu0 %v2462
    %2726 = vmatpush.bf16.msra.mxu0 %v2461
    %2727 = vmatpush.bf16.msra.mxu0 %v2460
    %2728 = vmatpush.bf16.msra.mxu0 %v2459
    %2729 = vmatmul.bf16.gmra.mxu0 %v1924
    %v2730 = vpop.f32.mrf.mxu0
    %v2731 = vadd.f32 %v2717, %v2730
    %v2732 = vpop.f32.mrf.mxu0
    %v2733 = vadd.f32 %v2719, %v2732
    %2734 = vdwg.mxu0
    %2735 = vmatpush.bf16.msra.mxu0 %v2474
    %2736 = vmatpush.bf16.msra.mxu0 %v2473
    %2737 = vmatpush.bf16.msra.mxu0 %v2472
    %2738 = vmatpush.bf16.msra.mxu0 %v2471
    %2739 = vmatpush.bf16.msra.mxu0 %v2470
    %2740 = vmatpush.bf16.msra.mxu0 %v2469
    %2741 = vmatpush.bf16.msra.mxu0 %v2468
    %2742 = vmatpush.bf16.msra.mxu0 %v2467
    %2743 = vmatmul.bf16.gmra.mxu0 %v1925
    %v2744 = vpop.f32.mrf.mxu0
    %v2745 = vadd.f32 %v2731, %v2744
    %v2746 = vpop.f32.mrf.mxu0
    %v2747 = vadd.f32 %v2733, %v2746
    %2748 = vdwg.mxu0
    %2749 = vmatpush.bf16.msra.mxu0 %v2482
    %2750 = vmatpush.bf16.msra.mxu0 %v2481
    %2751 = vmatpush.bf16.msra.mxu0 %v2480
    %2752 = vmatpush.bf16.msra.mxu0 %v2479
    %2753 = vmatpush.bf16.msra.mxu0 %v2478
    %2754 = vmatpush.bf16.msra.mxu0 %v2477
    %2755 = vmatpush.bf16.msra.mxu0 %v2476
    %2756 = vmatpush.bf16.msra.mxu0 %v2475
    %2757 = vmatmul.bf16.gmra.mxu0 %v1926
    %v2758 = vpop.f32.mrf.mxu0
    %v2759 = vadd.f32 %v2745, %v2758
    %v2760 = vpop.f32.mrf.mxu0
    %v2761 = vadd.f32 %v2747, %v2760
    %2762 = vdwg.mxu0
    %2763 = vmatpush.bf16.msra.mxu0 %v2490
    %2764 = vmatpush.bf16.msra.mxu0 %v2489
    %2765 = vmatpush.bf16.msra.mxu0 %v2488
    %2766 = vmatpush.bf16.msra.mxu0 %v2487
    %2767 = vmatpush.bf16.msra.mxu0 %v2486
    %2768 = vmatpush.bf16.msra.mxu0 %v2485
    %2769 = vmatpush.bf16.msra.mxu0 %v2484
    %2770 = vmatpush.bf16.msra.mxu0 %v2483
    %2771 = vmatmul.bf16.gmra.mxu0 %v1927
    %v2772 = vpop.f32.mrf.mxu0
    %v2773 = vadd.f32 %v2759, %v2772
    %v2774 = vpop.f32.mrf.mxu0
    %v2775 = vadd.f32 %v2761, %v2774
    %2776 = vdwg.mxu0
    %2777 = vmatpush.bf16.msra.mxu0 %v2498
    %2778 = vmatpush.bf16.msra.mxu0 %v2497
    %2779 = vmatpush.bf16.msra.mxu0 %v2496
    %2780 = vmatpush.bf16.msra.mxu0 %v2495
    %2781 = vmatpush.bf16.msra.mxu0 %v2494
    %2782 = vmatpush.bf16.msra.mxu0 %v2493
    %2783 = vmatpush.bf16.msra.mxu0 %v2492
    %2784 = vmatpush.bf16.msra.mxu0 %v2491
    %2785 = vmatmul.bf16.gmra.mxu0 %v1928
    %v2786 = vpop.f32.mrf.mxu0
    %v2787 = vadd.f32 %v2773, %v2786
    %v2788 = vpop.f32.mrf.mxu0
    %v2789 = vadd.f32 %v2775, %v2788
    %2790 = vdwg.mxu0
    %2791 = vmatpush.bf16.msra.mxu0 %v2506
    %2792 = vmatpush.bf16.msra.mxu0 %v2505
    %2793 = vmatpush.bf16.msra.mxu0 %v2504
    %2794 = vmatpush.bf16.msra.mxu0 %v2503
    %2795 = vmatpush.bf16.msra.mxu0 %v2502
    %2796 = vmatpush.bf16.msra.mxu0 %v2501
    %2797 = vmatpush.bf16.msra.mxu0 %v2500
    %2798 = vmatpush.bf16.msra.mxu0 %v2499
    %2799 = vmatmul.bf16.gmra.mxu0 %v1929
    %v2800 = vpop.f32.mrf.mxu0
    %v2801 = vadd.f32 %v2787, %v2800
    %v2802 = vpop.f32.mrf.mxu0
    %v2803 = vadd.f32 %v2789, %v2802
    %2804 = vdwg.mxu0
    %2805 = vmatpush.bf16.msra.mxu0 %v2514
    %2806 = vmatpush.bf16.msra.mxu0 %v2513
    %2807 = vmatpush.bf16.msra.mxu0 %v2512
    %2808 = vmatpush.bf16.msra.mxu0 %v2511
    %2809 = vmatpush.bf16.msra.mxu0 %v2510
    %2810 = vmatpush.bf16.msra.mxu0 %v2509
    %2811 = vmatpush.bf16.msra.mxu0 %v2508
    %2812 = vmatpush.bf16.msra.mxu0 %v2507
    %2813 = vmatmul.bf16.gmra.mxu0 %v1930
    %v2814 = vpop.f32.mrf.mxu0
    %v2815 = vadd.f32 %v2801, %v2814
    %v2816 = vpop.f32.mrf.mxu0
    %v2817 = vadd.f32 %v2803, %v2816
    %2818 = vdwg.mxu0
    %2819 = vmatpush.bf16.msra.mxu0 %v2522
    %2820 = vmatpush.bf16.msra.mxu0 %v2521
    %2821 = vmatpush.bf16.msra.mxu0 %v2520
    %2822 = vmatpush.bf16.msra.mxu0 %v2519
    %2823 = vmatpush.bf16.msra.mxu0 %v2518
    %2824 = vmatpush.bf16.msra.mxu0 %v2517
    %2825 = vmatpush.bf16.msra.mxu0 %v2516
    %2826 = vmatpush.bf16.msra.mxu0 %v2515
    %2827 = vmatmul.bf16.gmra.mxu0 %v1931
    %v2828 = vpop.f32.mrf.mxu0
    %v2829 = vadd.f32 %v2815, %v2828
    %v2830 = vpop.f32.mrf.mxu0
    %v2831 = vadd.f32 %v2817, %v2830
    %2832 = vdwg.mxu0
    %2833 = vmatpush.bf16.msra.mxu0 %v2530
    %2834 = vmatpush.bf16.msra.mxu0 %v2529
    %2835 = vmatpush.bf16.msra.mxu0 %v2528
    %2836 = vmatpush.bf16.msra.mxu0 %v2527
    %2837 = vmatpush.bf16.msra.mxu0 %v2526
    %2838 = vmatpush.bf16.msra.mxu0 %v2525
    %2839 = vmatpush.bf16.msra.mxu0 %v2524
    %2840 = vmatpush.bf16.msra.mxu0 %v2523
    %2841 = vmatmul.bf16.gmra.mxu0 %v1932
    %v2842 = vpop.f32.mrf.mxu0
    %v2843 = vadd.f32 %v2829, %v2842
    %v2844 = vpop.f32.mrf.mxu0
    %v2845 = vadd.f32 %v2831, %v2844
    %2846 = vdwg.mxu0
    %2847 = vmatpush.bf16.msra.mxu0 %v2538
    %2848 = vmatpush.bf16.msra.mxu0 %v2537
    %2849 = vmatpush.bf16.msra.mxu0 %v2536
    %2850 = vmatpush.bf16.msra.mxu0 %v2535
    %2851 = vmatpush.bf16.msra.mxu0 %v2534
    %2852 = vmatpush.bf16.msra.mxu0 %v2533
    %2853 = vmatpush.bf16.msra.mxu0 %v2532
    %2854 = vmatpush.bf16.msra.mxu0 %v2531
    %2855 = vmatmul.bf16.gmra.mxu0 %v1933
    %v2856 = vpop.f32.mrf.mxu0
    %v2857 = vadd.f32 %v2843, %v2856
    %v2858 = vpop.f32.mrf.mxu0
    %v2859 = vadd.f32 %v2845, %v2858
    %2860 = vdwg.mxu0
    %2861 = vmatpush.bf16.msra.mxu0 %v2546
    %2862 = vmatpush.bf16.msra.mxu0 %v2545
    %2863 = vmatpush.bf16.msra.mxu0 %v2544
    %2864 = vmatpush.bf16.msra.mxu0 %v2543
    %2865 = vmatpush.bf16.msra.mxu0 %v2542
    %2866 = vmatpush.bf16.msra.mxu0 %v2541
    %2867 = vmatpush.bf16.msra.mxu0 %v2540
    %2868 = vmatpush.bf16.msra.mxu0 %v2539
    %2869 = vmatmul.bf16.gmra.mxu0 %v1934
    %v2870 = vpop.f32.mrf.mxu0
    %v2871 = vadd.f32 %v2857, %v2870
    %v2872 = vpop.f32.mrf.mxu0
    %v2873 = vadd.f32 %v2859, %v2872
    %2874 = vdwg.mxu0
    %2875 = vmatpush.bf16.msra.mxu0 %v2554
    %2876 = vmatpush.bf16.msra.mxu0 %v2553
    %2877 = vmatpush.bf16.msra.mxu0 %v2552
    %2878 = vmatpush.bf16.msra.mxu0 %v2551
    %2879 = vmatpush.bf16.msra.mxu0 %v2550
    %2880 = vmatpush.bf16.msra.mxu0 %v2549
    %2881 = vmatpush.bf16.msra.mxu0 %v2548
    %2882 = vmatpush.bf16.msra.mxu0 %v2547
    %2883 = vmatmul.bf16.gmra.mxu0 %v1935
    %v2884 = vpop.f32.mrf.mxu0
    %v2885 = vadd.f32 %v2871, %v2884
    %v2886 = vpop.f32.mrf.mxu0
    %v2887 = vadd.f32 %v2873, %v2886
    %2888 = vdwg.mxu0
    %2889 = vmatpush.bf16.msra.mxu0 %v2562
    %2890 = vmatpush.bf16.msra.mxu0 %v2561
    %2891 = vmatpush.bf16.msra.mxu0 %v2560
    %2892 = vmatpush.bf16.msra.mxu0 %v2559
    %2893 = vmatpush.bf16.msra.mxu0 %v2558
    %2894 = vmatpush.bf16.msra.mxu0 %v2557
    %2895 = vmatpush.bf16.msra.mxu0 %v2556
    %2896 = vmatpush.bf16.msra.mxu0 %v2555
    %2897 = vmatmul.bf16.gmra.mxu0 %v1936
    %v2898 = vpop.f32.mrf.mxu0
    %v2899 = vadd.f32 %v2885, %v2898
    %v2900 = vpop.f32.mrf.mxu0
    %v2901 = vadd.f32 %v2887, %v2900
    %2902 = vdwg.mxu0
    %2903 = vmatpush.bf16.msra.mxu0 %v2570
    %2904 = vmatpush.bf16.msra.mxu0 %v2569
    %2905 = vmatpush.bf16.msra.mxu0 %v2568
    %2906 = vmatpush.bf16.msra.mxu0 %v2567
    %2907 = vmatpush.bf16.msra.mxu0 %v2566
    %2908 = vmatpush.bf16.msra.mxu0 %v2565
    %2909 = vmatpush.bf16.msra.mxu0 %v2564
    %2910 = vmatpush.bf16.msra.mxu0 %v2563
    %2911 = vmatmul.bf16.gmra.mxu0 %v1937
    %v2912 = vpop.f32.mrf.mxu0
    %v2913 = vadd.f32 %v2899, %v2912
    %v2914 = vpop.f32.mrf.mxu0
    %v2915 = vadd.f32 %v2901, %v2914
    %2916 = vdwg.mxu0
    %2917 = vmatpush.bf16.msra.mxu0 %v2578
    %2918 = vmatpush.bf16.msra.mxu0 %v2577
    %2919 = vmatpush.bf16.msra.mxu0 %v2576
    %2920 = vmatpush.bf16.msra.mxu0 %v2575
    %2921 = vmatpush.bf16.msra.mxu0 %v2574
    %2922 = vmatpush.bf16.msra.mxu0 %v2573
    %2923 = vmatpush.bf16.msra.mxu0 %v2572
    %2924 = vmatpush.bf16.msra.mxu0 %v2571
    %2925 = vmatmul.bf16.gmra.mxu0 %v1938
    %v2926 = vpop.f32.mrf.mxu0
    %v2927 = vadd.f32 %v2913, %v2926
    %v2928 = vpop.f32.mrf.mxu0
    %v2929 = vadd.f32 %v2915, %v2928
    %2930 = vdwg.mxu0
    %v2931 = vadd.f32 %v990, %v2927
    %v2932 = vadd.f32 %v991, %v2929
    %2933 = vadd.xlane.f32.xlu0 %v2931
    %v2934 = vpop.xlane.xlu0 %2933
    %2935 = vadd.xlane.f32.xlu0 %v2932
    %v2936 = vpop.xlane.xlu0 %2935
    %v2937 = vmul.f32 %v2934, %v951
    %v2938 = vmul.f32 %v2936, %v951
    %v2939 = vsub.f32 %v2931, %v2937
    %v2940 = vsub.f32 %v2932, %v2938
    %v2941 = vmul.f32 %v2939, %v2939
    %v2942 = vmul.f32 %v2940, %v2940
    %2943 = vadd.xlane.f32.xlu0 %v2941
    %v2944 = vpop.xlane.xlu0 %2943
    %2945 = vadd.xlane.f32.xlu0 %v2942
    %v2946 = vpop.xlane.xlu0 %2945
    %v2947 = vmul.f32 %v2944, %v951
    %v2948 = vmul.f32 %v2946, %v951
    %v2949 = vadd.f32 %v2947, 1e-05
    %v2950 = vadd.f32 %v2948, 1e-05
    %v2951 = vrsqrt.pop %v2949
    %v2952 = vmul.f32 %v2951, %v2949
    %v2953 = vmul.f32 %v2952, %v2951
    %v2954 = vmul.f32 0.5, %v2953
    %v2955 = vsub.f32 1.5, %v2954
    %v2956 = vmul.f32 %v2951, %v2955
    %vm2957 = vweird.f32 %v2949
    %vm2958 = vweird.f32 %v2951
    %vm2959 = vmor %vm2957, %vm2958
    %v2960 = vsel %vm2959, %v2951, %v2956
    %v2961 = vrsqrt.pop %v2950
    %v2962 = vmul.f32 %v2961, %v2950
    %v2963 = vmul.f32 %v2962, %v2961
    %v2964 = vmul.f32 0.5, %v2963
    %v2965 = vsub.f32 1.5, %v2964
    %v2966 = vmul.f32 %v2961, %v2965
    %vm2967 = vweird.f32 %v2950
    %vm2968 = vweird.f32 %v2961
    %vm2969 = vmor %vm2967, %vm2968
    %v2970 = vsel %vm2969, %v2961, %v2966
    %v2971 = vmul.f32 %v2939, %v2960
    %v2972 = vmul.f32 %v2940, %v2970
    %v2973 = vmul.f32 %v2971, %v523
    %v2974 = vmul.f32 %v2972, %v523
    %v2975 = vadd.f32 %v2973, %v524
    %v2976 = vadd.f32 %v2974, %v524
    %v2977 = vpack.c.bf16 %v2975, %v2975
    %v2978 = vpack.c.bf16 %v2976, %v2976
    %2979 = vst [vmem:[%s7] sm:$0xf] %v2977
    %s2980 = scalar_lea.vmem %s7, 4
    %2981 = vst [vmem:[%s2980] sm:$0xf] %v2978
    // Predicated region
    $region38: #{minigpt_forward.3} parent=1 // pred_check
      _
    $region39: #{minigpt_forward.3} parent=1 // pred_check_branch
      %2983 = sbr.rel (0) target = $region41
    $region40: #{minigpt_forward.3} parent=1 // pred_region
      _
    $region41: #{minigpt_forward.3} parent=1 // pred_fallthru
      _
    // Predicated region
    $region42: #{minigpt_forward.3} parent=1 // pred_check
      _
    $region43: #{minigpt_forward.3} parent=1 // pred_check_branch
      %2985 = sbr.rel (0) target = $region45
    $region44: #{minigpt_forward.3} parent=1 // pred_region
      _
    $region45: #{minigpt_forward.3} parent=1 // pred_fallthru
      _
    %2986 = vsyncpa [#allocation3], 1
    %2987 = vsyncpa [#allocation5], 1

</llo_original>
